<compile_context>
chip_gen: v7x
topology: tpu7x:2x2x1
jax: 0.10.0
libtpu: 0.0.40
codegen_flags: <defaults>
</compile_context>

<pallas_src>
import jax
import jax.numpy as jnp
from jax.experimental import pallas as pl
from jax.experimental.pallas import tpu as pltpu

# ---------------- model config (small, synthetic) ----------------
BATCH = 2
SEQ = 8
HIDDEN = 32
NUM_HEADS = 2
HEAD_DIM = HIDDEN // NUM_HEADS
FFN = 64
NUM_LAYERS = 2
VOCAB = 101
LN_EPS = 1e-12
MASK_NEG = -1e9          # safe in f32; make dtype-aware if the score path moves to bf16


# ---------------- math helpers (used both in-kernel and in the reference) ----------------
def _layernorm(x, g, b):
    mu = jnp.mean(x, axis=-1, keepdims=True)
    var = jnp.mean((x - mu) ** 2, axis=-1, keepdims=True)
    return (x - mu) * jax.lax.rsqrt(var + LN_EPS) * g + b


def _gelu(x):
    # tanh-approx GELU (BERT "gelu_new"); avoids erf lowering inside the kernel.
    return 0.5 * x * (1.0 + jnp.tanh(0.7978845608028654 * (x + 0.044715 * x * x * x)))


# ---------------- fused per-batch encoder + pool kernel ----------------
def encoder_kernel(x_ref, amr_ref, amc_ref,
                   wq_ref, bq_ref, wk_ref, bk_ref, wv_ref, bv_ref,
                   wo_ref, bo_ref, ln1g_ref, ln1b_ref,
                   w1_ref, b1_ref, w2_ref, b2_ref, ln2g_ref, ln2b_ref,
                   out_ref):
    S, H = x_ref.shape                                     # (SEQ, HIDDEN) for one batch row
    x = x_ref[...]                                         # activations stay VMEM-resident
    scale = 1.0 / (HEAD_DIM ** 0.5)

    # additive attention bias, hoisted out of the layer loop and pre-broadcast ONCE to
    # the full score shape (JAX does not CSE broadcast_in_dim).
    bias = (1.0 - amr_ref[...]) * MASK_NEG                 # (1, S)
    bias_b = jnp.broadcast_to(bias[None], (NUM_HEADS, S, S))

    for l in range(NUM_LAYERS):                            # static unroll, weights VMEM-resident
        # Head-batched Q/K/V projections. Weights were reshaped head-major in the wrapper,
        # so no in-kernel lane slice / reshape / transpose is needed.
        # (At real scale: do full (S,H)x(H,H) dots + head-fold instead of broadcasting x.)
        x_b = jnp.broadcast_to(x[None], (NUM_HEADS, S, H))                       # (NH, S, H)
        q = jnp.einsum('hsd,hdf->hsf', x_b, wq_ref[l],
                       preferred_element_type=jnp.float32) + bq_ref[l]           # (NH, S, HD)
        k = jnp.einsum('hsd,hdf->hsf', x_b, wk_ref[l],
                       preferred_element_type=jnp.float32) + bk_ref[l]
        v = jnp.einsum('hsd,hdf->hsf', x_b, wv_ref[l],
                       preferred_element_type=jnp.float32) + bv_ref[l]

        # single batched score / softmax / context matmul over ALL heads
        s = jnp.einsum('hqd,hkd->hqk', q, k,
                       preferred_element_type=jnp.float32) * scale + bias_b      # (NH, S, S)
        s = s - jnp.max(s, axis=-1, keepdims=True)
        p = jnp.exp(s)
        # exact reciprocal: softmax error must not compound across layers
        p = p * pl.reciprocal(jnp.sum(p, axis=-1, keepdims=True), approx=False)
        ctx = jnp.einsum('hqk,hkd->hqd', p, v,
                         preferred_element_type=jnp.float32)                     # (NH, S, HD)

        # fuse heads back into lane-major (S, H) and do ONE K=H output projection
        ctx_flat = jnp.concatenate([ctx[h] for h in range(NUM_HEADS)], axis=-1)  # (S, H)
        attn = jnp.dot(ctx_flat, wo_ref[l],
                       preferred_element_type=jnp.float32) + bo_ref[l]

        x = _layernorm(x + attn, ln1g_ref[l], ln1b_ref[l])

        h1 = _gelu(jnp.dot(x, w1_ref[l], preferred_element_type=jnp.float32) + b1_ref[l])
        h2 = jnp.dot(h1, w2_ref[l], preferred_element_type=jnp.float32) + b2_ref[l]
        x = _layernorm(x + h2, ln2g_ref[l], ln2b_ref[l])

    # masked mean pool: output_mask = attention_mask with the first 4 positions zeroed.
    pos = jax.lax.broadcasted_iota(jnp.int32, (S, 1), 0)
    pm = jnp.where(pos >= 4, amc_ref[...], 0.0)            # (S, 1)
    summed = jnp.sum(x * pm, axis=0, keepdims=True)        # (1, H)
    denom = jnp.sum(pm, axis=0, keepdims=True)             # (1, 1); no guard, matches PyTorch
    out_ref[...] = summed * pl.reciprocal(denom, approx=True)


# ---------------- parameter init (deterministic, synthetic; per-layer weights stacked) ----------------
def init_params(key):
    keys = iter(jax.random.split(key, 32))
    nrm = lambda shape: 0.02 * jax.random.normal(next(keys), shape, dtype=jnp.float32)
    L, H, F = NUM_LAYERS, HIDDEN, FFN
    return {
        'word_emb': nrm((VOCAB, H)),
        'pos_emb': nrm((SEQ, H)),
        'type_emb': nrm((2, H)),
        'emb_ln_g': 1.0 + nrm((1, H)),
        'emb_ln_b': nrm((1, H)),
        'wq': nrm((L, H, H)), 'bq': nrm((L, 1, H)),
        'wk': nrm((L, H, H)), 'bk': nrm((L, 1, H)),
        'wv': nrm((L, H, H)), 'bv': nrm((L, 1, H)),
        'wo': nrm((L, H, H)), 'bo': nrm((L, 1, H)),
        'ln1g': 1.0 + nrm((L, 1, H)), 'ln1b': nrm((L, 1, H)),
        'w1': nrm((L, H, F)), 'b1': nrm((L, 1, F)),
        'w2': nrm((L, F, H)), 'b2': nrm((L, 1, H)),
        'ln2g': 1.0 + nrm((L, 1, H)), 'ln2b': nrm((L, 1, H)),
    }


# ---------------- wrapper-side (free) weight re-layouts ----------------
def _head_major_w(w):   # (L, H, H) -> (L, NH, H, HD): split columns into heads, head-major
    return w.reshape(NUM_LAYERS, HIDDEN, NUM_HEADS, HEAD_DIM).transpose(0, 2, 1, 3)


def _head_major_b(b):   # (L, 1, H) -> (L, NH, 1, HD)
    return b.reshape(NUM_LAYERS, 1, NUM_HEADS, HEAD_DIM).transpose(0, 2, 1, 3)


# ---------------- forward (glue: embeddings; kernel: all layers + pooling, one call) ----------------
def tct_colbert_forward(params, input_ids, attention_mask):
    B, S = input_ids.shape
    # embeddings (gather + add + layernorm) — glue in plain JAX
    emb = (params['word_emb'][input_ids]
           + params['pos_emb'][None, :S, :]
           + params['type_emb'][0][None, None, :])
    emb = _layernorm(emb, params['emb_ln_g'], params['emb_ln_b'])

    am = attention_mask.astype(jnp.float32)

    weight_args = [
        _head_major_w(params['wq']), _head_major_b(params['bq']),
        _head_major_w(params['wk']), _head_major_b(params['bk']),
        _head_major_w(params['wv']), _head_major_b(params['bv']),
        params['wo'], params['bo'], params['ln1g'], params['ln1b'],
        params['w1'], params['b1'], params['w2'], params['b2'],
        params['ln2g'], params['ln2b'],
    ]

    def full_spec(a):
        nd = a.ndim
        return pl.BlockSpec(tuple(a.shape), lambda b, _nd=nd: (0,) * _nd)

    in_specs = [
        pl.BlockSpec((None, S, HIDDEN), lambda b: (b, 0, 0)),   # embeddings, per-batch block
        pl.BlockSpec((None, 1, S), lambda b: (b, 0, 0)),        # attention mask (row form)
        pl.BlockSpec((None, S, 1), lambda b: (b, 0, 0)),        # attention mask (col form)
    ] + [full_spec(a) for a in weight_args]

    out = pl.pallas_call(
        encoder_kernel,
        grid=(B,),
        in_specs=in_specs,
        out_specs=pl.BlockSpec((None, 1, HIDDEN), lambda b: (b, 0, 0)),
        out_shape=jax.ShapeDtypeStruct((B, 1, HIDDEN), jnp.float32),
        compiler_params=pltpu.CompilerParams(dimension_semantics=("parallel",)),
    )(emb, am.reshape(B, 1, S), am.reshape(B, S, 1), *weight_args)

    return out.reshape(B, HIDDEN)        # wrapper-side reshape (free layout plumbing)


# ---------------- pure-JAX reference for verification ----------------
def reference_forward(params, input_ids, attention_mask):
    B, S = input_ids.shape
    am = attention_mask.astype(jnp.float32)
    emb = (params['word_emb'][input_ids]
           + params['pos_emb'][None, :S, :]
           + params['type_emb'][0][None, None, :])
    x = _layernorm(emb, params['emb_ln_g'], params['emb_ln_b'])
    bias = ((1.0 - am) * MASK_NEG).reshape(B, 1, 1, S)
    scale = 1.0 / (HEAD_DIM ** 0.5)
    for l in range(NUM_LAYERS):
        q = x @ params['wq'][l] + params['bq'][l]
        k = x @ params['wk'][l] + params['bk'][l]
        v = x @ params['wv'][l] + params['bv'][l]
        qh = q.reshape(B, S, NUM_HEADS, HEAD_DIM)
        kh = k.reshape(B, S, NUM_HEADS, HEAD_DIM)
        vh = v.reshape(B, S, NUM_HEADS, HEAD_DIM)
        s = jnp.einsum('bqhd,bkhd->bhqk', qh, kh) * scale + bias
        p = jax.nn.softmax(s, axis=-1)
        ctx = jnp.einsum('bhqk,bkhd->bqhd', p, vh).reshape(B, S, HIDDEN)
        attn = ctx @ params['wo'][l] + params['bo'][l]
        x = _layernorm(x + attn, params['ln1g'][l], params['ln1b'][l])
        h2 = _gelu(x @ params['w1'][l] + params['b1'][l]) @ params['w2'][l] + params['b2'][l]
        x = _layernorm(x + h2, params['ln2g'][l], params['ln2b'][l])
    out_mask = am.at[:, :4].set(0.0)
    summed = jnp.sum(x * out_mask[..., None], axis=-2)
    real_len = jnp.sum(out_mask, axis=1).reshape(-1, 1)
    return summed / real_len


# ---------------- main ----------------
if __name__ == "__main__":
    key = jax.random.PRNGKey(0)
    kp, kid = jax.random.split(key)
    params = init_params(kp)

    input_ids = jax.random.randint(kid, (BATCH, SEQ), 0, VOCAB, dtype=jnp.int32)
    attention_mask = jnp.array([[1, 1, 1, 1, 1, 1, 1, 1],
                                [1, 1, 1, 1, 1, 1, 0, 0]], dtype=jnp.int32)

    fwd = jax.jit(tct_colbert_forward)
    out = jax.block_until_ready(fwd(params, input_ids, attention_mask))

    ref = reference_forward(params, input_ids, attention_mask)
    assert out.shape == (BATCH, HIDDEN)
    # tolerance accounts for pl.reciprocal(approx=True) in the final pooling divide only
    assert jnp.allclose(out, ref, atol=1e-3, rtol=1e-3), "mismatch vs pure-JAX reference"

    print("KERNEL_OK")
</pallas_src>

<mosaic_0001>
module attributes {stable_mosaic.version = 11 : i64} {
  func.func @encoder_kernel(%arg0: i32, %arg1: memref<1x8x32xf32, #tpu.memory_space<vmem>>, %arg2: memref<1x1x8xf32, #tpu.memory_space<vmem>>, %arg3: memref<1x8x1xf32, #tpu.memory_space<vmem>>, %arg4: memref<2x2x32x16xf32, #tpu.memory_space<vmem>>, %arg5: memref<2x2x1x16xf32, #tpu.memory_space<vmem>>, %arg6: memref<2x2x32x16xf32, #tpu.memory_space<vmem>>, %arg7: memref<2x2x1x16xf32, #tpu.memory_space<vmem>>, %arg8: memref<2x2x32x16xf32, #tpu.memory_space<vmem>>, %arg9: memref<2x2x1x16xf32, #tpu.memory_space<vmem>>, %arg10: memref<2x32x32xf32, #tpu.memory_space<vmem>>, %arg11: memref<2x1x32xf32, #tpu.memory_space<vmem>>, %arg12: memref<2x1x32xf32, #tpu.memory_space<vmem>>, %arg13: memref<2x1x32xf32, #tpu.memory_space<vmem>>, %arg14: memref<2x32x64xf32, #tpu.memory_space<vmem>>, %arg15: memref<2x1x64xf32, #tpu.memory_space<vmem>>, %arg16: memref<2x64x32xf32, #tpu.memory_space<vmem>>, %arg17: memref<2x1x32xf32, #tpu.memory_space<vmem>>, %arg18: memref<2x1x32xf32, #tpu.memory_space<vmem>>, %arg19: memref<2x1x32xf32, #tpu.memory_space<vmem>>, %arg20: memref<1x1x32xf32, #tpu.memory_space<vmem>>) attributes {dimension_semantics = [#tpu.dimension_semantics<parallel>], iteration_bounds = array<i64: 2>, scalar_prefetch = 0 : i64, scratch_operands = 0 : i64, tpu.core_type = #tpu.core_type<tc>, window_params = [{transform_indices = @transform_0, window_bounds = array<i64: 1, 8, 32>}, {transform_indices = @transform_1, window_bounds = array<i64: 1, 1, 8>}, {transform_indices = @transform_2, window_bounds = array<i64: 1, 8, 1>}, {pipeline_mode = #tpu.pipeline_mode<synchronous>, transform_indices = @transform_3, window_bounds = array<i64: 2, 2, 32, 16>}, {pipeline_mode = #tpu.pipeline_mode<synchronous>, transform_indices = @transform_4, window_bounds = array<i64: 2, 2, 1, 16>}, {pipeline_mode = #tpu.pipeline_mode<synchronous>, transform_indices = @transform_5, window_bounds = array<i64: 2, 2, 32, 16>}, {pipeline_mode = #tpu.pipeline_mode<synchronous>, transform_indices = @transform_6, window_bounds = array<i64: 2, 2, 1, 16>}, {pipeline_mode = #tpu.pipeline_mode<synchronous>, transform_indices = @transform_7, window_bounds = array<i64: 2, 2, 32, 16>}, {pipeline_mode = #tpu.pipeline_mode<synchronous>, transform_indices = @transform_8, window_bounds = array<i64: 2, 2, 1, 16>}, {pipeline_mode = #tpu.pipeline_mode<synchronous>, transform_indices = @transform_9, window_bounds = array<i64: 2, 32, 32>}, {pipeline_mode = #tpu.pipeline_mode<synchronous>, transform_indices = @transform_10, window_bounds = array<i64: 2, 1, 32>}, {pipeline_mode = #tpu.pipeline_mode<synchronous>, transform_indices = @transform_11, window_bounds = array<i64: 2, 1, 32>}, {pipeline_mode = #tpu.pipeline_mode<synchronous>, transform_indices = @transform_12, window_bounds = array<i64: 2, 1, 32>}, {pipeline_mode = #tpu.pipeline_mode<synchronous>, transform_indices = @transform_13, window_bounds = array<i64: 2, 32, 64>}, {pipeline_mode = #tpu.pipeline_mode<synchronous>, transform_indices = @transform_14, window_bounds = array<i64: 2, 1, 64>}, {pipeline_mode = #tpu.pipeline_mode<synchronous>, transform_indices = @transform_15, window_bounds = array<i64: 2, 64, 32>}, {pipeline_mode = #tpu.pipeline_mode<synchronous>, transform_indices = @transform_16, window_bounds = array<i64: 2, 1, 32>}, {pipeline_mode = #tpu.pipeline_mode<synchronous>, transform_indices = @transform_17, window_bounds = array<i64: 2, 1, 32>}, {pipeline_mode = #tpu.pipeline_mode<synchronous>, transform_indices = @transform_18, window_bounds = array<i64: 2, 1, 32>}, {transform_indices = @transform_19, window_bounds = array<i64: 1, 1, 32>}]} {
    %c0 = arith.constant 0 : index
    %c0_0 = arith.constant 0 : index
    %c0_1 = arith.constant 0 : index
    %0 = vector.load %arg1[%c0, %c0_0, %c0_1] : memref<1x8x32xf32, #tpu.memory_space<vmem>>, vector<1x8x32xf32>
    %1 = vector.shape_cast %0 : vector<1x8x32xf32> to vector<8x32xf32>
    %c0_2 = arith.constant 0 : index
    %c0_3 = arith.constant 0 : index
    %c0_4 = arith.constant 0 : index
    %2 = vector.load %arg2[%c0_2, %c0_3, %c0_4] : memref<1x1x8xf32, #tpu.memory_space<vmem>>, vector<1x1x8xf32>
    %3 = vector.shape_cast %2 : vector<1x1x8xf32> to vector<1x8xf32>
    %cst = arith.constant 1.000000e+00 : f32
    %4 = vector.broadcast %cst : f32 to vector<1x8xf32>
    %5 = arith.subf %4, %3 : vector<1x8xf32>
    %cst_5 = arith.constant -1.000000e+09 : f32
    %6 = vector.broadcast %cst_5 : f32 to vector<1x8xf32>
    %7 = arith.mulf %5, %6 : vector<1x8xf32>
    %8 = vector.shape_cast %7 : vector<1x8xf32> to vector<1x1x8xf32>
    %9 = vector.shape_cast %8 : vector<1x1x8xf32> to vector<1x1x8xf32>
    %10 = vector.broadcast %9 : vector<1x1x8xf32> to vector<2x8x8xf32>
    %11 = vector.shape_cast %1 : vector<8x32xf32> to vector<1x8x32xf32>
    %12 = vector.shape_cast %11 : vector<1x8x32xf32> to vector<1x8x32xf32>
    %13 = vector.broadcast %12 : vector<1x8x32xf32> to vector<2x8x32xf32>
    %c0_6 = arith.constant 0 : index
    %c0_7 = arith.constant 0 : index
    %c0_8 = arith.constant 0 : index
    %c0_9 = arith.constant 0 : index
    %14 = vector.load %arg4[%c0_6, %c0_7, %c0_8, %c0_9] : memref<2x2x32x16xf32, #tpu.memory_space<vmem>>, vector<1x2x32x16xf32>
    %15 = vector.shape_cast %14 : vector<1x2x32x16xf32> to vector<2x32x16xf32>
    "tpu.trace_start"() <{level = 10 : i32, message = "hsd,hdf->hsf"}> : () -> ()
    %cst_10 = arith.constant dense<0.000000e+00> : vector<2x8x16xf32>
    %16 = tpu.matmul %13, %15, %cst_10 {dimension_numbers = #tpu.dot_dimension_numbers<[2], [1], [1], [2], [0, 0, 0, 1, 1, 2], [0], [0]>} : vector<2x8x32xf32>, vector<2x32x16xf32>, vector<2x8x16xf32> -> vector<2x8x16xf32>
    "tpu.trace_stop"() : () -> ()
    %c0_11 = arith.constant 0 : index
    %c0_12 = arith.constant 0 : index
    %c0_13 = arith.constant 0 : index
    %c0_14 = arith.constant 0 : index
    %17 = vector.load %arg5[%c0_11, %c0_12, %c0_13, %c0_14] : memref<2x2x1x16xf32, #tpu.memory_space<vmem>>, vector<1x2x1x16xf32>
    %18 = vector.shape_cast %17 : vector<1x2x1x16xf32> to vector<2x1x16xf32>
    %19 = vector.broadcast %18 : vector<2x1x16xf32> to vector<2x8x16xf32>
    %20 = arith.addf %16, %19 : vector<2x8x16xf32>
    %c0_15 = arith.constant 0 : index
    %c0_16 = arith.constant 0 : index
    %c0_17 = arith.constant 0 : index
    %c0_18 = arith.constant 0 : index
    %21 = vector.load %arg6[%c0_15, %c0_16, %c0_17, %c0_18] : memref<2x2x32x16xf32, #tpu.memory_space<vmem>>, vector<1x2x32x16xf32>
    %22 = vector.shape_cast %21 : vector<1x2x32x16xf32> to vector<2x32x16xf32>
    "tpu.trace_start"() <{level = 10 : i32, message = "hsd,hdf->hsf"}> : () -> ()
    %cst_19 = arith.constant dense<0.000000e+00> : vector<2x8x16xf32>
    %23 = tpu.matmul %13, %22, %cst_19 {dimension_numbers = #tpu.dot_dimension_numbers<[2], [1], [1], [2], [0, 0, 0, 1, 1, 2], [0], [0]>} : vector<2x8x32xf32>, vector<2x32x16xf32>, vector<2x8x16xf32> -> vector<2x8x16xf32>
    "tpu.trace_stop"() : () -> ()
    %c0_20 = arith.constant 0 : index
    %c0_21 = arith.constant 0 : index
    %c0_22 = arith.constant 0 : index
    %c0_23 = arith.constant 0 : index
    %24 = vector.load %arg7[%c0_20, %c0_21, %c0_22, %c0_23] : memref<2x2x1x16xf32, #tpu.memory_space<vmem>>, vector<1x2x1x16xf32>
    %25 = vector.shape_cast %24 : vector<1x2x1x16xf32> to vector<2x1x16xf32>
    %26 = vector.broadcast %25 : vector<2x1x16xf32> to vector<2x8x16xf32>
    %27 = arith.addf %23, %26 : vector<2x8x16xf32>
    %c0_24 = arith.constant 0 : index
    %c0_25 = arith.constant 0 : index
    %c0_26 = arith.constant 0 : index
    %c0_27 = arith.constant 0 : index
    %28 = vector.load %arg8[%c0_24, %c0_25, %c0_26, %c0_27] : memref<2x2x32x16xf32, #tpu.memory_space<vmem>>, vector<1x2x32x16xf32>
    %29 = vector.shape_cast %28 : vector<1x2x32x16xf32> to vector<2x32x16xf32>
    "tpu.trace_start"() <{level = 10 : i32, message = "hsd,hdf->hsf"}> : () -> ()
    %cst_28 = arith.constant dense<0.000000e+00> : vector<2x8x16xf32>
    %30 = tpu.matmul %13, %29, %cst_28 {dimension_numbers = #tpu.dot_dimension_numbers<[2], [1], [1], [2], [0, 0, 0, 1, 1, 2], [0], [0]>} : vector<2x8x32xf32>, vector<2x32x16xf32>, vector<2x8x16xf32> -> vector<2x8x16xf32>
    "tpu.trace_stop"() : () -> ()
    %c0_29 = arith.constant 0 : index
    %c0_30 = arith.constant 0 : index
    %c0_31 = arith.constant 0 : index
    %c0_32 = arith.constant 0 : index
    %31 = vector.load %arg9[%c0_29, %c0_30, %c0_31, %c0_32] : memref<2x2x1x16xf32, #tpu.memory_space<vmem>>, vector<1x2x1x16xf32>
    %32 = vector.shape_cast %31 : vector<1x2x1x16xf32> to vector<2x1x16xf32>
    %33 = vector.broadcast %32 : vector<2x1x16xf32> to vector<2x8x16xf32>
    %34 = arith.addf %30, %33 : vector<2x8x16xf32>
    "tpu.trace_start"() <{level = 10 : i32, message = "hqd,hkd->hqk"}> : () -> ()
    %cst_33 = arith.constant dense<0.000000e+00> : vector<2x8x8xf32>
    %35 = tpu.matmul %20, %27, %cst_33 {dimension_numbers = #tpu.dot_dimension_numbers<[2], [2], [1], [1], [0, 0, 0, 1, 1, 1], [0], [0]>} : vector<2x8x16xf32>, vector<2x8x16xf32>, vector<2x8x8xf32> -> vector<2x8x8xf32>
    "tpu.trace_stop"() : () -> ()
    %cst_34 = arith.constant 2.500000e-01 : f32
    %36 = vector.broadcast %cst_34 : f32 to vector<2x8x8xf32>
    %37 = arith.mulf %35, %36 : vector<2x8x8xf32>
    %38 = arith.addf %37, %10 : vector<2x8x8xf32>
    %cst_35 = arith.constant dense<0xFF800000> : vector<2x8xf32>
    %39 = vector.multi_reduction <maximumf>, %38, %cst_35 [2] : vector<2x8x8xf32> to vector<2x8xf32>
    %40 = vector.shape_cast %39 : vector<2x8xf32> to vector<2x8x1xf32>
    %41 = vector.broadcast %40 : vector<2x8x1xf32> to vector<2x8x8xf32>
    %42 = arith.subf %38, %41 : vector<2x8x8xf32>
    %43 = math.exp %42 : vector<2x8x8xf32>
    %cst_36 = arith.constant dense<0.000000e+00> : vector<2x8xf32>
    %44 = vector.multi_reduction <add>, %43, %cst_36 [2] : vector<2x8x8xf32> to vector<2x8xf32>
    %45 = vector.shape_cast %44 : vector<2x8xf32> to vector<2x8x1xf32>
    %46 = tpu.reciprocal %45 : vector<2x8x1xf32> -> vector<2x8x1xf32>
    %47 = vector.broadcast %46 : vector<2x8x1xf32> to vector<2x8x8xf32>
    %48 = arith.mulf %43, %47 : vector<2x8x8xf32>
    "tpu.trace_start"() <{level = 10 : i32, message = "hqk,hkd->hqd"}> : () -> ()
    %cst_37 = arith.constant dense<0.000000e+00> : vector<2x8x16xf32>
    %49 = tpu.matmul %48, %34, %cst_37 {dimension_numbers = #tpu.dot_dimension_numbers<[2], [1], [1], [2], [0, 0, 0, 1, 1, 2], [0], [0]>} : vector<2x8x8xf32>, vector<2x8x16xf32>, vector<2x8x16xf32> -> vector<2x8x16xf32>
    "tpu.trace_stop"() : () -> ()
    %50 = vector.extract_strided_slice %49 {offsets = [0, 0, 0], sizes = [1, 8, 16], strides = [1, 1, 1]} : vector<2x8x16xf32> to vector<1x8x16xf32>
    %51 = vector.shape_cast %50 : vector<1x8x16xf32> to vector<8x16xf32>
    %52 = vector.extract_strided_slice %49 {offsets = [1, 0, 0], sizes = [1, 8, 16], strides = [1, 1, 1]} : vector<2x8x16xf32> to vector<1x8x16xf32>
    %53 = vector.shape_cast %52 : vector<1x8x16xf32> to vector<8x16xf32>
    %54 = tpu.concatenate %51, %53 in 1 : vector<8x16xf32>, vector<8x16xf32> -> vector<8x32xf32>
    %c0_38 = arith.constant 0 : index
    %c0_39 = arith.constant 0 : index
    %c0_40 = arith.constant 0 : index
    %55 = vector.load %arg10[%c0_38, %c0_39, %c0_40] : memref<2x32x32xf32, #tpu.memory_space<vmem>>, vector<1x32x32xf32>
    %56 = vector.shape_cast %55 : vector<1x32x32xf32> to vector<32x32xf32>
    %cst_41 = arith.constant dense<0.000000e+00> : vector<8x32xf32>
    %57 = tpu.matmul %54, %56, %cst_41 {dimension_numbers = #tpu.dot_dimension_numbers<[1], [0], [0], [1], [0, 0, 1, 1], [], []>} : vector<8x32xf32>, vector<32x32xf32>, vector<8x32xf32> -> vector<8x32xf32>
    %c0_42 = arith.constant 0 : index
    %c0_43 = arith.constant 0 : index
    %c0_44 = arith.constant 0 : index
    %58 = vector.load %arg11[%c0_42, %c0_43, %c0_44] : memref<2x1x32xf32, #tpu.memory_space<vmem>>, vector<1x1x32xf32>
    %59 = vector.shape_cast %58 : vector<1x1x32xf32> to vector<1x32xf32>
    %60 = vector.broadcast %59 : vector<1x32xf32> to vector<8x32xf32>
    %61 = arith.addf %57, %60 : vector<8x32xf32>
    %62 = arith.addf %1, %61 : vector<8x32xf32>
    %c0_45 = arith.constant 0 : index
    %c0_46 = arith.constant 0 : index
    %c0_47 = arith.constant 0 : index
    %63 = vector.load %arg12[%c0_45, %c0_46, %c0_47] : memref<2x1x32xf32, #tpu.memory_space<vmem>>, vector<1x1x32xf32>
    %64 = vector.shape_cast %63 : vector<1x1x32xf32> to vector<1x32xf32>
    %c0_48 = arith.constant 0 : index
    %c0_49 = arith.constant 0 : index
    %c0_50 = arith.constant 0 : index
    %65 = vector.load %arg13[%c0_48, %c0_49, %c0_50] : memref<2x1x32xf32, #tpu.memory_space<vmem>>, vector<1x1x32xf32>
    %66 = vector.shape_cast %65 : vector<1x1x32xf32> to vector<1x32xf32>
    %cst_51 = arith.constant dense<0.000000e+00> : vector<8xf32>
    %67 = vector.multi_reduction <add>, %62, %cst_51 [1] : vector<8x32xf32> to vector<8xf32>
    %68 = vector.shape_cast %67 : vector<8xf32> to vector<8x1xf32>
    %cst_52 = arith.constant 3.200000e+01 : f32
    %69 = vector.broadcast %cst_52 : f32 to vector<8x1xf32>
    %70 = arith.divf %68, %69 : vector<8x1xf32>
    %71 = vector.broadcast %70 : vector<8x1xf32> to vector<8x32xf32>
    %72 = arith.subf %62, %71 : vector<8x32xf32>
    %73 = arith.mulf %72, %72 : vector<8x32xf32>
    %cst_53 = arith.constant dense<0.000000e+00> : vector<8xf32>
    %74 = vector.multi_reduction <add>, %73, %cst_53 [1] : vector<8x32xf32> to vector<8xf32>
    %75 = vector.shape_cast %74 : vector<8xf32> to vector<8x1xf32>
    %cst_54 = arith.constant 3.200000e+01 : f32
    %76 = vector.broadcast %cst_54 : f32 to vector<8x1xf32>
    %77 = arith.divf %75, %76 : vector<8x1xf32>
    %78 = vector.broadcast %70 : vector<8x1xf32> to vector<8x32xf32>
    %79 = arith.subf %62, %78 : vector<8x32xf32>
    %cst_55 = arith.constant 9.99999996E-13 : f32
    %80 = vector.broadcast %cst_55 : f32 to vector<8x1xf32>
    %81 = arith.addf %77, %80 : vector<8x1xf32>
    %82 = math.rsqrt %81 : vector<8x1xf32>
    %83 = vector.broadcast %82 : vector<8x1xf32> to vector<8x32xf32>
    %84 = arith.mulf %79, %83 : vector<8x32xf32>
    %85 = vector.broadcast %64 : vector<1x32xf32> to vector<8x32xf32>
    %86 = arith.mulf %84, %85 : vector<8x32xf32>
    %87 = vector.broadcast %66 : vector<1x32xf32> to vector<8x32xf32>
    %88 = arith.addf %86, %87 : vector<8x32xf32>
    %c0_56 = arith.constant 0 : index
    %c0_57 = arith.constant 0 : index
    %c0_58 = arith.constant 0 : index
    %89 = vector.load %arg14[%c0_56, %c0_57, %c0_58] : memref<2x32x64xf32, #tpu.memory_space<vmem>>, vector<1x32x64xf32>
    %90 = vector.shape_cast %89 : vector<1x32x64xf32> to vector<32x64xf32>
    %cst_59 = arith.constant dense<0.000000e+00> : vector<8x64xf32>
    %91 = tpu.matmul %88, %90, %cst_59 {dimension_numbers = #tpu.dot_dimension_numbers<[1], [0], [0], [1], [0, 0, 1, 1], [], []>} : vector<8x32xf32>, vector<32x64xf32>, vector<8x64xf32> -> vector<8x64xf32>
    %c0_60 = arith.constant 0 : index
    %c0_61 = arith.constant 0 : index
    %c0_62 = arith.constant 0 : index
    %92 = vector.load %arg15[%c0_60, %c0_61, %c0_62] : memref<2x1x64xf32, #tpu.memory_space<vmem>>, vector<1x1x64xf32>
    %93 = vector.shape_cast %92 : vector<1x1x64xf32> to vector<1x64xf32>
    %94 = vector.broadcast %93 : vector<1x64xf32> to vector<8x64xf32>
    %95 = arith.addf %91, %94 : vector<8x64xf32>
    %cst_63 = arith.constant 5.000000e-01 : f32
    %96 = vector.broadcast %cst_63 : f32 to vector<8x64xf32>
    %97 = arith.mulf %96, %95 : vector<8x64xf32>
    %cst_64 = arith.constant 4.471500e-02 : f32
    %98 = vector.broadcast %cst_64 : f32 to vector<8x64xf32>
    %99 = arith.mulf %98, %95 : vector<8x64xf32>
    %100 = arith.mulf %99, %95 : vector<8x64xf32>
    %101 = arith.mulf %100, %95 : vector<8x64xf32>
    %102 = arith.addf %95, %101 : vector<8x64xf32>
    %cst_65 = arith.constant 0.797884583 : f32
    %103 = vector.broadcast %cst_65 : f32 to vector<8x64xf32>
    %104 = arith.mulf %103, %102 : vector<8x64xf32>
    %105 = math.tanh %104 : vector<8x64xf32>
    %cst_66 = arith.constant 1.000000e+00 : f32
    %106 = vector.broadcast %cst_66 : f32 to vector<8x64xf32>
    %107 = arith.addf %106, %105 : vector<8x64xf32>
    %108 = arith.mulf %97, %107 : vector<8x64xf32>
    %c0_67 = arith.constant 0 : index
    %c0_68 = arith.constant 0 : index
    %c0_69 = arith.constant 0 : index
    %109 = vector.load %arg16[%c0_67, %c0_68, %c0_69] : memref<2x64x32xf32, #tpu.memory_space<vmem>>, vector<1x64x32xf32>
    %110 = vector.shape_cast %109 : vector<1x64x32xf32> to vector<64x32xf32>
    %cst_70 = arith.constant dense<0.000000e+00> : vector<8x32xf32>
    %111 = tpu.matmul %108, %110, %cst_70 {dimension_numbers = #tpu.dot_dimension_numbers<[1], [0], [0], [1], [0, 0, 1, 1], [], []>} : vector<8x64xf32>, vector<64x32xf32>, vector<8x32xf32> -> vector<8x32xf32>
    %c0_71 = arith.constant 0 : index
    %c0_72 = arith.constant 0 : index
    %c0_73 = arith.constant 0 : index
    %112 = vector.load %arg17[%c0_71, %c0_72, %c0_73] : memref<2x1x32xf32, #tpu.memory_space<vmem>>, vector<1x1x32xf32>
    %113 = vector.shape_cast %112 : vector<1x1x32xf32> to vector<1x32xf32>
    %114 = vector.broadcast %113 : vector<1x32xf32> to vector<8x32xf32>
    %115 = arith.addf %111, %114 : vector<8x32xf32>
    %116 = arith.addf %88, %115 : vector<8x32xf32>
    %c0_74 = arith.constant 0 : index
    %c0_75 = arith.constant 0 : index
    %c0_76 = arith.constant 0 : index
    %117 = vector.load %arg18[%c0_74, %c0_75, %c0_76] : memref<2x1x32xf32, #tpu.memory_space<vmem>>, vector<1x1x32xf32>
    %118 = vector.shape_cast %117 : vector<1x1x32xf32> to vector<1x32xf32>
    %c0_77 = arith.constant 0 : index
    %c0_78 = arith.constant 0 : index
    %c0_79 = arith.constant 0 : index
    %119 = vector.load %arg19[%c0_77, %c0_78, %c0_79] : memref<2x1x32xf32, #tpu.memory_space<vmem>>, vector<1x1x32xf32>
    %120 = vector.shape_cast %119 : vector<1x1x32xf32> to vector<1x32xf32>
    %cst_80 = arith.constant dense<0.000000e+00> : vector<8xf32>
    %121 = vector.multi_reduction <add>, %116, %cst_80 [1] : vector<8x32xf32> to vector<8xf32>
    %122 = vector.shape_cast %121 : vector<8xf32> to vector<8x1xf32>
    %cst_81 = arith.constant 3.200000e+01 : f32
    %123 = vector.broadcast %cst_81 : f32 to vector<8x1xf32>
    %124 = arith.divf %122, %123 : vector<8x1xf32>
    %125 = vector.broadcast %124 : vector<8x1xf32> to vector<8x32xf32>
    %126 = arith.subf %116, %125 : vector<8x32xf32>
    %127 = arith.mulf %126, %126 : vector<8x32xf32>
    %cst_82 = arith.constant dense<0.000000e+00> : vector<8xf32>
    %128 = vector.multi_reduction <add>, %127, %cst_82 [1] : vector<8x32xf32> to vector<8xf32>
    %129 = vector.shape_cast %128 : vector<8xf32> to vector<8x1xf32>
    %cst_83 = arith.constant 3.200000e+01 : f32
    %130 = vector.broadcast %cst_83 : f32 to vector<8x1xf32>
    %131 = arith.divf %129, %130 : vector<8x1xf32>
    %132 = vector.broadcast %124 : vector<8x1xf32> to vector<8x32xf32>
    %133 = arith.subf %116, %132 : vector<8x32xf32>
    %cst_84 = arith.constant 9.99999996E-13 : f32
    %134 = vector.broadcast %cst_84 : f32 to vector<8x1xf32>
    %135 = arith.addf %131, %134 : vector<8x1xf32>
    %136 = math.rsqrt %135 : vector<8x1xf32>
    %137 = vector.broadcast %136 : vector<8x1xf32> to vector<8x32xf32>
    %138 = arith.mulf %133, %137 : vector<8x32xf32>
    %139 = vector.broadcast %118 : vector<1x32xf32> to vector<8x32xf32>
    %140 = arith.mulf %138, %139 : vector<8x32xf32>
    %141 = vector.broadcast %120 : vector<1x32xf32> to vector<8x32xf32>
    %142 = arith.addf %140, %141 : vector<8x32xf32>
    %143 = vector.shape_cast %142 : vector<8x32xf32> to vector<1x8x32xf32>
    %144 = vector.shape_cast %143 : vector<1x8x32xf32> to vector<1x8x32xf32>
    %145 = vector.broadcast %144 : vector<1x8x32xf32> to vector<2x8x32xf32>
    %c1 = arith.constant 1 : index
    %c0_85 = arith.constant 0 : index
    %c0_86 = arith.constant 0 : index
    %c0_87 = arith.constant 0 : index
    %146 = vector.load %arg4[%c1, %c0_85, %c0_86, %c0_87] : memref<2x2x32x16xf32, #tpu.memory_space<vmem>>, vector<1x2x32x16xf32>
    %147 = vector.shape_cast %146 : vector<1x2x32x16xf32> to vector<2x32x16xf32>
    "tpu.trace_start"() <{level = 10 : i32, message = "hsd,hdf->hsf"}> : () -> ()
    %cst_88 = arith.constant dense<0.000000e+00> : vector<2x8x16xf32>
    %148 = tpu.matmul %145, %147, %cst_88 {dimension_numbers = #tpu.dot_dimension_numbers<[2], [1], [1], [2], [0, 0, 0, 1, 1, 2], [0], [0]>} : vector<2x8x32xf32>, vector<2x32x16xf32>, vector<2x8x16xf32> -> vector<2x8x16xf32>
    "tpu.trace_stop"() : () -> ()
    %c1_89 = arith.constant 1 : index
    %c0_90 = arith.constant 0 : index
    %c0_91 = arith.constant 0 : index
    %c0_92 = arith.constant 0 : index
    %149 = vector.load %arg5[%c1_89, %c0_90, %c0_91, %c0_92] : memref<2x2x1x16xf32, #tpu.memory_space<vmem>>, vector<1x2x1x16xf32>
    %150 = vector.shape_cast %149 : vector<1x2x1x16xf32> to vector<2x1x16xf32>
    %151 = vector.broadcast %150 : vector<2x1x16xf32> to vector<2x8x16xf32>
    %152 = arith.addf %148, %151 : vector<2x8x16xf32>
    %c1_93 = arith.constant 1 : index
    %c0_94 = arith.constant 0 : index
    %c0_95 = arith.constant 0 : index
    %c0_96 = arith.constant 0 : index
    %153 = vector.load %arg6[%c1_93, %c0_94, %c0_95, %c0_96] : memref<2x2x32x16xf32, #tpu.memory_space<vmem>>, vector<1x2x32x16xf32>
    %154 = vector.shape_cast %153 : vector<1x2x32x16xf32> to vector<2x32x16xf32>
    "tpu.trace_start"() <{level = 10 : i32, message = "hsd,hdf->hsf"}> : () -> ()
    %cst_97 = arith.constant dense<0.000000e+00> : vector<2x8x16xf32>
    %155 = tpu.matmul %145, %154, %cst_97 {dimension_numbers = #tpu.dot_dimension_numbers<[2], [1], [1], [2], [0, 0, 0, 1, 1, 2], [0], [0]>} : vector<2x8x32xf32>, vector<2x32x16xf32>, vector<2x8x16xf32> -> vector<2x8x16xf32>
    "tpu.trace_stop"() : () -> ()
    %c1_98 = arith.constant 1 : index
    %c0_99 = arith.constant 0 : index
    %c0_100 = arith.constant 0 : index
    %c0_101 = arith.constant 0 : index
    %156 = vector.load %arg7[%c1_98, %c0_99, %c0_100, %c0_101] : memref<2x2x1x16xf32, #tpu.memory_space<vmem>>, vector<1x2x1x16xf32>
    %157 = vector.shape_cast %156 : vector<1x2x1x16xf32> to vector<2x1x16xf32>
    %158 = vector.broadcast %157 : vector<2x1x16xf32> to vector<2x8x16xf32>
    %159 = arith.addf %155, %158 : vector<2x8x16xf32>
    %c1_102 = arith.constant 1 : index
    %c0_103 = arith.constant 0 : index
    %c0_104 = arith.constant 0 : index
    %c0_105 = arith.constant 0 : index
    %160 = vector.load %arg8[%c1_102, %c0_103, %c0_104, %c0_105] : memref<2x2x32x16xf32, #tpu.memory_space<vmem>>, vector<1x2x32x16xf32>
    %161 = vector.shape_cast %160 : vector<1x2x32x16xf32> to vector<2x32x16xf32>
    "tpu.trace_start"() <{level = 10 : i32, message = "hsd,hdf->hsf"}> : () -> ()
    %cst_106 = arith.constant dense<0.000000e+00> : vector<2x8x16xf32>
    %162 = tpu.matmul %145, %161, %cst_106 {dimension_numbers = #tpu.dot_dimension_numbers<[2], [1], [1], [2], [0, 0, 0, 1, 1, 2], [0], [0]>} : vector<2x8x32xf32>, vector<2x32x16xf32>, vector<2x8x16xf32> -> vector<2x8x16xf32>
    "tpu.trace_stop"() : () -> ()
    %c1_107 = arith.constant 1 : index
    %c0_108 = arith.constant 0 : index
    %c0_109 = arith.constant 0 : index
    %c0_110 = arith.constant 0 : index
    %163 = vector.load %arg9[%c1_107, %c0_108, %c0_109, %c0_110] : memref<2x2x1x16xf32, #tpu.memory_space<vmem>>, vector<1x2x1x16xf32>
    %164 = vector.shape_cast %163 : vector<1x2x1x16xf32> to vector<2x1x16xf32>
    %165 = vector.broadcast %164 : vector<2x1x16xf32> to vector<2x8x16xf32>
    %166 = arith.addf %162, %165 : vector<2x8x16xf32>
    "tpu.trace_start"() <{level = 10 : i32, message = "hqd,hkd->hqk"}> : () -> ()
    %cst_111 = arith.constant dense<0.000000e+00> : vector<2x8x8xf32>
    %167 = tpu.matmul %152, %159, %cst_111 {dimension_numbers = #tpu.dot_dimension_numbers<[2], [2], [1], [1], [0, 0, 0, 1, 1, 1], [0], [0]>} : vector<2x8x16xf32>, vector<2x8x16xf32>, vector<2x8x8xf32> -> vector<2x8x8xf32>
    "tpu.trace_stop"() : () -> ()
    %cst_112 = arith.constant 2.500000e-01 : f32
    %168 = vector.broadcast %cst_112 : f32 to vector<2x8x8xf32>
    %169 = arith.mulf %167, %168 : vector<2x8x8xf32>
    %170 = arith.addf %169, %10 : vector<2x8x8xf32>
    %cst_113 = arith.constant dense<0xFF800000> : vector<2x8xf32>
    %171 = vector.multi_reduction <maximumf>, %170, %cst_113 [2] : vector<2x8x8xf32> to vector<2x8xf32>
    %172 = vector.shape_cast %171 : vector<2x8xf32> to vector<2x8x1xf32>
    %173 = vector.broadcast %172 : vector<2x8x1xf32> to vector<2x8x8xf32>
    %174 = arith.subf %170, %173 : vector<2x8x8xf32>
    %175 = math.exp %174 : vector<2x8x8xf32>
    %cst_114 = arith.constant dense<0.000000e+00> : vector<2x8xf32>
    %176 = vector.multi_reduction <add>, %175, %cst_114 [2] : vector<2x8x8xf32> to vector<2x8xf32>
    %177 = vector.shape_cast %176 : vector<2x8xf32> to vector<2x8x1xf32>
    %178 = tpu.reciprocal %177 : vector<2x8x1xf32> -> vector<2x8x1xf32>
    %179 = vector.broadcast %178 : vector<2x8x1xf32> to vector<2x8x8xf32>
    %180 = arith.mulf %175, %179 : vector<2x8x8xf32>
    "tpu.trace_start"() <{level = 10 : i32, message = "hqk,hkd->hqd"}> : () -> ()
    %cst_115 = arith.constant dense<0.000000e+00> : vector<2x8x16xf32>
    %181 = tpu.matmul %180, %166, %cst_115 {dimension_numbers = #tpu.dot_dimension_numbers<[2], [1], [1], [2], [0, 0, 0, 1, 1, 2], [0], [0]>} : vector<2x8x8xf32>, vector<2x8x16xf32>, vector<2x8x16xf32> -> vector<2x8x16xf32>
    "tpu.trace_stop"() : () -> ()
    %182 = vector.extract_strided_slice %181 {offsets = [0, 0, 0], sizes = [1, 8, 16], strides = [1, 1, 1]} : vector<2x8x16xf32> to vector<1x8x16xf32>
    %183 = vector.shape_cast %182 : vector<1x8x16xf32> to vector<8x16xf32>
    %184 = vector.extract_strided_slice %181 {offsets = [1, 0, 0], sizes = [1, 8, 16], strides = [1, 1, 1]} : vector<2x8x16xf32> to vector<1x8x16xf32>
    %185 = vector.shape_cast %184 : vector<1x8x16xf32> to vector<8x16xf32>
    %186 = tpu.concatenate %183, %185 in 1 : vector<8x16xf32>, vector<8x16xf32> -> vector<8x32xf32>
    %c1_116 = arith.constant 1 : index
    %c0_117 = arith.constant 0 : index
    %c0_118 = arith.constant 0 : index
    %187 = vector.load %arg10[%c1_116, %c0_117, %c0_118] : memref<2x32x32xf32, #tpu.memory_space<vmem>>, vector<1x32x32xf32>
    %188 = vector.shape_cast %187 : vector<1x32x32xf32> to vector<32x32xf32>
    %cst_119 = arith.constant dense<0.000000e+00> : vector<8x32xf32>
    %189 = tpu.matmul %186, %188, %cst_119 {dimension_numbers = #tpu.dot_dimension_numbers<[1], [0], [0], [1], [0, 0, 1, 1], [], []>} : vector<8x32xf32>, vector<32x32xf32>, vector<8x32xf32> -> vector<8x32xf32>
    %c1_120 = arith.constant 1 : index
    %c0_121 = arith.constant 0 : index
    %c0_122 = arith.constant 0 : index
    %190 = vector.load %arg11[%c1_120, %c0_121, %c0_122] : memref<2x1x32xf32, #tpu.memory_space<vmem>>, vector<1x1x32xf32>
    %191 = vector.shape_cast %190 : vector<1x1x32xf32> to vector<1x32xf32>
    %192 = vector.broadcast %191 : vector<1x32xf32> to vector<8x32xf32>
    %193 = arith.addf %189, %192 : vector<8x32xf32>
    %194 = arith.addf %142, %193 : vector<8x32xf32>
    %c1_123 = arith.constant 1 : index
    %c0_124 = arith.constant 0 : index
    %c0_125 = arith.constant 0 : index
    %195 = vector.load %arg12[%c1_123, %c0_124, %c0_125] : memref<2x1x32xf32, #tpu.memory_space<vmem>>, vector<1x1x32xf32>
    %196 = vector.shape_cast %195 : vector<1x1x32xf32> to vector<1x32xf32>
    %c1_126 = arith.constant 1 : index
    %c0_127 = arith.constant 0 : index
    %c0_128 = arith.constant 0 : index
    %197 = vector.load %arg13[%c1_126, %c0_127, %c0_128] : memref<2x1x32xf32, #tpu.memory_space<vmem>>, vector<1x1x32xf32>
    %198 = vector.shape_cast %197 : vector<1x1x32xf32> to vector<1x32xf32>
    %cst_129 = arith.constant dense<0.000000e+00> : vector<8xf32>
    %199 = vector.multi_reduction <add>, %194, %cst_129 [1] : vector<8x32xf32> to vector<8xf32>
    %200 = vector.shape_cast %199 : vector<8xf32> to vector<8x1xf32>
    %cst_130 = arith.constant 3.200000e+01 : f32
    %201 = vector.broadcast %cst_130 : f32 to vector<8x1xf32>
    %202 = arith.divf %200, %201 : vector<8x1xf32>
    %203 = vector.broadcast %202 : vector<8x1xf32> to vector<8x32xf32>
    %204 = arith.subf %194, %203 : vector<8x32xf32>
    %205 = arith.mulf %204, %204 : vector<8x32xf32>
    %cst_131 = arith.constant dense<0.000000e+00> : vector<8xf32>
    %206 = vector.multi_reduction <add>, %205, %cst_131 [1] : vector<8x32xf32> to vector<8xf32>
    %207 = vector.shape_cast %206 : vector<8xf32> to vector<8x1xf32>
    %cst_132 = arith.constant 3.200000e+01 : f32
    %208 = vector.broadcast %cst_132 : f32 to vector<8x1xf32>
    %209 = arith.divf %207, %208 : vector<8x1xf32>
    %210 = vector.broadcast %202 : vector<8x1xf32> to vector<8x32xf32>
    %211 = arith.subf %194, %210 : vector<8x32xf32>
    %cst_133 = arith.constant 9.99999996E-13 : f32
    %212 = vector.broadcast %cst_133 : f32 to vector<8x1xf32>
    %213 = arith.addf %209, %212 : vector<8x1xf32>
    %214 = math.rsqrt %213 : vector<8x1xf32>
    %215 = vector.broadcast %214 : vector<8x1xf32> to vector<8x32xf32>
    %216 = arith.mulf %211, %215 : vector<8x32xf32>
    %217 = vector.broadcast %196 : vector<1x32xf32> to vector<8x32xf32>
    %218 = arith.mulf %216, %217 : vector<8x32xf32>
    %219 = vector.broadcast %198 : vector<1x32xf32> to vector<8x32xf32>
    %220 = arith.addf %218, %219 : vector<8x32xf32>
    %c1_134 = arith.constant 1 : index
    %c0_135 = arith.constant 0 : index
    %c0_136 = arith.constant 0 : index
    %221 = vector.load %arg14[%c1_134, %c0_135, %c0_136] : memref<2x32x64xf32, #tpu.memory_space<vmem>>, vector<1x32x64xf32>
    %222 = vector.shape_cast %221 : vector<1x32x64xf32> to vector<32x64xf32>
    %cst_137 = arith.constant dense<0.000000e+00> : vector<8x64xf32>
    %223 = tpu.matmul %220, %222, %cst_137 {dimension_numbers = #tpu.dot_dimension_numbers<[1], [0], [0], [1], [0, 0, 1, 1], [], []>} : vector<8x32xf32>, vector<32x64xf32>, vector<8x64xf32> -> vector<8x64xf32>
    %c1_138 = arith.constant 1 : index
    %c0_139 = arith.constant 0 : index
    %c0_140 = arith.constant 0 : index
    %224 = vector.load %arg15[%c1_138, %c0_139, %c0_140] : memref<2x1x64xf32, #tpu.memory_space<vmem>>, vector<1x1x64xf32>
    %225 = vector.shape_cast %224 : vector<1x1x64xf32> to vector<1x64xf32>
    %226 = vector.broadcast %225 : vector<1x64xf32> to vector<8x64xf32>
    %227 = arith.addf %223, %226 : vector<8x64xf32>
    %cst_141 = arith.constant 5.000000e-01 : f32
    %228 = vector.broadcast %cst_141 : f32 to vector<8x64xf32>
    %229 = arith.mulf %228, %227 : vector<8x64xf32>
    %cst_142 = arith.constant 4.471500e-02 : f32
    %230 = vector.broadcast %cst_142 : f32 to vector<8x64xf32>
    %231 = arith.mulf %230, %227 : vector<8x64xf32>
    %232 = arith.mulf %231, %227 : vector<8x64xf32>
    %233 = arith.mulf %232, %227 : vector<8x64xf32>
    %234 = arith.addf %227, %233 : vector<8x64xf32>
    %cst_143 = arith.constant 0.797884583 : f32
    %235 = vector.broadcast %cst_143 : f32 to vector<8x64xf32>
    %236 = arith.mulf %235, %234 : vector<8x64xf32>
    %237 = math.tanh %236 : vector<8x64xf32>
    %cst_144 = arith.constant 1.000000e+00 : f32
    %238 = vector.broadcast %cst_144 : f32 to vector<8x64xf32>
    %239 = arith.addf %238, %237 : vector<8x64xf32>
    %240 = arith.mulf %229, %239 : vector<8x64xf32>
    %c1_145 = arith.constant 1 : index
    %c0_146 = arith.constant 0 : index
    %c0_147 = arith.constant 0 : index
    %241 = vector.load %arg16[%c1_145, %c0_146, %c0_147] : memref<2x64x32xf32, #tpu.memory_space<vmem>>, vector<1x64x32xf32>
    %242 = vector.shape_cast %241 : vector<1x64x32xf32> to vector<64x32xf32>
    %cst_148 = arith.constant dense<0.000000e+00> : vector<8x32xf32>
    %243 = tpu.matmul %240, %242, %cst_148 {dimension_numbers = #tpu.dot_dimension_numbers<[1], [0], [0], [1], [0, 0, 1, 1], [], []>} : vector<8x64xf32>, vector<64x32xf32>, vector<8x32xf32> -> vector<8x32xf32>
    %c1_149 = arith.constant 1 : index
    %c0_150 = arith.constant 0 : index
    %c0_151 = arith.constant 0 : index
    %244 = vector.load %arg17[%c1_149, %c0_150, %c0_151] : memref<2x1x32xf32, #tpu.memory_space<vmem>>, vector<1x1x32xf32>
    %245 = vector.shape_cast %244 : vector<1x1x32xf32> to vector<1x32xf32>
    %246 = vector.broadcast %245 : vector<1x32xf32> to vector<8x32xf32>
    %247 = arith.addf %243, %246 : vector<8x32xf32>
    %248 = arith.addf %220, %247 : vector<8x32xf32>
    %c1_152 = arith.constant 1 : index
    %c0_153 = arith.constant 0 : index
    %c0_154 = arith.constant 0 : index
    %249 = vector.load %arg18[%c1_152, %c0_153, %c0_154] : memref<2x1x32xf32, #tpu.memory_space<vmem>>, vector<1x1x32xf32>
    %250 = vector.shape_cast %249 : vector<1x1x32xf32> to vector<1x32xf32>
    %c1_155 = arith.constant 1 : index
    %c0_156 = arith.constant 0 : index
    %c0_157 = arith.constant 0 : index
    %251 = vector.load %arg19[%c1_155, %c0_156, %c0_157] : memref<2x1x32xf32, #tpu.memory_space<vmem>>, vector<1x1x32xf32>
    %252 = vector.shape_cast %251 : vector<1x1x32xf32> to vector<1x32xf32>
    %cst_158 = arith.constant dense<0.000000e+00> : vector<8xf32>
    %253 = vector.multi_reduction <add>, %248, %cst_158 [1] : vector<8x32xf32> to vector<8xf32>
    %254 = vector.shape_cast %253 : vector<8xf32> to vector<8x1xf32>
    %cst_159 = arith.constant 3.200000e+01 : f32
    %255 = vector.broadcast %cst_159 : f32 to vector<8x1xf32>
    %256 = arith.divf %254, %255 : vector<8x1xf32>
    %257 = vector.broadcast %256 : vector<8x1xf32> to vector<8x32xf32>
    %258 = arith.subf %248, %257 : vector<8x32xf32>
    %259 = arith.mulf %258, %258 : vector<8x32xf32>
    %cst_160 = arith.constant dense<0.000000e+00> : vector<8xf32>
    %260 = vector.multi_reduction <add>, %259, %cst_160 [1] : vector<8x32xf32> to vector<8xf32>
    %261 = vector.shape_cast %260 : vector<8xf32> to vector<8x1xf32>
    %cst_161 = arith.constant 3.200000e+01 : f32
    %262 = vector.broadcast %cst_161 : f32 to vector<8x1xf32>
    %263 = arith.divf %261, %262 : vector<8x1xf32>
    %264 = vector.broadcast %256 : vector<8x1xf32> to vector<8x32xf32>
    %265 = arith.subf %248, %264 : vector<8x32xf32>
    %cst_162 = arith.constant 9.99999996E-13 : f32
    %266 = vector.broadcast %cst_162 : f32 to vector<8x1xf32>
    %267 = arith.addf %263, %266 : vector<8x1xf32>
    %268 = math.rsqrt %267 : vector<8x1xf32>
    %269 = vector.broadcast %268 : vector<8x1xf32> to vector<8x32xf32>
    %270 = arith.mulf %265, %269 : vector<8x32xf32>
    %271 = vector.broadcast %250 : vector<1x32xf32> to vector<8x32xf32>
    %272 = arith.mulf %270, %271 : vector<8x32xf32>
    %273 = vector.broadcast %252 : vector<1x32xf32> to vector<8x32xf32>
    %274 = arith.addf %272, %273 : vector<8x32xf32>
    %275 = tpu.iota {dimensions = array<i32: 0>} : vector<8x1xi32>
    %c4_i32 = arith.constant 4 : i32
    %276 = vector.broadcast %c4_i32 : i32 to vector<8x1xi32>
    %277 = arith.cmpi sge, %275, %276 : vector<8x1xi32>
    %c0_163 = arith.constant 0 : index
    %c0_164 = arith.constant 0 : index
    %c0_165 = arith.constant 0 : index
    %278 = vector.load %arg3[%c0_163, %c0_164, %c0_165] : memref<1x8x1xf32, #tpu.memory_space<vmem>>, vector<1x8x1xf32>
    %279 = vector.shape_cast %278 : vector<1x8x1xf32> to vector<8x1xf32>
    %cst_166 = arith.constant 0.000000e+00 : f32
    %280 = vector.broadcast %cst_166 : f32 to vector<8x1xf32>
    %281 = arith.select %277, %279, %280 : vector<8x1xi1>, vector<8x1xf32>
    %282 = vector.broadcast %281 : vector<8x1xf32> to vector<8x32xf32>
    %283 = arith.mulf %274, %282 : vector<8x32xf32>
    %cst_167 = arith.constant dense<0.000000e+00> : vector<32xf32>
    %284 = vector.multi_reduction <add>, %283, %cst_167 [0] : vector<8x32xf32> to vector<32xf32>
    %285 = vector.shape_cast %284 : vector<32xf32> to vector<1x32xf32>
    %cst_168 = arith.constant dense<0.000000e+00> : vector<1xf32>
    %286 = vector.multi_reduction <add>, %281, %cst_168 [0] : vector<8x1xf32> to vector<1xf32>
    %287 = vector.shape_cast %286 : vector<1xf32> to vector<1x1xf32>
    %288 = tpu.reciprocal %287 {approx = true} : vector<1x1xf32> -> vector<1x1xf32>
    %289 = vector.broadcast %288 : vector<1x1xf32> to vector<1x32xf32>
    %290 = arith.mulf %285, %289 : vector<1x32xf32>
    %c0_169 = arith.constant 0 : index
    %c0_170 = arith.constant 0 : index
    %c0_171 = arith.constant 0 : index
    %291 = vector.load %arg20[%c0_169, %c0_170, %c0_171] : memref<1x1x32xf32, #tpu.memory_space<vmem>>, vector<1x1x32xf32>
    %292 = vector.shape_cast %291 : vector<1x1x32xf32> to vector<1x32xf32>
    %293 = vector.shape_cast %290 : vector<1x32xf32> to vector<1x1x32xf32>
    tpu.vector_store %arg20[%c0_169, %c0_170, %c0_171], %293 {strides = array<i32>} : memref<1x1x32xf32, #tpu.memory_space<vmem>>, vector<1x1x32xf32>,
    return
  }
  func.func @transform_0(%arg0: i32) -> (i32, i32, i32) {
    %c0_i32 = arith.constant 0 : i32
    %c0_i32_0 = arith.constant 0 : i32
    %c0_i32_1 = arith.constant 0 : i32
    return %arg0, %c0_i32, %c0_i32_0 : i32, i32, i32
  }
  func.func @transform_1(%arg0: i32) -> (i32, i32, i32) {
    %c0_i32 = arith.constant 0 : i32
    %c0_i32_0 = arith.constant 0 : i32
    %c0_i32_1 = arith.constant 0 : i32
    return %arg0, %c0_i32, %c0_i32_0 : i32, i32, i32
  }
  func.func @transform_2(%arg0: i32) -> (i32, i32, i32) {
    %c0_i32 = arith.constant 0 : i32
    %c0_i32_0 = arith.constant 0 : i32
    %c0_i32_1 = arith.constant 0 : i32
    return %arg0, %c0_i32, %c0_i32_0 : i32, i32, i32
  }
  func.func @transform_3(%arg0: i32) -> (i32, i32, i32, i32) {
    %c0_i32 = arith.constant 0 : i32
    %c0_i32_0 = arith.constant 0 : i32
    %c0_i32_1 = arith.constant 0 : i32
    %c0_i32_2 = arith.constant 0 : i32
    %c0_i32_3 = arith.constant 0 : i32
    return %c0_i32, %c0_i32_0, %c0_i32_1, %c0_i32_2 : i32, i32, i32, i32
  }
  func.func @transform_4(%arg0: i32) -> (i32, i32, i32, i32) {
    %c0_i32 = arith.constant 0 : i32
    %c0_i32_0 = arith.constant 0 : i32
    %c0_i32_1 = arith.constant 0 : i32
    %c0_i32_2 = arith.constant 0 : i32
    %c0_i32_3 = arith.constant 0 : i32
    return %c0_i32, %c0_i32_0, %c0_i32_1, %c0_i32_2 : i32, i32, i32, i32
  }
  func.func @transform_5(%arg0: i32) -> (i32, i32, i32, i32) {
    %c0_i32 = arith.constant 0 : i32
    %c0_i32_0 = arith.constant 0 : i32
    %c0_i32_1 = arith.constant 0 : i32
    %c0_i32_2 = arith.constant 0 : i32
    %c0_i32_3 = arith.constant 0 : i32
    return %c0_i32, %c0_i32_0, %c0_i32_1, %c0_i32_2 : i32, i32, i32, i32
  }
  func.func @transform_6(%arg0: i32) -> (i32, i32, i32, i32) {
    %c0_i32 = arith.constant 0 : i32
    %c0_i32_0 = arith.constant 0 : i32
    %c0_i32_1 = arith.constant 0 : i32
    %c0_i32_2 = arith.constant 0 : i32
    %c0_i32_3 = arith.constant 0 : i32
    return %c0_i32, %c0_i32_0, %c0_i32_1, %c0_i32_2 : i32, i32, i32, i32
  }
  func.func @transform_7(%arg0: i32) -> (i32, i32, i32, i32) {
    %c0_i32 = arith.constant 0 : i32
    %c0_i32_0 = arith.constant 0 : i32
    %c0_i32_1 = arith.constant 0 : i32
    %c0_i32_2 = arith.constant 0 : i32
    %c0_i32_3 = arith.constant 0 : i32
    return %c0_i32, %c0_i32_0, %c0_i32_1, %c0_i32_2 : i32, i32, i32, i32
  }
  func.func @transform_8(%arg0: i32) -> (i32, i32, i32, i32) {
    %c0_i32 = arith.constant 0 : i32
    %c0_i32_0 = arith.constant 0 : i32
    %c0_i32_1 = arith.constant 0 : i32
    %c0_i32_2 = arith.constant 0 : i32
    %c0_i32_3 = arith.constant 0 : i32
    return %c0_i32, %c0_i32_0, %c0_i32_1, %c0_i32_2 : i32, i32, i32, i32
  }
  func.func @transform_9(%arg0: i32) -> (i32, i32, i32) {
    %c0_i32 = arith.constant 0 : i32
    %c0_i32_0 = arith.constant 0 : i32
    %c0_i32_1 = arith.constant 0 : i32
    %c0_i32_2 = arith.constant 0 : i32
    return %c0_i32, %c0_i32_0, %c0_i32_1 : i32, i32, i32
  }
  func.func @transform_10(%arg0: i32) -> (i32, i32, i32) {
    %c0_i32 = arith.constant 0 : i32
    %c0_i32_0 = arith.constant 0 : i32
    %c0_i32_1 = arith.constant 0 : i32
    %c0_i32_2 = arith.constant 0 : i32
    return %c0_i32, %c0_i32_0, %c0_i32_1 : i32, i32, i32
  }
  func.func @transform_11(%arg0: i32) -> (i32, i32, i32) {
    %c0_i32 = arith.constant 0 : i32
    %c0_i32_0 = arith.constant 0 : i32
    %c0_i32_1 = arith.constant 0 : i32
    %c0_i32_2 = arith.constant 0 : i32
    return %c0_i32, %c0_i32_0, %c0_i32_1 : i32, i32, i32
  }
  func.func @transform_12(%arg0: i32) -> (i32, i32, i32) {
    %c0_i32 = arith.constant 0 : i32
    %c0_i32_0 = arith.constant 0 : i32
    %c0_i32_1 = arith.constant 0 : i32
    %c0_i32_2 = arith.constant 0 : i32
    return %c0_i32, %c0_i32_0, %c0_i32_1 : i32, i32, i32
  }
  func.func @transform_13(%arg0: i32) -> (i32, i32, i32) {
    %c0_i32 = arith.constant 0 : i32
    %c0_i32_0 = arith.constant 0 : i32
    %c0_i32_1 = arith.constant 0 : i32
    %c0_i32_2 = arith.constant 0 : i32
    return %c0_i32, %c0_i32_0, %c0_i32_1 : i32, i32, i32
  }
  func.func @transform_14(%arg0: i32) -> (i32, i32, i32) {
    %c0_i32 = arith.constant 0 : i32
    %c0_i32_0 = arith.constant 0 : i32
    %c0_i32_1 = arith.constant 0 : i32
    %c0_i32_2 = arith.constant 0 : i32
    return %c0_i32, %c0_i32_0, %c0_i32_1 : i32, i32, i32
  }
  func.func @transform_15(%arg0: i32) -> (i32, i32, i32) {
    %c0_i32 = arith.constant 0 : i32
    %c0_i32_0 = arith.constant 0 : i32
    %c0_i32_1 = arith.constant 0 : i32
    %c0_i32_2 = arith.constant 0 : i32
    return %c0_i32, %c0_i32_0, %c0_i32_1 : i32, i32, i32
  }
  func.func @transform_16(%arg0: i32) -> (i32, i32, i32) {
    %c0_i32 = arith.constant 0 : i32
    %c0_i32_0 = arith.constant 0 : i32
    %c0_i32_1 = arith.constant 0 : i32
    %c0_i32_2 = arith.constant 0 : i32
    return %c0_i32, %c0_i32_0, %c0_i32_1 : i32, i32, i32
  }
  func.func @transform_17(%arg0: i32) -> (i32, i32, i32) {
    %c0_i32 = arith.constant 0 : i32
    %c0_i32_0 = arith.constant 0 : i32
    %c0_i32_1 = arith.constant 0 : i32
    %c0_i32_2 = arith.constant 0 : i32
    return %c0_i32, %c0_i32_0, %c0_i32_1 : i32, i32, i32
  }
  func.func @transform_18(%arg0: i32) -> (i32, i32, i32) {
    %c0_i32 = arith.constant 0 : i32
    %c0_i32_0 = arith.constant 0 : i32
    %c0_i32_1 = arith.constant 0 : i32
    %c0_i32_2 = arith.constant 0 : i32
    return %c0_i32, %c0_i32_0, %c0_i32_1 : i32, i32, i32
  }
  func.func @transform_19(%arg0: i32) -> (i32, i32, i32) {
    %c0_i32 = arith.constant 0 : i32
    %c0_i32_0 = arith.constant 0 : i32
    %c0_i32_1 = arith.constant 0 : i32
    return %arg0, %c0_i32, %c0_i32_0 : i32, i32, i32
  }
}

</mosaic_0001>

<llo_original>
// kernel: tct_colbert_forward.1
$region0: #{tct_colbert_forward.1}
  #allocation0 [shape = 'u32[]', space=smem, size = 0x4, offset = 0x4, fixed_abs, tag = 'smem constant byte address 0x4 - core index']
  #allocation1 [shape = 'u32[144,128]{1,0:T(1,128)}', space=vmem, size = 0x12000, scoped, tag = 'internal scratch']
  %s0 = inlined_call_operand.vmem [shape: f32[2,8,32], index: 0, kind: input, shape index: {}]
  %s1 = inlined_call_operand.vmem [shape: f32[2,1,8], index: 1, kind: input, shape index: {}]
  %s2 = inlined_call_operand.vmem [shape: f32[2,8,1], index: 2, kind: input, shape index: {}]
  %s3 = inlined_call_operand.vmem [shape: f32[2,2,32,16], index: 3, kind: input, shape index: {}]
  %s4 = inlined_call_operand.vmem [shape: f32[2,2,1,16], index: 4, kind: input, shape index: {}]
  %s5 = inlined_call_operand.vmem [shape: f32[2,2,32,16], index: 5, kind: input, shape index: {}]
  %s6 = inlined_call_operand.vmem [shape: f32[2,2,1,16], index: 6, kind: input, shape index: {}]
  %s7 = inlined_call_operand.vmem [shape: f32[2,2,32,16], index: 7, kind: input, shape index: {}]
  %s8 = inlined_call_operand.vmem [shape: f32[2,2,1,16], index: 8, kind: input, shape index: {}]
  %s9 = inlined_call_operand.vmem [shape: f32[2,32,32], index: 9, kind: input, shape index: {}]
  %s10 = inlined_call_operand.vmem [shape: f32[2,1,32], index: 10, kind: input, shape index: {}]
  %s11 = inlined_call_operand.vmem [shape: f32[2,1,32], index: 11, kind: input, shape index: {}]
  %s12 = inlined_call_operand.vmem [shape: f32[2,1,32], index: 12, kind: input, shape index: {}]
  %s13 = inlined_call_operand.vmem [shape: f32[2,32,64], index: 13, kind: input, shape index: {}]
  %s14 = inlined_call_operand.vmem [shape: f32[2,1,64], index: 14, kind: input, shape index: {}]
  %s15 = inlined_call_operand.vmem [shape: f32[2,64,32], index: 15, kind: input, shape index: {}]
  %s16 = inlined_call_operand.vmem [shape: f32[2,1,32], index: 16, kind: input, shape index: {}]
  %s17 = inlined_call_operand.vmem [shape: f32[2,1,32], index: 17, kind: input, shape index: {}]
  %s18 = inlined_call_operand.vmem [shape: f32[2,1,32], index: 18, kind: input, shape index: {}]
  %s19 = inlined_call_operand.hbm [shape: f32[2,1,32], index: 19, kind: output, shape index: {}]
  %s20 = sld [smem:[#allocation0]]
  $region109: #{tct_colbert_forward.1} parent=0
    _
  %s22 = ssub.s32 1, %s20
  %s23 = scalar_select 0, %s22, %s20
  $region1: #{tct_colbert_forward.1} parent=0
    #allocation2 [shape = 'u8[1024]{0}', space=vmem, size = 0x400, scoped, tag = 'output window, operand 0']
    #allocation3 [shape = 's32[2]{0}', space=sflag, size = 0x8, scoped, tag = 'scoped memory for tct_colbert_forward.1']
    %24 = vsyncpa [#allocation3], 0
    %s25 = scalar_lea.sflag [#allocation3], 1
    %26 = vsyncpa %s25, 0
    loop: start=0, step=1, limit=4
    $region2: #{tct_colbert_forward.1} parent=1 // loop_pre_header
      _
    $region3: #{tct_colbert_forward.1} parent=1 // loop_header
      %s28 = sphi 0, %s32
      %p29 = scmp.ge.s32.totalorder %s28, 4
      %s38 = sphi 0, %s40
      %s41 = sphi 0, %s38
      %s42 = sphi 0, %s41
      %s58 = sphi 0, %s42
      %s64 = sphi 0, %s66
      %s67 = sphi 0, %s64
      %s68 = sphi 0, %s67
      %s84 = sphi 0, %s68
      %s90 = sphi 0, %s92
      %s93 = sphi 0, %s90
      %s94 = sphi 0, %s93
      %s110 = sphi 0, %s94
      %s114 = sphi 0, %s114
      %s116 = sphi 0, %s114
      %s117 = sphi 0, %s116
      %s131 = sphi 0, %s117
      %s135 = sphi 0, %s135
      %s137 = sphi 0, %s135
      %s138 = sphi 0, %s137
      %s152 = sphi 0, %s138
      %s156 = sphi 0, %s156
      %s158 = sphi 0, %s156
      %s159 = sphi 0, %s158
      %s173 = sphi 0, %s159
      %s177 = sphi 0, %s177
      %s179 = sphi 0, %s177
      %s180 = sphi 0, %s179
      %s194 = sphi 0, %s180
      %s198 = sphi 0, %s198
      %s200 = sphi 0, %s198
      %s201 = sphi 0, %s200
      %s215 = sphi 0, %s201
      %s219 = sphi 0, %s219
      %s221 = sphi 0, %s219
      %s222 = sphi 0, %s221
      %s236 = sphi 0, %s222
      %s240 = sphi 0, %s240
      %s242 = sphi 0, %s240
      %s243 = sphi 0, %s242
      %s257 = sphi 0, %s243
      %s261 = sphi 0, %s261
      %s263 = sphi 0, %s261
      %s264 = sphi 0, %s263
      %s278 = sphi 0, %s264
      %s282 = sphi 0, %s282
      %s284 = sphi 0, %s282
      %s285 = sphi 0, %s284
      %s299 = sphi 0, %s285
      %s303 = sphi 0, %s303
      %s305 = sphi 0, %s303
      %s306 = sphi 0, %s305
      %s320 = sphi 0, %s306
      %s324 = sphi 0, %s324
      %s326 = sphi 0, %s324
      %s327 = sphi 0, %s326
      %s341 = sphi 0, %s327
      %s345 = sphi 0, %s345
      %s347 = sphi 0, %s345
      %s348 = sphi 0, %s347
      %s362 = sphi 0, %s348
      %s366 = sphi 0, %s366
      %s368 = sphi 0, %s366
      %s369 = sphi 0, %s368
      %s383 = sphi 0, %s369
      %s387 = sphi 0, %s387
      %s389 = sphi 0, %s387
      %s390 = sphi 0, %s389
      %s404 = sphi 0, %s390
      %s408 = sphi 0, %s408
      %s410 = sphi 0, %s408
      %s411 = sphi 0, %s410
      %s425 = sphi 0, %s411
      %s429 = sphi 0, %s429
      %s431 = sphi 0, %s429
      %s432 = sphi 0, %s431
      %s446 = sphi 0, %s432
      %s452 = sphi 0, %s454
      %s455 = sphi 0, %s452
      %s456 = sphi 0, %s455
      %s472 = sphi 0, %s456
    $region4: #{tct_colbert_forward.1} parent=1 // loop_header_branch
      %31 = sbr.rel (%p29) target = $region8
    $region5: #{tct_colbert_forward.1} parent=1 // loop_body
      %s33 = ssub.s32 %s28, 1
      %s34 = ssub.s32 %s28, 2
      %s35 = sadd.s32 %s28, 1
      %s36 = ssub.s32 %s28, %s35
      %p37 = scmp.eq.s32.totalorder %s36, 0
      %s39 = sadd.s32 %s38, 1
      %s40 = scalar_select %p37, %s38, %s39
      %p43 = pneg %p37
      %p44 = scmp.eq.s32.totalorder %s28, 1
      %p45 = por %p43, %p44
      %p46 = scmp.ne.s32.totalorder %s38, %s41
      %p47 = scmp.eq.s32.totalorder %s28, 0
      %p48 = por %p46, %p47
      %p49 = scmp.ne.s32.totalorder %s38, %s41
      %p50 = scmp.eq.s32.totalorder %s33, 1
      %p51 = por %p49, %p50
      %p52 = scmp.ne.s32.totalorder %s41, %s42
      %p53 = scmp.eq.s32.totalorder %s33, 0
      %p54 = por %p52, %p53
      %p55 = scmp.ne.s32.totalorder %s41, %s42
      %p56 = scmp.eq.s32.totalorder %s34, 1
      %p57 = por %p55, %p56
      %p59 = scmp.ne.s32.totalorder %s42, %s58
      %p60 = scmp.eq.s32.totalorder %s34, 0
      %p61 = por %p59, %p60
      %s62 = ssub.s32 %s28, %s35
      %p63 = scmp.eq.s32.totalorder %s62, 0
      %s65 = sadd.s32 %s64, 1
      %s66 = scalar_select %p63, %s64, %s65
      %p69 = pneg %p63
      %p70 = scmp.eq.s32.totalorder %s28, 1
      %p71 = por %p69, %p70
      %p72 = scmp.ne.s32.totalorder %s64, %s67
      %p73 = scmp.eq.s32.totalorder %s28, 0
      %p74 = por %p72, %p73
      %p75 = scmp.ne.s32.totalorder %s64, %s67
      %p76 = scmp.eq.s32.totalorder %s33, 1
      %p77 = por %p75, %p76
      %p78 = scmp.ne.s32.totalorder %s67, %s68
      %p79 = scmp.eq.s32.totalorder %s33, 0
      %p80 = por %p78, %p79
      %p81 = scmp.ne.s32.totalorder %s67, %s68
      %p82 = scmp.eq.s32.totalorder %s34, 1
      %p83 = por %p81, %p82
      %p85 = scmp.ne.s32.totalorder %s68, %s84
      %p86 = scmp.eq.s32.totalorder %s34, 0
      %p87 = por %p85, %p86
      %s88 = ssub.s32 %s28, %s35
      %p89 = scmp.eq.s32.totalorder %s88, 0
      %s91 = sadd.s32 %s90, 1
      %s92 = scalar_select %p89, %s90, %s91
      %p95 = pneg %p89
      %p96 = scmp.eq.s32.totalorder %s28, 1
      %p97 = por %p95, %p96
      %p98 = scmp.ne.s32.totalorder %s90, %s93
      %p99 = scmp.eq.s32.totalorder %s28, 0
      %p100 = por %p98, %p99
      %p101 = scmp.ne.s32.totalorder %s90, %s93
      %p102 = scmp.eq.s32.totalorder %s33, 1
      %p103 = por %p101, %p102
      %p104 = scmp.ne.s32.totalorder %s93, %s94
      %p105 = scmp.eq.s32.totalorder %s33, 0
      %p106 = por %p104, %p105
      %p107 = scmp.ne.s32.totalorder %s93, %s94
      %p108 = scmp.eq.s32.totalorder %s34, 1
      %p109 = por %p107, %p108
      %p111 = scmp.ne.s32.totalorder %s94, %s110
      %p112 = scmp.eq.s32.totalorder %s34, 0
      %p113 = por %p111, %p112
      %s115 = sadd.s32 %s114, 1
      %p118 = scmp.eq.s32.totalorder %s28, 1
      %p119 = scmp.ne.s32.totalorder %s114, %s116
      %p120 = scmp.eq.s32.totalorder %s28, 0
      %p121 = por %p119, %p120
      %p122 = scmp.ne.s32.totalorder %s114, %s116
      %p123 = scmp.eq.s32.totalorder %s33, 1
      %p124 = por %p122, %p123
      %p125 = scmp.ne.s32.totalorder %s116, %s117
      %p126 = scmp.eq.s32.totalorder %s33, 0
      %p127 = por %p125, %p126
      %p128 = scmp.ne.s32.totalorder %s116, %s117
      %p129 = scmp.eq.s32.totalorder %s34, 1
      %p130 = por %p128, %p129
      %p132 = scmp.ne.s32.totalorder %s117, %s131
      %p133 = scmp.eq.s32.totalorder %s34, 0
      %p134 = por %p132, %p133
      %s136 = sadd.s32 %s135, 1
      %p139 = scmp.eq.s32.totalorder %s28, 1
      %p140 = scmp.ne.s32.totalorder %s135, %s137
      %p141 = scmp.eq.s32.totalorder %s28, 0
      %p142 = por %p140, %p141
      %p143 = scmp.ne.s32.totalorder %s135, %s137
      %p144 = scmp.eq.s32.totalorder %s33, 1
      %p145 = por %p143, %p144
      %p146 = scmp.ne.s32.totalorder %s137, %s138
      %p147 = scmp.eq.s32.totalorder %s33, 0
      %p148 = por %p146, %p147
      %p149 = scmp.ne.s32.totalorder %s137, %s138
      %p150 = scmp.eq.s32.totalorder %s34, 1
      %p151 = por %p149, %p150
      %p153 = scmp.ne.s32.totalorder %s138, %s152
      %p154 = scmp.eq.s32.totalorder %s34, 0
      %p155 = por %p153, %p154
      %s157 = sadd.s32 %s156, 1
      %p160 = scmp.eq.s32.totalorder %s28, 1
      %p161 = scmp.ne.s32.totalorder %s156, %s158
      %p162 = scmp.eq.s32.totalorder %s28, 0
      %p163 = por %p161, %p162
      %p164 = scmp.ne.s32.totalorder %s156, %s158
      %p165 = scmp.eq.s32.totalorder %s33, 1
      %p166 = por %p164, %p165
      %p167 = scmp.ne.s32.totalorder %s158, %s159
      %p168 = scmp.eq.s32.totalorder %s33, 0
      %p169 = por %p167, %p168
      %p170 = scmp.ne.s32.totalorder %s158, %s159
      %p171 = scmp.eq.s32.totalorder %s34, 1
      %p172 = por %p170, %p171
      %p174 = scmp.ne.s32.totalorder %s159, %s173
      %p175 = scmp.eq.s32.totalorder %s34, 0
      %p176 = por %p174, %p175
      %s178 = sadd.s32 %s177, 1
      %p181 = scmp.eq.s32.totalorder %s28, 1
      %p182 = scmp.ne.s32.totalorder %s177, %s179
      %p183 = scmp.eq.s32.totalorder %s28, 0
      %p184 = por %p182, %p183
      %p185 = scmp.ne.s32.totalorder %s177, %s179
      %p186 = scmp.eq.s32.totalorder %s33, 1
      %p187 = por %p185, %p186
      %p188 = scmp.ne.s32.totalorder %s179, %s180
      %p189 = scmp.eq.s32.totalorder %s33, 0
      %p190 = por %p188, %p189
      %p191 = scmp.ne.s32.totalorder %s179, %s180
      %p192 = scmp.eq.s32.totalorder %s34, 1
      %p193 = por %p191, %p192
      %p195 = scmp.ne.s32.totalorder %s180, %s194
      %p196 = scmp.eq.s32.totalorder %s34, 0
      %p197 = por %p195, %p196
      %s199 = sadd.s32 %s198, 1
      %p202 = scmp.eq.s32.totalorder %s28, 1
      %p203 = scmp.ne.s32.totalorder %s198, %s200
      %p204 = scmp.eq.s32.totalorder %s28, 0
      %p205 = por %p203, %p204
      %p206 = scmp.ne.s32.totalorder %s198, %s200
      %p207 = scmp.eq.s32.totalorder %s33, 1
      %p208 = por %p206, %p207
      %p209 = scmp.ne.s32.totalorder %s200, %s201
      %p210 = scmp.eq.s32.totalorder %s33, 0
      %p211 = por %p209, %p210
      %p212 = scmp.ne.s32.totalorder %s200, %s201
      %p213 = scmp.eq.s32.totalorder %s34, 1
      %p214 = por %p212, %p213
      %p216 = scmp.ne.s32.totalorder %s201, %s215
      %p217 = scmp.eq.s32.totalorder %s34, 0
      %p218 = por %p216, %p217
      %s220 = sadd.s32 %s219, 1
      %p223 = scmp.eq.s32.totalorder %s28, 1
      %p224 = scmp.ne.s32.totalorder %s219, %s221
      %p225 = scmp.eq.s32.totalorder %s28, 0
      %p226 = por %p224, %p225
      %p227 = scmp.ne.s32.totalorder %s219, %s221
      %p228 = scmp.eq.s32.totalorder %s33, 1
      %p229 = por %p227, %p228
      %p230 = scmp.ne.s32.totalorder %s221, %s222
      %p231 = scmp.eq.s32.totalorder %s33, 0
      %p232 = por %p230, %p231
      %p233 = scmp.ne.s32.totalorder %s221, %s222
      %p234 = scmp.eq.s32.totalorder %s34, 1
      %p235 = por %p233, %p234
      %p237 = scmp.ne.s32.totalorder %s222, %s236
      %p238 = scmp.eq.s32.totalorder %s34, 0
      %p239 = por %p237, %p238
      %s241 = sadd.s32 %s240, 1
      %p244 = scmp.eq.s32.totalorder %s28, 1
      %p245 = scmp.ne.s32.totalorder %s240, %s242
      %p246 = scmp.eq.s32.totalorder %s28, 0
      %p247 = por %p245, %p246
      %p248 = scmp.ne.s32.totalorder %s240, %s242
      %p249 = scmp.eq.s32.totalorder %s33, 1
      %p250 = por %p248, %p249
      %p251 = scmp.ne.s32.totalorder %s242, %s243
      %p252 = scmp.eq.s32.totalorder %s33, 0
      %p253 = por %p251, %p252
      %p254 = scmp.ne.s32.totalorder %s242, %s243
      %p255 = scmp.eq.s32.totalorder %s34, 1
      %p256 = por %p254, %p255
      %p258 = scmp.ne.s32.totalorder %s243, %s257
      %p259 = scmp.eq.s32.totalorder %s34, 0
      %p260 = por %p258, %p259
      %s262 = sadd.s32 %s261, 1
      %p265 = scmp.eq.s32.totalorder %s28, 1
      %p266 = scmp.ne.s32.totalorder %s261, %s263
      %p267 = scmp.eq.s32.totalorder %s28, 0
      %p268 = por %p266, %p267
      %p269 = scmp.ne.s32.totalorder %s261, %s263
      %p270 = scmp.eq.s32.totalorder %s33, 1
      %p271 = por %p269, %p270
      %p272 = scmp.ne.s32.totalorder %s263, %s264
      %p273 = scmp.eq.s32.totalorder %s33, 0
      %p274 = por %p272, %p273
      %p275 = scmp.ne.s32.totalorder %s263, %s264
      %p276 = scmp.eq.s32.totalorder %s34, 1
      %p277 = por %p275, %p276
      %p279 = scmp.ne.s32.totalorder %s264, %s278
      %p280 = scmp.eq.s32.totalorder %s34, 0
      %p281 = por %p279, %p280
      %s283 = sadd.s32 %s282, 1
      %p286 = scmp.eq.s32.totalorder %s28, 1
      %p287 = scmp.ne.s32.totalorder %s282, %s284
      %p288 = scmp.eq.s32.totalorder %s28, 0
      %p289 = por %p287, %p288
      %p290 = scmp.ne.s32.totalorder %s282, %s284
      %p291 = scmp.eq.s32.totalorder %s33, 1
      %p292 = por %p290, %p291
      %p293 = scmp.ne.s32.totalorder %s284, %s285
      %p294 = scmp.eq.s32.totalorder %s33, 0
      %p295 = por %p293, %p294
      %p296 = scmp.ne.s32.totalorder %s284, %s285
      %p297 = scmp.eq.s32.totalorder %s34, 1
      %p298 = por %p296, %p297
      %p300 = scmp.ne.s32.totalorder %s285, %s299
      %p301 = scmp.eq.s32.totalorder %s34, 0
      %p302 = por %p300, %p301
      %s304 = sadd.s32 %s303, 1
      %p307 = scmp.eq.s32.totalorder %s28, 1
      %p308 = scmp.ne.s32.totalorder %s303, %s305
      %p309 = scmp.eq.s32.totalorder %s28, 0
      %p310 = por %p308, %p309
      %p311 = scmp.ne.s32.totalorder %s303, %s305
      %p312 = scmp.eq.s32.totalorder %s33, 1
      %p313 = por %p311, %p312
      %p314 = scmp.ne.s32.totalorder %s305, %s306
      %p315 = scmp.eq.s32.totalorder %s33, 0
      %p316 = por %p314, %p315
      %p317 = scmp.ne.s32.totalorder %s305, %s306
      %p318 = scmp.eq.s32.totalorder %s34, 1
      %p319 = por %p317, %p318
      %p321 = scmp.ne.s32.totalorder %s306, %s320
      %p322 = scmp.eq.s32.totalorder %s34, 0
      %p323 = por %p321, %p322
      %s325 = sadd.s32 %s324, 1
      %p328 = scmp.eq.s32.totalorder %s28, 1
      %p329 = scmp.ne.s32.totalorder %s324, %s326
      %p330 = scmp.eq.s32.totalorder %s28, 0
      %p331 = por %p329, %p330
      %p332 = scmp.ne.s32.totalorder %s324, %s326
      %p333 = scmp.eq.s32.totalorder %s33, 1
      %p334 = por %p332, %p333
      %p335 = scmp.ne.s32.totalorder %s326, %s327
      %p336 = scmp.eq.s32.totalorder %s33, 0
      %p337 = por %p335, %p336
      %p338 = scmp.ne.s32.totalorder %s326, %s327
      %p339 = scmp.eq.s32.totalorder %s34, 1
      %p340 = por %p338, %p339
      %p342 = scmp.ne.s32.totalorder %s327, %s341
      %p343 = scmp.eq.s32.totalorder %s34, 0
      %p344 = por %p342, %p343
      %s346 = sadd.s32 %s345, 1
      %p349 = scmp.eq.s32.totalorder %s28, 1
      %p350 = scmp.ne.s32.totalorder %s345, %s347
      %p351 = scmp.eq.s32.totalorder %s28, 0
      %p352 = por %p350, %p351
      %p353 = scmp.ne.s32.totalorder %s345, %s347
      %p354 = scmp.eq.s32.totalorder %s33, 1
      %p355 = por %p353, %p354
      %p356 = scmp.ne.s32.totalorder %s347, %s348
      %p357 = scmp.eq.s32.totalorder %s33, 0
      %p358 = por %p356, %p357
      %p359 = scmp.ne.s32.totalorder %s347, %s348
      %p360 = scmp.eq.s32.totalorder %s34, 1
      %p361 = por %p359, %p360
      %p363 = scmp.ne.s32.totalorder %s348, %s362
      %p364 = scmp.eq.s32.totalorder %s34, 0
      %p365 = por %p363, %p364
      %s367 = sadd.s32 %s366, 1
      %p370 = scmp.eq.s32.totalorder %s28, 1
      %p371 = scmp.ne.s32.totalorder %s366, %s368
      %p372 = scmp.eq.s32.totalorder %s28, 0
      %p373 = por %p371, %p372
      %p374 = scmp.ne.s32.totalorder %s366, %s368
      %p375 = scmp.eq.s32.totalorder %s33, 1
      %p376 = por %p374, %p375
      %p377 = scmp.ne.s32.totalorder %s368, %s369
      %p378 = scmp.eq.s32.totalorder %s33, 0
      %p379 = por %p377, %p378
      %p380 = scmp.ne.s32.totalorder %s368, %s369
      %p381 = scmp.eq.s32.totalorder %s34, 1
      %p382 = por %p380, %p381
      %p384 = scmp.ne.s32.totalorder %s369, %s383
      %p385 = scmp.eq.s32.totalorder %s34, 0
      %p386 = por %p384, %p385
      %s388 = sadd.s32 %s387, 1
      %p391 = scmp.eq.s32.totalorder %s28, 1
      %p392 = scmp.ne.s32.totalorder %s387, %s389
      %p393 = scmp.eq.s32.totalorder %s28, 0
      %p394 = por %p392, %p393
      %p395 = scmp.ne.s32.totalorder %s387, %s389
      %p396 = scmp.eq.s32.totalorder %s33, 1
      %p397 = por %p395, %p396
      %p398 = scmp.ne.s32.totalorder %s389, %s390
      %p399 = scmp.eq.s32.totalorder %s33, 0
      %p400 = por %p398, %p399
      %p401 = scmp.ne.s32.totalorder %s389, %s390
      %p402 = scmp.eq.s32.totalorder %s34, 1
      %p403 = por %p401, %p402
      %p405 = scmp.ne.s32.totalorder %s390, %s404
      %p406 = scmp.eq.s32.totalorder %s34, 0
      %p407 = por %p405, %p406
      %s409 = sadd.s32 %s408, 1
      %p412 = scmp.eq.s32.totalorder %s28, 1
      %p413 = scmp.ne.s32.totalorder %s408, %s410
      %p414 = scmp.eq.s32.totalorder %s28, 0
      %p415 = por %p413, %p414
      %p416 = scmp.ne.s32.totalorder %s408, %s410
      %p417 = scmp.eq.s32.totalorder %s33, 1
      %p418 = por %p416, %p417
      %p419 = scmp.ne.s32.totalorder %s410, %s411
      %p420 = scmp.eq.s32.totalorder %s33, 0
      %p421 = por %p419, %p420
      %p422 = scmp.ne.s32.totalorder %s410, %s411
      %p423 = scmp.eq.s32.totalorder %s34, 1
      %p424 = por %p422, %p423
      %p426 = scmp.ne.s32.totalorder %s411, %s425
      %p427 = scmp.eq.s32.totalorder %s34, 0
      %p428 = por %p426, %p427
      %s430 = sadd.s32 %s429, 1
      %p433 = scmp.eq.s32.totalorder %s28, 1
      %p434 = scmp.ne.s32.totalorder %s429, %s431
      %p435 = scmp.eq.s32.totalorder %s28, 0
      %p436 = por %p434, %p435
      %p437 = scmp.ne.s32.totalorder %s429, %s431
      %p438 = scmp.eq.s32.totalorder %s33, 1
      %p439 = por %p437, %p438
      %p440 = scmp.ne.s32.totalorder %s431, %s432
      %p441 = scmp.eq.s32.totalorder %s33, 0
      %p442 = por %p440, %p441
      %p443 = scmp.ne.s32.totalorder %s431, %s432
      %p444 = scmp.eq.s32.totalorder %s34, 1
      %p445 = por %p443, %p444
      %p447 = scmp.ne.s32.totalorder %s432, %s446
      %p448 = scmp.eq.s32.totalorder %s34, 0
      %p449 = por %p447, %p448
      %s450 = ssub.s32 %s28, %s35
      %p451 = scmp.eq.s32.totalorder %s450, 0
      %s453 = sadd.s32 %s452, 1
      %s454 = scalar_select %p451, %s452, %s453
      %p457 = pneg %p451
      %p458 = scmp.eq.s32.totalorder %s28, 1
      %p459 = por %p457, %p458
      %p460 = scmp.ne.s32.totalorder %s452, %s455
      %p461 = scmp.eq.s32.totalorder %s28, 0
      %p462 = por %p460, %p461
      %p463 = scmp.ne.s32.totalorder %s452, %s455
      %p464 = scmp.eq.s32.totalorder %s33, 1
      %p465 = por %p463, %p464
      %p466 = scmp.ne.s32.totalorder %s455, %s456
      %p467 = scmp.eq.s32.totalorder %s33, 0
      %p468 = por %p466, %p467
      %p469 = scmp.ne.s32.totalorder %s455, %s456
      %p470 = scmp.eq.s32.totalorder %s34, 1
      %p471 = por %p469, %p470
      %p473 = scmp.ne.s32.totalorder %s456, %s472
      %p474 = scmp.eq.s32.totalorder %s34, 0
      %p475 = por %p473, %p474
      %p476 = scmp.le.s32.totalorder 1, %s28
      %p477 = scmp.lt.s32.totalorder %s28, 3
      %p478 = pnand %p476, %p477
      %p479 = pneg %p478
      // Predicated region
      $region9: #{tct_colbert_forward.1} parent=5 // pred_check
        _
      $region10: #{tct_colbert_forward.1} parent=5 // pred_check_branch
        %481 = sbr.rel (%p478) target = $region12
      $region11: #{tct_colbert_forward.1} parent=5 // pred_region
        %s482 = ssub.s32 %s28, 1
        // Predicated region
        $region13: #{tct_colbert_forward.1} parent=11 // pred_check
          %p483 = pneg %p127
        $region14: #{tct_colbert_forward.1} parent=11 // pred_check_branch
          %485 = sbr.rel (%p483) target = $region16
        $region15: #{tct_colbert_forward.1} parent=11 // pred_region
          _
        $region16: #{tct_colbert_forward.1} parent=11 // pred_fallthru
          _
        // Predicated region
        $region17: #{tct_colbert_forward.1} parent=11 // pred_check
          %p486 = pneg %p148
        $region18: #{tct_colbert_forward.1} parent=11 // pred_check_branch
          %488 = sbr.rel (%p486) target = $region20
        $region19: #{tct_colbert_forward.1} parent=11 // pred_region
          _
        $region20: #{tct_colbert_forward.1} parent=11 // pred_fallthru
          _
        // Predicated region
        $region21: #{tct_colbert_forward.1} parent=11 // pred_check
          %p489 = pneg %p169
        $region22: #{tct_colbert_forward.1} parent=11 // pred_check_branch
          %491 = sbr.rel (%p489) target = $region24
        $region23: #{tct_colbert_forward.1} parent=11 // pred_region
          _
        $region24: #{tct_colbert_forward.1} parent=11 // pred_fallthru
          _
        // Predicated region
        $region25: #{tct_colbert_forward.1} parent=11 // pred_check
          %p492 = pneg %p190
        $region26: #{tct_colbert_forward.1} parent=11 // pred_check_branch
          %494 = sbr.rel (%p492) target = $region28
        $region27: #{tct_colbert_forward.1} parent=11 // pred_region
          _
        $region28: #{tct_colbert_forward.1} parent=11 // pred_fallthru
          _
        // Predicated region
        $region29: #{tct_colbert_forward.1} parent=11 // pred_check
          %p495 = pneg %p211
        $region30: #{tct_colbert_forward.1} parent=11 // pred_check_branch
          %497 = sbr.rel (%p495) target = $region32
        $region31: #{tct_colbert_forward.1} parent=11 // pred_region
          _
        $region32: #{tct_colbert_forward.1} parent=11 // pred_fallthru
          _
        // Predicated region
        $region33: #{tct_colbert_forward.1} parent=11 // pred_check
          %p498 = pneg %p232
        $region34: #{tct_colbert_forward.1} parent=11 // pred_check_branch
          %500 = sbr.rel (%p498) target = $region36
        $region35: #{tct_colbert_forward.1} parent=11 // pred_region
          _
        $region36: #{tct_colbert_forward.1} parent=11 // pred_fallthru
          _
        // Predicated region
        $region37: #{tct_colbert_forward.1} parent=11 // pred_check
          %p501 = pneg %p253
        $region38: #{tct_colbert_forward.1} parent=11 // pred_check_branch
          %503 = sbr.rel (%p501) target = $region40
        $region39: #{tct_colbert_forward.1} parent=11 // pred_region
          _
        $region40: #{tct_colbert_forward.1} parent=11 // pred_fallthru
          _
        // Predicated region
        $region41: #{tct_colbert_forward.1} parent=11 // pred_check
          %p504 = pneg %p274
        $region42: #{tct_colbert_forward.1} parent=11 // pred_check_branch
          %506 = sbr.rel (%p504) target = $region44
        $region43: #{tct_colbert_forward.1} parent=11 // pred_region
          _
        $region44: #{tct_colbert_forward.1} parent=11 // pred_fallthru
          _
        // Predicated region
        $region45: #{tct_colbert_forward.1} parent=11 // pred_check
          %p507 = pneg %p295
        $region46: #{tct_colbert_forward.1} parent=11 // pred_check_branch
          %509 = sbr.rel (%p507) target = $region48
        $region47: #{tct_colbert_forward.1} parent=11 // pred_region
          _
        $region48: #{tct_colbert_forward.1} parent=11 // pred_fallthru
          _
        // Predicated region
        $region49: #{tct_colbert_forward.1} parent=11 // pred_check
          %p510 = pneg %p316
        $region50: #{tct_colbert_forward.1} parent=11 // pred_check_branch
          %512 = sbr.rel (%p510) target = $region52
        $region51: #{tct_colbert_forward.1} parent=11 // pred_region
          _
        $region52: #{tct_colbert_forward.1} parent=11 // pred_fallthru
          _
        // Predicated region
        $region53: #{tct_colbert_forward.1} parent=11 // pred_check
          %p513 = pneg %p337
        $region54: #{tct_colbert_forward.1} parent=11 // pred_check_branch
          %515 = sbr.rel (%p513) target = $region56
        $region55: #{tct_colbert_forward.1} parent=11 // pred_region
          _
        $region56: #{tct_colbert_forward.1} parent=11 // pred_fallthru
          _
        // Predicated region
        $region57: #{tct_colbert_forward.1} parent=11 // pred_check
          %p516 = pneg %p358
        $region58: #{tct_colbert_forward.1} parent=11 // pred_check_branch
          %518 = sbr.rel (%p516) target = $region60
        $region59: #{tct_colbert_forward.1} parent=11 // pred_region
          _
        $region60: #{tct_colbert_forward.1} parent=11 // pred_fallthru
          _
        // Predicated region
        $region61: #{tct_colbert_forward.1} parent=11 // pred_check
          %p519 = pneg %p379
        $region62: #{tct_colbert_forward.1} parent=11 // pred_check_branch
          %521 = sbr.rel (%p519) target = $region64
        $region63: #{tct_colbert_forward.1} parent=11 // pred_region
          _
        $region64: #{tct_colbert_forward.1} parent=11 // pred_fallthru
          _
        // Predicated region
        $region65: #{tct_colbert_forward.1} parent=11 // pred_check
          %p522 = pneg %p400
        $region66: #{tct_colbert_forward.1} parent=11 // pred_check_branch
          %524 = sbr.rel (%p522) target = $region68
        $region67: #{tct_colbert_forward.1} parent=11 // pred_region
          _
        $region68: #{tct_colbert_forward.1} parent=11 // pred_fallthru
          _
        // Predicated region
        $region69: #{tct_colbert_forward.1} parent=11 // pred_check
          %p525 = pneg %p421
        $region70: #{tct_colbert_forward.1} parent=11 // pred_check_branch
          %527 = sbr.rel (%p525) target = $region72
        $region71: #{tct_colbert_forward.1} parent=11 // pred_region
          _
        $region72: #{tct_colbert_forward.1} parent=11 // pred_fallthru
          _
        // Predicated region
        $region73: #{tct_colbert_forward.1} parent=11 // pred_check
          %p528 = pneg %p442
        $region74: #{tct_colbert_forward.1} parent=11 // pred_check_branch
          %530 = sbr.rel (%p528) target = $region76
        $region75: #{tct_colbert_forward.1} parent=11 // pred_region
          _
        $region76: #{tct_colbert_forward.1} parent=11 // pred_fallthru
          _
      $region12: #{tct_colbert_forward.1} parent=5 // pred_fallthru
        _
      %p531 = scmp.lt.s32.totalorder %s28, 2
      // Predicated region
      $region77: #{tct_colbert_forward.1} parent=5 // pred_check
        %p532 = pneg %p531
      $region78: #{tct_colbert_forward.1} parent=5 // pred_check_branch
        %534 = sbr.rel (%p532) target = $region80
      $region79: #{tct_colbert_forward.1} parent=5 // pred_region
        // Predicated region
        $region81: #{tct_colbert_forward.1} parent=79 // pred_check
          %p535 = pneg %p48
        $region82: #{tct_colbert_forward.1} parent=79 // pred_check_branch
          %537 = sbr.rel (%p535) target = $region84
        $region83: #{tct_colbert_forward.1} parent=79 // pred_region
          %p538 = scmp.lt.s32.totalorder %s28, 1
          %s539 = scalar_select %p538, %s28, 1
          %s540 = smul.addr %s539, 8
          %s541 = scalar_lea.vmem %s0, %s540
        $region84: #{tct_colbert_forward.1} parent=79 // pred_fallthru
          _
        // Predicated region
        $region85: #{tct_colbert_forward.1} parent=79 // pred_check
          %p542 = pneg %p74
        $region86: #{tct_colbert_forward.1} parent=79 // pred_check_branch
          %544 = sbr.rel (%p542) target = $region88
        $region87: #{tct_colbert_forward.1} parent=79 // pred_region
          %p545 = scmp.lt.s32.totalorder %s28, 1
          %s546 = scalar_select %p545, %s28, 1
          %s547 = scalar_lea.vmem %s1, %s546
        $region88: #{tct_colbert_forward.1} parent=79 // pred_fallthru
          _
        // Predicated region
        $region89: #{tct_colbert_forward.1} parent=79 // pred_check
          %p548 = pneg %p100
        $region90: #{tct_colbert_forward.1} parent=79 // pred_check_branch
          %550 = sbr.rel (%p548) target = $region92
        $region91: #{tct_colbert_forward.1} parent=79 // pred_region
          %p551 = scmp.lt.s32.totalorder %s28, 1
          %s552 = scalar_select %p551, %s28, 1
          %s553 = smul.addr %s552, 8
          %s554 = scalar_lea.vmem %s2, %s553
        $region92: #{tct_colbert_forward.1} parent=79 // pred_fallthru
          _
      $region80: #{tct_colbert_forward.1} parent=5 // pred_fallthru
        _
      %p555 = scmp.le.s32.totalorder 1, %s28
      %p556 = scmp.lt.s32.totalorder %s28, 3
      %p557 = pnand %p555, %p556
      %p558 = pneg %p557
      // Predicated region
      $region93: #{tct_colbert_forward.1} parent=5 // pred_check
        _
      $region94: #{tct_colbert_forward.1} parent=5 // pred_check_branch
        %560 = sbr.rel (%p557) target = $region96
      $region95: #{tct_colbert_forward.1} parent=5 // pred_region
        %s561 = ssub.s32 %s28, 1
        %p562 = scmp.lt.s32.totalorder %s33, 1
        %s563 = scalar_select %p562, %s33, 1
        %s564 = smul.addr %s563, 8
        %s565 = scalar_lea.vmem %s0, %s564
        %p566 = pneg %p54
        %p567 = pneg %p51
        %p568 = scmp.lt.s32.totalorder %s33, 1
        %s569 = scalar_select %p568, %s33, 1
        %s570 = scalar_lea.vmem %s1, %s569
        %p571 = pneg %p80
        %p572 = pneg %p77
        %p573 = scmp.lt.s32.totalorder %s33, 1
        %s574 = scalar_select %p573, %s33, 1
        %s575 = smul.addr %s574, 8
        %s576 = scalar_lea.vmem %s2, %s575
        %p577 = pneg %p106
        %p578 = pneg %p103
        %p579 = pneg %p127
        %p580 = pneg %p124
        %p581 = pneg %p148
        %p582 = pneg %p145
        %p583 = pneg %p169
        %p584 = pneg %p166
        %p585 = pneg %p190
        %p586 = pneg %p187
        %p587 = pneg %p211
        %p588 = pneg %p208
        %p589 = pneg %p232
        %p590 = pneg %p229
        %p591 = pneg %p253
        %p592 = pneg %p250
        %p593 = pneg %p274
        %p594 = pneg %p271
        %p595 = pneg %p295
        %p596 = pneg %p292
        %p597 = pneg %p316
        %p598 = pneg %p313
        %p599 = pneg %p337
        %p600 = pneg %p334
        %p601 = pneg %p358
        %p602 = pneg %p355
        %p603 = pneg %p379
        %p604 = pneg %p376
        %p605 = pneg %p400
        %p606 = pneg %p397
        %p607 = pneg %p421
        %p608 = pneg %p418
        %p609 = pneg %p442
        %p610 = pneg %p439
        %p611 = pneg %p468
        %p612 = pneg %p465
        %s613 = sand.u32 %s455, 1
        %s614 = scalar_lea.sflag [#allocation3], %s613
        %s615 = sand.u32 %s455, 1
        %s616 = scalar_lea.vmem [#allocation2], %s615
        %p617 = scmp.lt.s32.totalorder %s33, 1
        %s618 = scalar_select %p617, %s33, 1
        %s619 = smul.addr %s618, 8
        %s620 = scalar_lea.vmem %s0, %s619
        %p621 = scmp.lt.s32.totalorder %s33, 1
        %s622 = scalar_select %p621, %s33, 1
        %s623 = scalar_lea.vmem %s1, %s622
        %p624 = scmp.lt.s32.totalorder %s33, 1
        %s625 = scalar_select %p624, %s33, 1
        %s626 = smul.addr %s625, 8
        %s627 = scalar_lea.vmem %s2, %s626
        %v628 = vld [vmem:[%s620] sm:$0xff]
        %v629 = vld [vmem:[%s623] sm:$0x1]
        %v630 = vsub.f32 1.0, %v629
        %v631 = vmul.f32 %v630, -1e+09
        %v633 = vlaneseq
        %v634 = vshrl.u32 %v633, 7
        %v635 = vsub.s32 0, %v634
        %v636 = vrot.slane %v631, %v635
        %v638 = vld [vmem:[%s3] sm:$0xff]
        %v639 = vld [vmem:[%s3 + $0x8] sm:$0xff]
        %v640 = vld [vmem:[%s3 + $0x10] sm:$0xff]
        %v641 = vld [vmem:[%s3 + $0x18] sm:$0xff]
        %v642 = vld [vmem:[%s3 + $0x20] sm:$0xff]
        %v643 = vld [vmem:[%s3 + $0x28] sm:$0xff]
        %v644 = vld [vmem:[%s3 + $0x30] sm:$0xff]
        %v645 = vld [vmem:[%s3 + $0x38] sm:$0xff]
        %v646 = vld [vmem:[%s4] sm:$0x1]
        %v647 = vld [vmem:[%s4 + $0x1] sm:$0x1]
        %v650 = vlaneseq
        %v651 = vshrl.u32 %v650, 7
        %v652 = vsub.s32 0, %v651
        %v653 = vrot.slane %v646, %v652
        %v654 = vlaneseq
        %v655 = vshrl.u32 %v654, 7
        %v656 = vsub.s32 0, %v655
        %v657 = vrot.slane %v647, %v656
        %vm660 = vcmask 261120
        %v662 = vsel %vm660, %v628, 0
        %664 = vmatprep.subr.mxu0 0.0
        %665 = vmatpush1.msra.mxu0 %v638
        %666 = vmatprep.subr.mxu0 0.0
        %667 = vmatpush1.msra.mxu0 %v639
        %668 = vmatprep.subr.mxu0 0.0
        %669 = vmatpush1.msra.mxu0 %v640
        %670 = vmatprep.subr.mxu0 0.0
        %671 = vmatpush1.msra.mxu0 %v641
        %672 = vmatprep.subr.mxu0 0.0
        %673 = vmatpush1.msra.mxu0 0.0
        %674 = vmatprep.subr.mxu0 0.0
        %675 = vmatpush1.msra.mxu0 0.0
        %676 = vmatprep.subr.mxu0 0.0
        %677 = vmatpush1.msra.mxu0 0.0
        %678 = vmatprep.subr.mxu0 0.0
        %679 = vmatpush1.msra.mxu0 0.0
        %680 = vmatprep.subr.mxu0 0.0
        %681 = vmatpush1.msra.mxu0 0.0
        %682 = vmatprep.subr.mxu0 0.0
        %683 = vmatpush1.msra.mxu0 0.0
        %684 = vmatprep.subr.mxu0 0.0
        %685 = vmatpush1.msra.mxu0 0.0
        %686 = vmatprep.subr.mxu0 0.0
        %687 = vmatpush1.msra.mxu0 0.0
        %688 = vmatprep.subr.mxu0 0.0
        %689 = vmatpush1.msra.mxu0 0.0
        %690 = vmatprep.subr.mxu0 0.0
        %691 = vmatpush1.msra.mxu0 0.0
        %692 = vmatprep.subr.mxu0 0.0
        %693 = vmatpush1.msra.mxu0 0.0
        %694 = vmatprep.subr.mxu0 0.0
        %695 = vmatpush1.msra.mxu0 0.0
        %696 = vmatprep.subr.mxu0 0.0
        %697 = vmatpush1.msra.mxu0 0.0
        %698 = vmatprep.subr.mxu0 0.0
        %699 = vmatpush1.msra.mxu0 0.0
        %700 = vmatprep.subr.mxu0 0.0
        %701 = vmatpush1.msra.mxu0 0.0
        %702 = vmatprep.subr.mxu0 0.0
        %703 = vmatpush1.msra.mxu0 0.0
        %704 = vmatprep.subr.mxu0 0.0
        %705 = vmatpush1.msra.mxu0 0.0
        %706 = vmatprep.subr.mxu0 0.0
        %707 = vmatpush1.msra.mxu0 0.0
        %708 = vmatprep.subr.mxu0 0.0
        %709 = vmatpush1.msra.mxu0 0.0
        %710 = vmatprep.subr.mxu0 0.0
        %711 = vmatpush1.msra.mxu0 0.0
        %712 = vmatprep.subr.mxu0 0.0
        %713 = vmatpush1.msra.mxu0 0.0
        %714 = vmatprep.subr.mxu0 0.0
        %715 = vmatpush1.msra.mxu0 0.0
        %716 = vmatprep.subr.mxu0 0.0
        %717 = vmatpush1.msra.mxu0 0.0
        %718 = vmatprep.subr.mxu0 0.0
        %719 = vmatpush1.msra.mxu0 0.0
        %720 = vmatprep.subr.mxu0 0.0
        %721 = vmatpush1.msra.mxu0 0.0
        %722 = vmatprep.subr.mxu0 0.0
        %723 = vmatpush1.msra.mxu0 0.0
        %724 = vmatprep.subr.mxu0 0.0
        %725 = vmatpush1.msra.mxu0 0.0
        %726 = vmatprep.subr.mxu0 0.0
        %727 = vmatpush1.msra.mxu0 0.0
        %728 = vmatprep.mubr.f32.mxu0 0.0
        %729 = vmatmul.mubr.f32.gmra.mrb[0].mxu0 %v662
        %v730 = vpop.f32.mrb[0].mxu0
        %v731 = vadd.f32 %v653, %v730
        %v732 = vpop.f32.mrb[0].mxu0
        %733 = vdwg.mxu0
        %734 = vmatprep.subr.mxu0 0.0
        %735 = vmatpush1.msra.mxu0 %v642
        %736 = vmatprep.subr.mxu0 0.0
        %737 = vmatpush1.msra.mxu0 %v643
        %738 = vmatprep.subr.mxu0 0.0
        %739 = vmatpush1.msra.mxu0 %v644
        %740 = vmatprep.subr.mxu0 0.0
        %741 = vmatpush1.msra.mxu0 %v645
        %742 = vmatprep.subr.mxu0 0.0
        %743 = vmatpush1.msra.mxu0 0.0
        %744 = vmatprep.subr.mxu0 0.0
        %745 = vmatpush1.msra.mxu0 0.0
        %746 = vmatprep.subr.mxu0 0.0
        %747 = vmatpush1.msra.mxu0 0.0
        %748 = vmatprep.subr.mxu0 0.0
        %749 = vmatpush1.msra.mxu0 0.0
        %750 = vmatprep.subr.mxu0 0.0
        %751 = vmatpush1.msra.mxu0 0.0
        %752 = vmatprep.subr.mxu0 0.0
        %753 = vmatpush1.msra.mxu0 0.0
        %754 = vmatprep.subr.mxu0 0.0
        %755 = vmatpush1.msra.mxu0 0.0
        %756 = vmatprep.subr.mxu0 0.0
        %757 = vmatpush1.msra.mxu0 0.0
        %758 = vmatprep.subr.mxu0 0.0
        %759 = vmatpush1.msra.mxu0 0.0
        %760 = vmatprep.subr.mxu0 0.0
        %761 = vmatpush1.msra.mxu0 0.0
        %762 = vmatprep.subr.mxu0 0.0
        %763 = vmatpush1.msra.mxu0 0.0
        %764 = vmatprep.subr.mxu0 0.0
        %765 = vmatpush1.msra.mxu0 0.0
        %766 = vmatprep.subr.mxu0 0.0
        %767 = vmatpush1.msra.mxu0 0.0
        %768 = vmatprep.subr.mxu0 0.0
        %769 = vmatpush1.msra.mxu0 0.0
        %770 = vmatprep.subr.mxu0 0.0
        %771 = vmatpush1.msra.mxu0 0.0
        %772 = vmatprep.subr.mxu0 0.0
        %773 = vmatpush1.msra.mxu0 0.0
        %774 = vmatprep.subr.mxu0 0.0
        %775 = vmatpush1.msra.mxu0 0.0
        %776 = vmatprep.subr.mxu0 0.0
        %777 = vmatpush1.msra.mxu0 0.0
        %778 = vmatprep.subr.mxu0 0.0
        %779 = vmatpush1.msra.mxu0 0.0
        %780 = vmatprep.subr.mxu0 0.0
        %781 = vmatpush1.msra.mxu0 0.0
        %782 = vmatprep.subr.mxu0 0.0
        %783 = vmatpush1.msra.mxu0 0.0
        %784 = vmatprep.subr.mxu0 0.0
        %785 = vmatpush1.msra.mxu0 0.0
        %786 = vmatprep.subr.mxu0 0.0
        %787 = vmatpush1.msra.mxu0 0.0
        %788 = vmatprep.subr.mxu0 0.0
        %789 = vmatpush1.msra.mxu0 0.0
        %790 = vmatprep.subr.mxu0 0.0
        %791 = vmatpush1.msra.mxu0 0.0
        %792 = vmatprep.subr.mxu0 0.0
        %793 = vmatpush1.msra.mxu0 0.0
        %794 = vmatprep.subr.mxu0 0.0
        %795 = vmatpush1.msra.mxu0 0.0
        %796 = vmatprep.subr.mxu0 0.0
        %797 = vmatpush1.msra.mxu0 0.0
        %798 = vmatprep.mubr.f32.mxu0 0.0
        %799 = vmatmul.mubr.f32.gmra.mrb[0].mxu0 %v662
        %v800 = vpop.f32.mrb[0].mxu0
        %v801 = vadd.f32 %v657, %v800
        %v802 = vpop.f32.mrb[0].mxu0
        %803 = vdwg.mxu0
        %v804 = vld [vmem:[%s5] sm:$0xff]
        %v805 = vld [vmem:[%s5 + $0x8] sm:$0xff]
        %v806 = vld [vmem:[%s5 + $0x10] sm:$0xff]
        %v807 = vld [vmem:[%s5 + $0x18] sm:$0xff]
        %v808 = vld [vmem:[%s5 + $0x20] sm:$0xff]
        %v809 = vld [vmem:[%s5 + $0x28] sm:$0xff]
        %v810 = vld [vmem:[%s5 + $0x30] sm:$0xff]
        %v811 = vld [vmem:[%s5 + $0x38] sm:$0xff]
        %v812 = vld [vmem:[%s6] sm:$0x1]
        %v813 = vld [vmem:[%s6 + $0x1] sm:$0x1]
        %v816 = vlaneseq
        %v817 = vshrl.u32 %v816, 7
        %v818 = vsub.s32 0, %v817
        %v819 = vrot.slane %v812, %v818
        %v820 = vlaneseq
        %v821 = vshrl.u32 %v820, 7
        %v822 = vsub.s32 0, %v821
        %v823 = vrot.slane %v813, %v822
        %826 = vmatprep.subr.mxu0 0.0
        %827 = vmatpush1.msra.mxu0 %v804
        %828 = vmatprep.subr.mxu0 0.0
        %829 = vmatpush1.msra.mxu0 %v805
        %830 = vmatprep.subr.mxu0 0.0
        %831 = vmatpush1.msra.mxu0 %v806
        %832 = vmatprep.subr.mxu0 0.0
        %833 = vmatpush1.msra.mxu0 %v807
        %834 = vmatprep.subr.mxu0 0.0
        %835 = vmatpush1.msra.mxu0 0.0
        %836 = vmatprep.subr.mxu0 0.0
        %837 = vmatpush1.msra.mxu0 0.0
        %838 = vmatprep.subr.mxu0 0.0
        %839 = vmatpush1.msra.mxu0 0.0
        %840 = vmatprep.subr.mxu0 0.0
        %841 = vmatpush1.msra.mxu0 0.0
        %842 = vmatprep.subr.mxu0 0.0
        %843 = vmatpush1.msra.mxu0 0.0
        %844 = vmatprep.subr.mxu0 0.0
        %845 = vmatpush1.msra.mxu0 0.0
        %846 = vmatprep.subr.mxu0 0.0
        %847 = vmatpush1.msra.mxu0 0.0
        %848 = vmatprep.subr.mxu0 0.0
        %849 = vmatpush1.msra.mxu0 0.0
        %850 = vmatprep.subr.mxu0 0.0
        %851 = vmatpush1.msra.mxu0 0.0
        %852 = vmatprep.subr.mxu0 0.0
        %853 = vmatpush1.msra.mxu0 0.0
        %854 = vmatprep.subr.mxu0 0.0
        %855 = vmatpush1.msra.mxu0 0.0
        %856 = vmatprep.subr.mxu0 0.0
        %857 = vmatpush1.msra.mxu0 0.0
        %858 = vmatprep.subr.mxu0 0.0
        %859 = vmatpush1.msra.mxu0 0.0
        %860 = vmatprep.subr.mxu0 0.0
        %861 = vmatpush1.msra.mxu0 0.0
        %862 = vmatprep.subr.mxu0 0.0
        %863 = vmatpush1.msra.mxu0 0.0
        %864 = vmatprep.subr.mxu0 0.0
        %865 = vmatpush1.msra.mxu0 0.0
        %866 = vmatprep.subr.mxu0 0.0
        %867 = vmatpush1.msra.mxu0 0.0
        %868 = vmatprep.subr.mxu0 0.0
        %869 = vmatpush1.msra.mxu0 0.0
        %870 = vmatprep.subr.mxu0 0.0
        %871 = vmatpush1.msra.mxu0 0.0
        %872 = vmatprep.subr.mxu0 0.0
        %873 = vmatpush1.msra.mxu0 0.0
        %874 = vmatprep.subr.mxu0 0.0
        %875 = vmatpush1.msra.mxu0 0.0
        %876 = vmatprep.subr.mxu0 0.0
        %877 = vmatpush1.msra.mxu0 0.0
        %878 = vmatprep.subr.mxu0 0.0
        %879 = vmatpush1.msra.mxu0 0.0
        %880 = vmatprep.subr.mxu0 0.0
        %881 = vmatpush1.msra.mxu0 0.0
        %882 = vmatprep.subr.mxu0 0.0
        %883 = vmatpush1.msra.mxu0 0.0
        %884 = vmatprep.subr.mxu0 0.0
        %885 = vmatpush1.msra.mxu0 0.0
        %886 = vmatprep.subr.mxu0 0.0
        %887 = vmatpush1.msra.mxu0 0.0
        %888 = vmatprep.subr.mxu0 0.0
        %889 = vmatpush1.msra.mxu0 0.0
        %890 = vmatprep.mubr.f32.mxu0 0.0
        %891 = vmatmul.mubr.f32.gmra.mrb[0].mxu0 %v662
        %v892 = vpop.f32.mrb[0].mxu0
        %v893 = vadd.f32 %v819, %v892
        %v894 = vpop.f32.mrb[0].mxu0
        %895 = vdwg.mxu0
        %896 = vmatprep.subr.mxu0 0.0
        %897 = vmatpush1.msra.mxu0 %v808
        %898 = vmatprep.subr.mxu0 0.0
        %899 = vmatpush1.msra.mxu0 %v809
        %900 = vmatprep.subr.mxu0 0.0
        %901 = vmatpush1.msra.mxu0 %v810
        %902 = vmatprep.subr.mxu0 0.0
        %903 = vmatpush1.msra.mxu0 %v811
        %904 = vmatprep.subr.mxu0 0.0
        %905 = vmatpush1.msra.mxu0 0.0
        %906 = vmatprep.subr.mxu0 0.0
        %907 = vmatpush1.msra.mxu0 0.0
        %908 = vmatprep.subr.mxu0 0.0
        %909 = vmatpush1.msra.mxu0 0.0
        %910 = vmatprep.subr.mxu0 0.0
        %911 = vmatpush1.msra.mxu0 0.0
        %912 = vmatprep.subr.mxu0 0.0
        %913 = vmatpush1.msra.mxu0 0.0
        %914 = vmatprep.subr.mxu0 0.0
        %915 = vmatpush1.msra.mxu0 0.0
        %916 = vmatprep.subr.mxu0 0.0
        %917 = vmatpush1.msra.mxu0 0.0
        %918 = vmatprep.subr.mxu0 0.0
        %919 = vmatpush1.msra.mxu0 0.0
        %920 = vmatprep.subr.mxu0 0.0
        %921 = vmatpush1.msra.mxu0 0.0
        %922 = vmatprep.subr.mxu0 0.0
        %923 = vmatpush1.msra.mxu0 0.0
        %924 = vmatprep.subr.mxu0 0.0
        %925 = vmatpush1.msra.mxu0 0.0
        %926 = vmatprep.subr.mxu0 0.0
        %927 = vmatpush1.msra.mxu0 0.0
        %928 = vmatprep.subr.mxu0 0.0
        %929 = vmatpush1.msra.mxu0 0.0
        %930 = vmatprep.subr.mxu0 0.0
        %931 = vmatpush1.msra.mxu0 0.0
        %932 = vmatprep.subr.mxu0 0.0
        %933 = vmatpush1.msra.mxu0 0.0
        %934 = vmatprep.subr.mxu0 0.0
        %935 = vmatpush1.msra.mxu0 0.0
        %936 = vmatprep.subr.mxu0 0.0
        %937 = vmatpush1.msra.mxu0 0.0
        %938 = vmatprep.subr.mxu0 0.0
        %939 = vmatpush1.msra.mxu0 0.0
        %940 = vmatprep.subr.mxu0 0.0
        %941 = vmatpush1.msra.mxu0 0.0
        %942 = vmatprep.subr.mxu0 0.0
        %943 = vmatpush1.msra.mxu0 0.0
        %944 = vmatprep.subr.mxu0 0.0
        %945 = vmatpush1.msra.mxu0 0.0
        %946 = vmatprep.subr.mxu0 0.0
        %947 = vmatpush1.msra.mxu0 0.0
        %948 = vmatprep.subr.mxu0 0.0
        %949 = vmatpush1.msra.mxu0 0.0
        %950 = vmatprep.subr.mxu0 0.0
        %951 = vmatpush1.msra.mxu0 0.0
        %952 = vmatprep.subr.mxu0 0.0
        %953 = vmatpush1.msra.mxu0 0.0
        %954 = vmatprep.subr.mxu0 0.0
        %955 = vmatpush1.msra.mxu0 0.0
        %956 = vmatprep.subr.mxu0 0.0
        %957 = vmatpush1.msra.mxu0 0.0
        %958 = vmatprep.subr.mxu0 0.0
        %959 = vmatpush1.msra.mxu0 0.0
        %960 = vmatprep.mubr.f32.mxu0 0.0
        %961 = vmatmul.mubr.f32.gmra.mrb[0].mxu0 %v662
        %v962 = vpop.f32.mrb[0].mxu0
        %v963 = vadd.f32 %v823, %v962
        %v964 = vpop.f32.mrb[0].mxu0
        %965 = vdwg.mxu0
        %v966 = vld [vmem:[%s7] sm:$0xff]
        %v967 = vld [vmem:[%s7 + $0x8] sm:$0xff]
        %v968 = vld [vmem:[%s7 + $0x10] sm:$0xff]
        %v969 = vld [vmem:[%s7 + $0x18] sm:$0xff]
        %v970 = vld [vmem:[%s7 + $0x20] sm:$0xff]
        %v971 = vld [vmem:[%s7 + $0x28] sm:$0xff]
        %v972 = vld [vmem:[%s7 + $0x30] sm:$0xff]
        %v973 = vld [vmem:[%s7 + $0x38] sm:$0xff]
        %v974 = vld [vmem:[%s8] sm:$0x1]
        %v975 = vld [vmem:[%s8 + $0x1] sm:$0x1]
        %v978 = vlaneseq
        %v979 = vshrl.u32 %v978, 7
        %v980 = vsub.s32 0, %v979
        %v981 = vrot.slane %v974, %v980
        %v982 = vlaneseq
        %v983 = vshrl.u32 %v982, 7
        %v984 = vsub.s32 0, %v983
        %v985 = vrot.slane %v975, %v984
        %988 = vmatprep.subr.mxu0 0.0
        %989 = vmatpush1.msra.mxu0 %v966
        %990 = vmatprep.subr.mxu0 0.0
        %991 = vmatpush1.msra.mxu0 %v967
        %992 = vmatprep.subr.mxu0 0.0
        %993 = vmatpush1.msra.mxu0 %v968
        %994 = vmatprep.subr.mxu0 0.0
        %995 = vmatpush1.msra.mxu0 %v969
        %996 = vmatprep.subr.mxu0 0.0
        %997 = vmatpush1.msra.mxu0 0.0
        %998 = vmatprep.subr.mxu0 0.0
        %999 = vmatpush1.msra.mxu0 0.0
        %1000 = vmatprep.subr.mxu0 0.0
        %1001 = vmatpush1.msra.mxu0 0.0
        %1002 = vmatprep.subr.mxu0 0.0
        %1003 = vmatpush1.msra.mxu0 0.0
        %1004 = vmatprep.subr.mxu0 0.0
        %1005 = vmatpush1.msra.mxu0 0.0
        %1006 = vmatprep.subr.mxu0 0.0
        %1007 = vmatpush1.msra.mxu0 0.0
        %1008 = vmatprep.subr.mxu0 0.0
        %1009 = vmatpush1.msra.mxu0 0.0
        %1010 = vmatprep.subr.mxu0 0.0
        %1011 = vmatpush1.msra.mxu0 0.0
        %1012 = vmatprep.subr.mxu0 0.0
        %1013 = vmatpush1.msra.mxu0 0.0
        %1014 = vmatprep.subr.mxu0 0.0
        %1015 = vmatpush1.msra.mxu0 0.0
        %1016 = vmatprep.subr.mxu0 0.0
        %1017 = vmatpush1.msra.mxu0 0.0
        %1018 = vmatprep.subr.mxu0 0.0
        %1019 = vmatpush1.msra.mxu0 0.0
        %1020 = vmatprep.subr.mxu0 0.0
        %1021 = vmatpush1.msra.mxu0 0.0
        %1022 = vmatprep.subr.mxu0 0.0
        %1023 = vmatpush1.msra.mxu0 0.0
        %1024 = vmatprep.subr.mxu0 0.0
        %1025 = vmatpush1.msra.mxu0 0.0
        %1026 = vmatprep.subr.mxu0 0.0
        %1027 = vmatpush1.msra.mxu0 0.0
        %1028 = vmatprep.subr.mxu0 0.0
        %1029 = vmatpush1.msra.mxu0 0.0
        %1030 = vmatprep.subr.mxu0 0.0
        %1031 = vmatpush1.msra.mxu0 0.0
        %1032 = vmatprep.subr.mxu0 0.0
        %1033 = vmatpush1.msra.mxu0 0.0
        %1034 = vmatprep.subr.mxu0 0.0
        %1035 = vmatpush1.msra.mxu0 0.0
        %1036 = vmatprep.subr.mxu0 0.0
        %1037 = vmatpush1.msra.mxu0 0.0
        %1038 = vmatprep.subr.mxu0 0.0
        %1039 = vmatpush1.msra.mxu0 0.0
        %1040 = vmatprep.subr.mxu0 0.0
        %1041 = vmatpush1.msra.mxu0 0.0
        %1042 = vmatprep.subr.mxu0 0.0
        %1043 = vmatpush1.msra.mxu0 0.0
        %1044 = vmatprep.subr.mxu0 0.0
        %1045 = vmatpush1.msra.mxu0 0.0
        %1046 = vmatprep.subr.mxu0 0.0
        %1047 = vmatpush1.msra.mxu0 0.0
        %1048 = vmatprep.subr.mxu0 0.0
        %1049 = vmatpush1.msra.mxu0 0.0
        %1050 = vmatprep.subr.mxu0 0.0
        %1051 = vmatpush1.msra.mxu0 0.0
        %1052 = vmatprep.mubr.f32.mxu0 0.0
        %1053 = vmatmul.mubr.f32.gmra.mrb[0].mxu0 %v662
        %v1054 = vpop.f32.mrb[0].mxu0
        %v1055 = vadd.f32 %v981, %v1054
        %v1056 = vpop.f32.mrb[0].mxu0
        %1057 = vdwg.mxu0
        %1058 = vmatprep.subr.mxu0 0.0
        %1059 = vmatpush1.msra.mxu0 %v970
        %1060 = vmatprep.subr.mxu0 0.0
        %1061 = vmatpush1.msra.mxu0 %v971
        %1062 = vmatprep.subr.mxu0 0.0
        %1063 = vmatpush1.msra.mxu0 %v972
        %1064 = vmatprep.subr.mxu0 0.0
        %1065 = vmatpush1.msra.mxu0 %v973
        %1066 = vmatprep.subr.mxu0 0.0
        %1067 = vmatpush1.msra.mxu0 0.0
        %1068 = vmatprep.subr.mxu0 0.0
        %1069 = vmatpush1.msra.mxu0 0.0
        %1070 = vmatprep.subr.mxu0 0.0
        %1071 = vmatpush1.msra.mxu0 0.0
        %1072 = vmatprep.subr.mxu0 0.0
        %1073 = vmatpush1.msra.mxu0 0.0
        %1074 = vmatprep.subr.mxu0 0.0
        %1075 = vmatpush1.msra.mxu0 0.0
        %1076 = vmatprep.subr.mxu0 0.0
        %1077 = vmatpush1.msra.mxu0 0.0
        %1078 = vmatprep.subr.mxu0 0.0
        %1079 = vmatpush1.msra.mxu0 0.0
        %1080 = vmatprep.subr.mxu0 0.0
        %1081 = vmatpush1.msra.mxu0 0.0
        %1082 = vmatprep.subr.mxu0 0.0
        %1083 = vmatpush1.msra.mxu0 0.0
        %1084 = vmatprep.subr.mxu0 0.0
        %1085 = vmatpush1.msra.mxu0 0.0
        %1086 = vmatprep.subr.mxu0 0.0
        %1087 = vmatpush1.msra.mxu0 0.0
        %1088 = vmatprep.subr.mxu0 0.0
        %1089 = vmatpush1.msra.mxu0 0.0
        %1090 = vmatprep.subr.mxu0 0.0
        %1091 = vmatpush1.msra.mxu0 0.0
        %1092 = vmatprep.subr.mxu0 0.0
        %1093 = vmatpush1.msra.mxu0 0.0
        %1094 = vmatprep.subr.mxu0 0.0
        %1095 = vmatpush1.msra.mxu0 0.0
        %1096 = vmatprep.subr.mxu0 0.0
        %1097 = vmatpush1.msra.mxu0 0.0
        %1098 = vmatprep.subr.mxu0 0.0
        %1099 = vmatpush1.msra.mxu0 0.0
        %1100 = vmatprep.subr.mxu0 0.0
        %1101 = vmatpush1.msra.mxu0 0.0
        %1102 = vmatprep.subr.mxu0 0.0
        %1103 = vmatpush1.msra.mxu0 0.0
        %1104 = vmatprep.subr.mxu0 0.0
        %1105 = vmatpush1.msra.mxu0 0.0
        %1106 = vmatprep.subr.mxu0 0.0
        %1107 = vmatpush1.msra.mxu0 0.0
        %1108 = vmatprep.subr.mxu0 0.0
        %1109 = vmatpush1.msra.mxu0 0.0
        %1110 = vmatprep.subr.mxu0 0.0
        %1111 = vmatpush1.msra.mxu0 0.0
        %1112 = vmatprep.subr.mxu0 0.0
        %1113 = vmatpush1.msra.mxu0 0.0
        %1114 = vmatprep.subr.mxu0 0.0
        %1115 = vmatpush1.msra.mxu0 0.0
        %1116 = vmatprep.subr.mxu0 0.0
        %1117 = vmatpush1.msra.mxu0 0.0
        %1118 = vmatprep.subr.mxu0 0.0
        %1119 = vmatpush1.msra.mxu0 0.0
        %1120 = vmatprep.subr.mxu0 0.0
        %1121 = vmatpush1.msra.mxu0 0.0
        %1122 = vmatprep.mubr.f32.mxu0 0.0
        %1123 = vmatmul.mubr.f32.gmra.mrb[0].mxu0 %v662
        %v1124 = vpop.f32.mrb[0].mxu0
        %v1125 = vadd.f32 %v985, %v1124
        %v1126 = vpop.f32.mrb[0].mxu0
        %1127 = vdwg.mxu0
        %vm1128 = vcmask 130048
        %v1130 = vsel %vm1128, %v731, 0
        %v1133 = vsel %vm1128, %v893, 0
        %1135 = vmatprep.subr.mxu0 0.0
        %1136 = vmatpush1.xpose.msra.mxu0 %v1133
        %1137 = vmatprep.subr.mxu0 0.0
        %1138 = vmatpush1.xpose.msra.mxu0 0.0
        %1139 = vmatprep.subr.mxu0 0.0
        %1140 = vmatpush1.xpose.msra.mxu0 0.0
        %1141 = vmatprep.subr.mxu0 0.0
        %1142 = vmatpush1.xpose.msra.mxu0 0.0
        %1143 = vmatprep.subr.mxu0 0.0
        %1144 = vmatpush1.xpose.msra.mxu0 0.0
        %1145 = vmatprep.subr.mxu0 0.0
        %1146 = vmatpush1.xpose.msra.mxu0 0.0
        %1147 = vmatprep.subr.mxu0 0.0
        %1148 = vmatpush1.xpose.msra.mxu0 0.0
        %1149 = vmatprep.subr.mxu0 0.0
        %1150 = vmatpush1.xpose.msra.mxu0 0.0
        %1151 = vmatprep.subr.mxu0 0.0
        %1152 = vmatpush1.xpose.msra.mxu0 0.0
        %1153 = vmatprep.subr.mxu0 0.0
        %1154 = vmatpush1.xpose.msra.mxu0 0.0
        %1155 = vmatprep.subr.mxu0 0.0
        %1156 = vmatpush1.xpose.msra.mxu0 0.0
        %1157 = vmatprep.subr.mxu0 0.0
        %1158 = vmatpush1.xpose.msra.mxu0 0.0
        %1159 = vmatprep.subr.mxu0 0.0
        %1160 = vmatpush1.xpose.msra.mxu0 0.0
        %1161 = vmatprep.subr.mxu0 0.0
        %1162 = vmatpush1.xpose.msra.mxu0 0.0
        %1163 = vmatprep.subr.mxu0 0.0
        %1164 = vmatpush1.xpose.msra.mxu0 0.0
        %1165 = vmatprep.subr.mxu0 0.0
        %1166 = vmatpush1.xpose.msra.mxu0 0.0
        %1167 = vmatprep.subr.mxu0 0.0
        %1168 = vmatpush1.xpose.msra.mxu0 0.0
        %1169 = vmatprep.subr.mxu0 0.0
        %1170 = vmatpush1.xpose.msra.mxu0 0.0
        %1171 = vmatprep.subr.mxu0 0.0
        %1172 = vmatpush1.xpose.msra.mxu0 0.0
        %1173 = vmatprep.subr.mxu0 0.0
        %1174 = vmatpush1.xpose.msra.mxu0 0.0
        %1175 = vmatprep.subr.mxu0 0.0
        %1176 = vmatpush1.xpose.msra.mxu0 0.0
        %1177 = vmatprep.subr.mxu0 0.0
        %1178 = vmatpush1.xpose.msra.mxu0 0.0
        %1179 = vmatprep.subr.mxu0 0.0
        %1180 = vmatpush1.xpose.msra.mxu0 0.0
        %1181 = vmatprep.subr.mxu0 0.0
        %1182 = vmatpush1.xpose.msra.mxu0 0.0
        %1183 = vmatprep.subr.mxu0 0.0
        %1184 = vmatpush1.xpose.msra.mxu0 0.0
        %1185 = vmatprep.subr.mxu0 0.0
        %1186 = vmatpush1.xpose.msra.mxu0 0.0
        %1187 = vmatprep.subr.mxu0 0.0
        %1188 = vmatpush1.xpose.msra.mxu0 0.0
        %1189 = vmatprep.subr.mxu0 0.0
        %1190 = vmatpush1.xpose.msra.mxu0 0.0
        %1191 = vmatprep.subr.mxu0 0.0
        %1192 = vmatpush1.xpose.msra.mxu0 0.0
        %1193 = vmatprep.subr.mxu0 0.0
        %1194 = vmatpush1.xpose.msra.mxu0 0.0
        %1195 = vmatprep.subr.mxu0 0.0
        %1196 = vmatpush1.xpose.msra.mxu0 0.0
        %1197 = vmatprep.subr.mxu0 0.0
        %1198 = vmatpush1.xpose.msra.mxu0 0.0
        %1199 = vmatprep.mubr.f32.mxu0 0.0
        %1200 = vmatmul.mubr.f32.gmra.mrb[0].mxu0 %v1130
        %v1201 = vpop.f32.mrb[0].mxu0
        %v1202 = vadd.f32 0.0, %v1201
        %v1203 = vpop.f32.mrb[0].mxu0
        %1204 = vdwg.mxu0
        %v1206 = vsel %vm1128, %v801, 0
        %v1209 = vsel %vm1128, %v963, 0
        %1211 = vmatprep.subr.mxu0 0.0
        %1212 = vmatpush1.xpose.msra.mxu0 %v1209
        %1213 = vmatprep.subr.mxu0 0.0
        %1214 = vmatpush1.xpose.msra.mxu0 0.0
        %1215 = vmatprep.subr.mxu0 0.0
        %1216 = vmatpush1.xpose.msra.mxu0 0.0
        %1217 = vmatprep.subr.mxu0 0.0
        %1218 = vmatpush1.xpose.msra.mxu0 0.0
        %1219 = vmatprep.subr.mxu0 0.0
        %1220 = vmatpush1.xpose.msra.mxu0 0.0
        %1221 = vmatprep.subr.mxu0 0.0
        %1222 = vmatpush1.xpose.msra.mxu0 0.0
        %1223 = vmatprep.subr.mxu0 0.0
        %1224 = vmatpush1.xpose.msra.mxu0 0.0
        %1225 = vmatprep.subr.mxu0 0.0
        %1226 = vmatpush1.xpose.msra.mxu0 0.0
        %1227 = vmatprep.subr.mxu0 0.0
        %1228 = vmatpush1.xpose.msra.mxu0 0.0
        %1229 = vmatprep.subr.mxu0 0.0
        %1230 = vmatpush1.xpose.msra.mxu0 0.0
        %1231 = vmatprep.subr.mxu0 0.0
        %1232 = vmatpush1.xpose.msra.mxu0 0.0
        %1233 = vmatprep.subr.mxu0 0.0
        %1234 = vmatpush1.xpose.msra.mxu0 0.0
        %1235 = vmatprep.subr.mxu0 0.0
        %1236 = vmatpush1.xpose.msra.mxu0 0.0
        %1237 = vmatprep.subr.mxu0 0.0
        %1238 = vmatpush1.xpose.msra.mxu0 0.0
        %1239 = vmatprep.subr.mxu0 0.0
        %1240 = vmatpush1.xpose.msra.mxu0 0.0
        %1241 = vmatprep.subr.mxu0 0.0
        %1242 = vmatpush1.xpose.msra.mxu0 0.0
        %1243 = vmatprep.subr.mxu0 0.0
        %1244 = vmatpush1.xpose.msra.mxu0 0.0
        %1245 = vmatprep.subr.mxu0 0.0
        %1246 = vmatpush1.xpose.msra.mxu0 0.0
        %1247 = vmatprep.subr.mxu0 0.0
        %1248 = vmatpush1.xpose.msra.mxu0 0.0
        %1249 = vmatprep.subr.mxu0 0.0
        %1250 = vmatpush1.xpose.msra.mxu0 0.0
        %1251 = vmatprep.subr.mxu0 0.0
        %1252 = vmatpush1.xpose.msra.mxu0 0.0
        %1253 = vmatprep.subr.mxu0 0.0
        %1254 = vmatpush1.xpose.msra.mxu0 0.0
        %1255 = vmatprep.subr.mxu0 0.0
        %1256 = vmatpush1.xpose.msra.mxu0 0.0
        %1257 = vmatprep.subr.mxu0 0.0
        %1258 = vmatpush1.xpose.msra.mxu0 0.0
        %1259 = vmatprep.subr.mxu0 0.0
        %1260 = vmatpush1.xpose.msra.mxu0 0.0
        %1261 = vmatprep.subr.mxu0 0.0
        %1262 = vmatpush1.xpose.msra.mxu0 0.0
        %1263 = vmatprep.subr.mxu0 0.0
        %1264 = vmatpush1.xpose.msra.mxu0 0.0
        %1265 = vmatprep.subr.mxu0 0.0
        %1266 = vmatpush1.xpose.msra.mxu0 0.0
        %1267 = vmatprep.subr.mxu0 0.0
        %1268 = vmatpush1.xpose.msra.mxu0 0.0
        %1269 = vmatprep.subr.mxu0 0.0
        %1270 = vmatpush1.xpose.msra.mxu0 0.0
        %1271 = vmatprep.subr.mxu0 0.0
        %1272 = vmatpush1.xpose.msra.mxu0 0.0
        %1273 = vmatprep.subr.mxu0 0.0
        %1274 = vmatpush1.xpose.msra.mxu0 0.0
        %1275 = vmatprep.mubr.f32.mxu0 0.0
        %1276 = vmatmul.mubr.f32.gmra.mrb[0].mxu0 %v1206
        %v1277 = vpop.f32.mrb[0].mxu0
        %v1278 = vadd.f32 0.0, %v1277
        %v1279 = vpop.f32.mrb[0].mxu0
        %1280 = vdwg.mxu0
        %v1281 = vmul.f32 %v1202, 0.25
        %v1282 = vmul.f32 %v1278, 0.25
        %v1283 = vadd.f32 %v1281, %v636
        %v1284 = vadd.f32 %v1282, %v636
        %vm1285 = vcmask 64512
        %v1286 = vsel %vm1285, %v1283, -inf
        %1287 = vmax.xlane.f32.xlu0 %v1286
        %v1288 = vpop.xlane.xlu0 %1287
        %v1289 = vsel %vm1285, %v1284, -inf
        %1290 = vmax.xlane.f32.xlu0 %v1289
        %v1291 = vpop.xlane.xlu0 %1290
        %v1292 = vsub.f32 %v1283, %v1288
        %v1293 = vsub.f32 %v1284, %v1291
        %v1294 = vmul.f32 %v1292, 1.442695
        %v1295 = vpow.pop %v1294
        %v1296 = vmul.f32 %v1293, 1.442695
        %v1297 = vpow.pop %v1296
        %v1298 = vsel %vm1285, %v1295, 0.0
        %1299 = vadd.xlane.f32.xlu0 %v1298
        %v1300 = vpop.xlane.xlu0 %1299
        %v1301 = vsel %vm1285, %v1297, 0.0
        %1302 = vadd.xlane.f32.xlu0 %v1301
        %v1303 = vpop.xlane.xlu0 %1302
        %v1304 = vrcp.pop %v1300
        %v1305 = vrcp.pop %v1303
        %v1306 = vmul.f32 %v1295, %v1304
        %v1307 = vmul.f32 %v1297, %v1305
        %v1309 = vsel %vm1285, %v1306, 0
        %1311 = vmatprep.subr.mxu0 0.0
        %1312 = vmatpush1.msra.mxu0 %v1055
        %1313 = vmatprep.subr.mxu0 0.0
        %1314 = vmatpush1.msra.mxu0 0.0
        %1315 = vmatprep.subr.mxu0 0.0
        %1316 = vmatpush1.msra.mxu0 0.0
        %1317 = vmatprep.subr.mxu0 0.0
        %1318 = vmatpush1.msra.mxu0 0.0
        %1319 = vmatprep.subr.mxu0 0.0
        %1320 = vmatpush1.msra.mxu0 0.0
        %1321 = vmatprep.subr.mxu0 0.0
        %1322 = vmatpush1.msra.mxu0 0.0
        %1323 = vmatprep.subr.mxu0 0.0
        %1324 = vmatpush1.msra.mxu0 0.0
        %1325 = vmatprep.subr.mxu0 0.0
        %1326 = vmatpush1.msra.mxu0 0.0
        %1327 = vmatprep.subr.mxu0 0.0
        %1328 = vmatpush1.msra.mxu0 0.0
        %1329 = vmatprep.subr.mxu0 0.0
        %1330 = vmatpush1.msra.mxu0 0.0
        %1331 = vmatprep.subr.mxu0 0.0
        %1332 = vmatpush1.msra.mxu0 0.0
        %1333 = vmatprep.subr.mxu0 0.0
        %1334 = vmatpush1.msra.mxu0 0.0
        %1335 = vmatprep.subr.mxu0 0.0
        %1336 = vmatpush1.msra.mxu0 0.0
        %1337 = vmatprep.subr.mxu0 0.0
        %1338 = vmatpush1.msra.mxu0 0.0
        %1339 = vmatprep.subr.mxu0 0.0
        %1340 = vmatpush1.msra.mxu0 0.0
        %1341 = vmatprep.subr.mxu0 0.0
        %1342 = vmatpush1.msra.mxu0 0.0
        %1343 = vmatprep.subr.mxu0 0.0
        %1344 = vmatpush1.msra.mxu0 0.0
        %1345 = vmatprep.subr.mxu0 0.0
        %1346 = vmatpush1.msra.mxu0 0.0
        %1347 = vmatprep.subr.mxu0 0.0
        %1348 = vmatpush1.msra.mxu0 0.0
        %1349 = vmatprep.subr.mxu0 0.0
        %1350 = vmatpush1.msra.mxu0 0.0
        %1351 = vmatprep.subr.mxu0 0.0
        %1352 = vmatpush1.msra.mxu0 0.0
        %1353 = vmatprep.subr.mxu0 0.0
        %1354 = vmatpush1.msra.mxu0 0.0
        %1355 = vmatprep.subr.mxu0 0.0
        %1356 = vmatpush1.msra.mxu0 0.0
        %1357 = vmatprep.subr.mxu0 0.0
        %1358 = vmatpush1.msra.mxu0 0.0
        %1359 = vmatprep.subr.mxu0 0.0
        %1360 = vmatpush1.msra.mxu0 0.0
        %1361 = vmatprep.subr.mxu0 0.0
        %1362 = vmatpush1.msra.mxu0 0.0
        %1363 = vmatprep.subr.mxu0 0.0
        %1364 = vmatpush1.msra.mxu0 0.0
        %1365 = vmatprep.subr.mxu0 0.0
        %1366 = vmatpush1.msra.mxu0 0.0
        %1367 = vmatprep.subr.mxu0 0.0
        %1368 = vmatpush1.msra.mxu0 0.0
        %1369 = vmatprep.subr.mxu0 0.0
        %1370 = vmatpush1.msra.mxu0 0.0
        %1371 = vmatprep.subr.mxu0 0.0
        %1372 = vmatpush1.msra.mxu0 0.0
        %1373 = vmatprep.subr.mxu0 0.0
        %1374 = vmatpush1.msra.mxu0 0.0
        %1375 = vmatprep.mubr.f32.mxu0 0.0
        %1376 = vmatmul.mubr.f32.gmra.mrb[0].mxu0 %v1309
        %v1377 = vpop.f32.mrb[0].mxu0
        %v1378 = vadd.f32 0.0, %v1377
        %v1379 = vpop.f32.mrb[0].mxu0
        %1380 = vdwg.mxu0
        %v1382 = vsel %vm1285, %v1307, 0
        %1384 = vmatprep.subr.mxu0 0.0
        %1385 = vmatpush1.msra.mxu0 %v1125
        %1386 = vmatprep.subr.mxu0 0.0
        %1387 = vmatpush1.msra.mxu0 0.0
        %1388 = vmatprep.subr.mxu0 0.0
        %1389 = vmatpush1.msra.mxu0 0.0
        %1390 = vmatprep.subr.mxu0 0.0
        %1391 = vmatpush1.msra.mxu0 0.0
        %1392 = vmatprep.subr.mxu0 0.0
        %1393 = vmatpush1.msra.mxu0 0.0
        %1394 = vmatprep.subr.mxu0 0.0
        %1395 = vmatpush1.msra.mxu0 0.0
        %1396 = vmatprep.subr.mxu0 0.0
        %1397 = vmatpush1.msra.mxu0 0.0
        %1398 = vmatprep.subr.mxu0 0.0
        %1399 = vmatpush1.msra.mxu0 0.0
        %1400 = vmatprep.subr.mxu0 0.0
        %1401 = vmatpush1.msra.mxu0 0.0
        %1402 = vmatprep.subr.mxu0 0.0
        %1403 = vmatpush1.msra.mxu0 0.0
        %1404 = vmatprep.subr.mxu0 0.0
        %1405 = vmatpush1.msra.mxu0 0.0
        %1406 = vmatprep.subr.mxu0 0.0
        %1407 = vmatpush1.msra.mxu0 0.0
        %1408 = vmatprep.subr.mxu0 0.0
        %1409 = vmatpush1.msra.mxu0 0.0
        %1410 = vmatprep.subr.mxu0 0.0
        %1411 = vmatpush1.msra.mxu0 0.0
        %1412 = vmatprep.subr.mxu0 0.0
        %1413 = vmatpush1.msra.mxu0 0.0
        %1414 = vmatprep.subr.mxu0 0.0
        %1415 = vmatpush1.msra.mxu0 0.0
        %1416 = vmatprep.subr.mxu0 0.0
        %1417 = vmatpush1.msra.mxu0 0.0
        %1418 = vmatprep.subr.mxu0 0.0
        %1419 = vmatpush1.msra.mxu0 0.0
        %1420 = vmatprep.subr.mxu0 0.0
        %1421 = vmatpush1.msra.mxu0 0.0
        %1422 = vmatprep.subr.mxu0 0.0
        %1423 = vmatpush1.msra.mxu0 0.0
        %1424 = vmatprep.subr.mxu0 0.0
        %1425 = vmatpush1.msra.mxu0 0.0
        %1426 = vmatprep.subr.mxu0 0.0
        %1427 = vmatpush1.msra.mxu0 0.0
        %1428 = vmatprep.subr.mxu0 0.0
        %1429 = vmatpush1.msra.mxu0 0.0
        %1430 = vmatprep.subr.mxu0 0.0
        %1431 = vmatpush1.msra.mxu0 0.0
        %1432 = vmatprep.subr.mxu0 0.0
        %1433 = vmatpush1.msra.mxu0 0.0
        %1434 = vmatprep.subr.mxu0 0.0
        %1435 = vmatpush1.msra.mxu0 0.0
        %1436 = vmatprep.subr.mxu0 0.0
        %1437 = vmatpush1.msra.mxu0 0.0
        %1438 = vmatprep.subr.mxu0 0.0
        %1439 = vmatpush1.msra.mxu0 0.0
        %1440 = vmatprep.subr.mxu0 0.0
        %1441 = vmatpush1.msra.mxu0 0.0
        %1442 = vmatprep.subr.mxu0 0.0
        %1443 = vmatpush1.msra.mxu0 0.0
        %1444 = vmatprep.subr.mxu0 0.0
        %1445 = vmatpush1.msra.mxu0 0.0
        %1446 = vmatprep.subr.mxu0 0.0
        %1447 = vmatpush1.msra.mxu0 0.0
        %1448 = vmatprep.mubr.f32.mxu0 0.0
        %1449 = vmatmul.mubr.f32.gmra.mrb[0].mxu0 %v1382
        %v1450 = vpop.f32.mrb[0].mxu0
        %v1451 = vadd.f32 0.0, %v1450
        %v1452 = vpop.f32.mrb[0].mxu0
        %1453 = vdwg.mxu0
        %1455 = vrot.lane.b32.xlu0 %v1451, 16
        %v1456 = vpop.permute.xlu0 %1455
        %v1458 = vsel %vm1128, %v1378, %v1456
        %v1459 = vld [vmem:[%s9] sm:$0xff]
        %v1460 = vld [vmem:[%s9 + $0x8] sm:$0xff]
        %v1461 = vld [vmem:[%s9 + $0x10] sm:$0xff]
        %v1462 = vld [vmem:[%s9 + $0x18] sm:$0xff]
        %v1463 = vld [vmem:[%s10] sm:$0x1]
        %v1465 = vlaneseq
        %v1466 = vshrl.u32 %v1465, 7
        %v1467 = vsub.s32 0, %v1466
        %v1468 = vrot.slane %v1463, %v1467
        %v1471 = vsel %vm660, %v1458, 0
        %1473 = vmatprep.subr.mxu0 0.0
        %1474 = vmatpush1.msra.mxu0 %v1459
        %1475 = vmatprep.subr.mxu0 0.0
        %1476 = vmatpush1.msra.mxu0 %v1460
        %1477 = vmatprep.subr.mxu0 0.0
        %1478 = vmatpush1.msra.mxu0 %v1461
        %1479 = vmatprep.subr.mxu0 0.0
        %1480 = vmatpush1.msra.mxu0 %v1462
        %1481 = vmatprep.subr.mxu0 0.0
        %1482 = vmatpush1.msra.mxu0 0.0
        %1483 = vmatprep.subr.mxu0 0.0
        %1484 = vmatpush1.msra.mxu0 0.0
        %1485 = vmatprep.subr.mxu0 0.0
        %1486 = vmatpush1.msra.mxu0 0.0
        %1487 = vmatprep.subr.mxu0 0.0
        %1488 = vmatpush1.msra.mxu0 0.0
        %1489 = vmatprep.subr.mxu0 0.0
        %1490 = vmatpush1.msra.mxu0 0.0
        %1491 = vmatprep.subr.mxu0 0.0
        %1492 = vmatpush1.msra.mxu0 0.0
        %1493 = vmatprep.subr.mxu0 0.0
        %1494 = vmatpush1.msra.mxu0 0.0
        %1495 = vmatprep.subr.mxu0 0.0
        %1496 = vmatpush1.msra.mxu0 0.0
        %1497 = vmatprep.subr.mxu0 0.0
        %1498 = vmatpush1.msra.mxu0 0.0
        %1499 = vmatprep.subr.mxu0 0.0
        %1500 = vmatpush1.msra.mxu0 0.0
        %1501 = vmatprep.subr.mxu0 0.0
        %1502 = vmatpush1.msra.mxu0 0.0
        %1503 = vmatprep.subr.mxu0 0.0
        %1504 = vmatpush1.msra.mxu0 0.0
        %1505 = vmatprep.subr.mxu0 0.0
        %1506 = vmatpush1.msra.mxu0 0.0
        %1507 = vmatprep.subr.mxu0 0.0
        %1508 = vmatpush1.msra.mxu0 0.0
        %1509 = vmatprep.subr.mxu0 0.0
        %1510 = vmatpush1.msra.mxu0 0.0
        %1511 = vmatprep.subr.mxu0 0.0
        %1512 = vmatpush1.msra.mxu0 0.0
        %1513 = vmatprep.subr.mxu0 0.0
        %1514 = vmatpush1.msra.mxu0 0.0
        %1515 = vmatprep.subr.mxu0 0.0
        %1516 = vmatpush1.msra.mxu0 0.0
        %1517 = vmatprep.subr.mxu0 0.0
        %1518 = vmatpush1.msra.mxu0 0.0
        %1519 = vmatprep.subr.mxu0 0.0
        %1520 = vmatpush1.msra.mxu0 0.0
        %1521 = vmatprep.subr.mxu0 0.0
        %1522 = vmatpush1.msra.mxu0 0.0
        %1523 = vmatprep.subr.mxu0 0.0
        %1524 = vmatpush1.msra.mxu0 0.0
        %1525 = vmatprep.subr.mxu0 0.0
        %1526 = vmatpush1.msra.mxu0 0.0
        %1527 = vmatprep.subr.mxu0 0.0
        %1528 = vmatpush1.msra.mxu0 0.0
        %1529 = vmatprep.subr.mxu0 0.0
        %1530 = vmatpush1.msra.mxu0 0.0
        %1531 = vmatprep.subr.mxu0 0.0
        %1532 = vmatpush1.msra.mxu0 0.0
        %1533 = vmatprep.subr.mxu0 0.0
        %1534 = vmatpush1.msra.mxu0 0.0
        %1535 = vmatprep.subr.mxu0 0.0
        %1536 = vmatpush1.msra.mxu0 0.0
        %1537 = vmatprep.mubr.f32.mxu0 0.0
        %1538 = vmatmul.mubr.f32.gmra.mrb[0].mxu0 %v1471
        %v1539 = vpop.f32.mrb[0].mxu0
        %v1540 = vadd.f32 %v1468, %v1539
        %v1541 = vpop.f32.mrb[0].mxu0
        %1542 = vdwg.mxu0
        %v1543 = vadd.f32 %v628, %v1540
        %v1544 = vld [vmem:[%s11] sm:$0x1]
        %v1545 = vld [vmem:[%s12] sm:$0x1]
        %v1546 = vsel %vm660, %v1543, 0.0
        %1547 = vadd.xlane.f32.xlu0 %v1546
        %v1548 = vpop.xlane.xlu0 %1547
        %v1549 = vrcp.pop 32.0
        %v1550 = vmul.f32 %v1548, %v1549
        %v1551 = vsub.f32 %v1543, %v1550
        %v1552 = vmul.f32 %v1551, %v1551
        %v1553 = vsel %vm660, %v1552, 0.0
        %1554 = vadd.xlane.f32.xlu0 %v1553
        %v1555 = vpop.xlane.xlu0 %1554
        %v1556 = vmul.f32 %v1555, %v1549
        %v1557 = vadd.f32 %v1556, 1e-12
        %v1558 = vrsqrt.pop %v1557
        %v1559 = vmul.f32 %v1551, %v1558
        %v1561 = vlaneseq
        %v1562 = vshrl.u32 %v1561, 7
        %v1563 = vsub.s32 0, %v1562
        %v1564 = vrot.slane %v1544, %v1563
        %v1566 = vmul.f32 %v1559, %v1564
        %v1568 = vlaneseq
        %v1569 = vshrl.u32 %v1568, 7
        %v1570 = vsub.s32 0, %v1569
        %v1571 = vrot.slane %v1545, %v1570
        %v1573 = vadd.f32 %v1566, %v1571
        %v1574 = vld [vmem:[%s13] sm:$0xff]
        %v1575 = vld [vmem:[%s13 + $0x8] sm:$0xff]
        %v1576 = vld [vmem:[%s13 + $0x10] sm:$0xff]
        %v1577 = vld [vmem:[%s13 + $0x18] sm:$0xff]
        %v1578 = vld [vmem:[%s14] sm:$0x1]
        %v1580 = vlaneseq
        %v1581 = vshrl.u32 %v1580, 7
        %v1582 = vsub.s32 0, %v1581
        %v1583 = vrot.slane %v1578, %v1582
        %v1586 = vsel %vm660, %v1573, 0
        %1588 = vmatprep.subr.mxu0 0.0
        %1589 = vmatpush1.msra.mxu0 %v1574
        %1590 = vmatprep.subr.mxu0 0.0
        %1591 = vmatpush1.msra.mxu0 %v1575
        %1592 = vmatprep.subr.mxu0 0.0
        %1593 = vmatpush1.msra.mxu0 %v1576
        %1594 = vmatprep.subr.mxu0 0.0
        %1595 = vmatpush1.msra.mxu0 %v1577
        %1596 = vmatprep.subr.mxu0 0.0
        %1597 = vmatpush1.msra.mxu0 0.0
        %1598 = vmatprep.subr.mxu0 0.0
        %1599 = vmatpush1.msra.mxu0 0.0
        %1600 = vmatprep.subr.mxu0 0.0
        %1601 = vmatpush1.msra.mxu0 0.0
        %1602 = vmatprep.subr.mxu0 0.0
        %1603 = vmatpush1.msra.mxu0 0.0
        %1604 = vmatprep.subr.mxu0 0.0
        %1605 = vmatpush1.msra.mxu0 0.0
        %1606 = vmatprep.subr.mxu0 0.0
        %1607 = vmatpush1.msra.mxu0 0.0
        %1608 = vmatprep.subr.mxu0 0.0
        %1609 = vmatpush1.msra.mxu0 0.0
        %1610 = vmatprep.subr.mxu0 0.0
        %1611 = vmatpush1.msra.mxu0 0.0
        %1612 = vmatprep.subr.mxu0 0.0
        %1613 = vmatpush1.msra.mxu0 0.0
        %1614 = vmatprep.subr.mxu0 0.0
        %1615 = vmatpush1.msra.mxu0 0.0
        %1616 = vmatprep.subr.mxu0 0.0
        %1617 = vmatpush1.msra.mxu0 0.0
        %1618 = vmatprep.subr.mxu0 0.0
        %1619 = vmatpush1.msra.mxu0 0.0
        %1620 = vmatprep.subr.mxu0 0.0
        %1621 = vmatpush1.msra.mxu0 0.0
        %1622 = vmatprep.subr.mxu0 0.0
        %1623 = vmatpush1.msra.mxu0 0.0
        %1624 = vmatprep.subr.mxu0 0.0
        %1625 = vmatpush1.msra.mxu0 0.0
        %1626 = vmatprep.subr.mxu0 0.0
        %1627 = vmatpush1.msra.mxu0 0.0
        %1628 = vmatprep.subr.mxu0 0.0
        %1629 = vmatpush1.msra.mxu0 0.0
        %1630 = vmatprep.subr.mxu0 0.0
        %1631 = vmatpush1.msra.mxu0 0.0
        %1632 = vmatprep.subr.mxu0 0.0
        %1633 = vmatpush1.msra.mxu0 0.0
        %1634 = vmatprep.subr.mxu0 0.0
        %1635 = vmatpush1.msra.mxu0 0.0
        %1636 = vmatprep.subr.mxu0 0.0
        %1637 = vmatpush1.msra.mxu0 0.0
        %1638 = vmatprep.subr.mxu0 0.0
        %1639 = vmatpush1.msra.mxu0 0.0
        %1640 = vmatprep.subr.mxu0 0.0
        %1641 = vmatpush1.msra.mxu0 0.0
        %1642 = vmatprep.subr.mxu0 0.0
        %1643 = vmatpush1.msra.mxu0 0.0
        %1644 = vmatprep.subr.mxu0 0.0
        %1645 = vmatpush1.msra.mxu0 0.0
        %1646 = vmatprep.subr.mxu0 0.0
        %1647 = vmatpush1.msra.mxu0 0.0
        %1648 = vmatprep.subr.mxu0 0.0
        %1649 = vmatpush1.msra.mxu0 0.0
        %1650 = vmatprep.subr.mxu0 0.0
        %1651 = vmatpush1.msra.mxu0 0.0
        %1652 = vmatprep.mubr.f32.mxu0 0.0
        %1653 = vmatmul.mubr.f32.gmra.mrb[0].mxu0 %v1586
        %v1654 = vpop.f32.mrb[0].mxu0
        %v1655 = vadd.f32 %v1583, %v1654
        %v1656 = vpop.f32.mrb[0].mxu0
        %1657 = vdwg.mxu0
        %v1658 = vmul.f32 %v1655, 0.5
        %v1659 = vmul.f32 %v1655, 0.044715
        %v1660 = vmul.f32 %v1659, %v1655
        %v1661 = vmul.f32 %v1660, %v1655
        %v1662 = vadd.f32 %v1655, %v1661
        %v1663 = vmul.f32 %v1662, 0.7978846
        %v1664 = vtanh.pop %v1663
        %v1665 = vadd.f32 %v1664, 1.0
        %v1666 = vmul.f32 %v1658, %v1665
        %v1667 = vld [vmem:[%s15] sm:$0xff]
        %v1668 = vld [vmem:[%s15 + $0x8] sm:$0xff]
        %v1669 = vld [vmem:[%s15 + $0x10] sm:$0xff]
        %v1670 = vld [vmem:[%s15 + $0x18] sm:$0xff]
        %v1671 = vld [vmem:[%s15 + $0x20] sm:$0xff]
        %v1672 = vld [vmem:[%s15 + $0x28] sm:$0xff]
        %v1673 = vld [vmem:[%s15 + $0x30] sm:$0xff]
        %v1674 = vld [vmem:[%s15 + $0x38] sm:$0xff]
        %v1675 = vld [vmem:[%s16] sm:$0x1]
        %v1677 = vlaneseq
        %v1678 = vshrl.u32 %v1677, 7
        %v1679 = vsub.s32 0, %v1678
        %v1680 = vrot.slane %v1675, %v1679
        %vm1682 = vcmask 523264
        %v1684 = vsel %vm1682, %v1666, 0
        %1686 = vmatprep.subr.mxu0 0.0
        %1687 = vmatpush1.msra.mxu0 %v1667
        %1688 = vmatprep.subr.mxu0 0.0
        %1689 = vmatpush1.msra.mxu0 %v1668
        %1690 = vmatprep.subr.mxu0 0.0
        %1691 = vmatpush1.msra.mxu0 %v1669
        %1692 = vmatprep.subr.mxu0 0.0
        %1693 = vmatpush1.msra.mxu0 %v1670
        %1694 = vmatprep.subr.mxu0 0.0
        %1695 = vmatpush1.msra.mxu0 %v1671
        %1696 = vmatprep.subr.mxu0 0.0
        %1697 = vmatpush1.msra.mxu0 %v1672
        %1698 = vmatprep.subr.mxu0 0.0
        %1699 = vmatpush1.msra.mxu0 %v1673
        %1700 = vmatprep.subr.mxu0 0.0
        %1701 = vmatpush1.msra.mxu0 %v1674
        %1702 = vmatprep.subr.mxu0 0.0
        %1703 = vmatpush1.msra.mxu0 0.0
        %1704 = vmatprep.subr.mxu0 0.0
        %1705 = vmatpush1.msra.mxu0 0.0
        %1706 = vmatprep.subr.mxu0 0.0
        %1707 = vmatpush1.msra.mxu0 0.0
        %1708 = vmatprep.subr.mxu0 0.0
        %1709 = vmatpush1.msra.mxu0 0.0
        %1710 = vmatprep.subr.mxu0 0.0
        %1711 = vmatpush1.msra.mxu0 0.0
        %1712 = vmatprep.subr.mxu0 0.0
        %1713 = vmatpush1.msra.mxu0 0.0
        %1714 = vmatprep.subr.mxu0 0.0
        %1715 = vmatpush1.msra.mxu0 0.0
        %1716 = vmatprep.subr.mxu0 0.0
        %1717 = vmatpush1.msra.mxu0 0.0
        %1718 = vmatprep.subr.mxu0 0.0
        %1719 = vmatpush1.msra.mxu0 0.0
        %1720 = vmatprep.subr.mxu0 0.0
        %1721 = vmatpush1.msra.mxu0 0.0
        %1722 = vmatprep.subr.mxu0 0.0
        %1723 = vmatpush1.msra.mxu0 0.0
        %1724 = vmatprep.subr.mxu0 0.0
        %1725 = vmatpush1.msra.mxu0 0.0
        %1726 = vmatprep.subr.mxu0 0.0
        %1727 = vmatpush1.msra.mxu0 0.0
        %1728 = vmatprep.subr.mxu0 0.0
        %1729 = vmatpush1.msra.mxu0 0.0
        %1730 = vmatprep.subr.mxu0 0.0
        %1731 = vmatpush1.msra.mxu0 0.0
        %1732 = vmatprep.subr.mxu0 0.0
        %1733 = vmatpush1.msra.mxu0 0.0
        %1734 = vmatprep.subr.mxu0 0.0
        %1735 = vmatpush1.msra.mxu0 0.0
        %1736 = vmatprep.subr.mxu0 0.0
        %1737 = vmatpush1.msra.mxu0 0.0
        %1738 = vmatprep.subr.mxu0 0.0
        %1739 = vmatpush1.msra.mxu0 0.0
        %1740 = vmatprep.subr.mxu0 0.0
        %1741 = vmatpush1.msra.mxu0 0.0
        %1742 = vmatprep.subr.mxu0 0.0
        %1743 = vmatpush1.msra.mxu0 0.0
        %1744 = vmatprep.subr.mxu0 0.0
        %1745 = vmatpush1.msra.mxu0 0.0
        %1746 = vmatprep.subr.mxu0 0.0
        %1747 = vmatpush1.msra.mxu0 0.0
        %1748 = vmatprep.subr.mxu0 0.0
        %1749 = vmatpush1.msra.mxu0 0.0
        %1750 = vmatprep.mubr.f32.mxu0 0.0
        %1751 = vmatmul.mubr.f32.gmra.mrb[0].mxu0 %v1684
        %v1752 = vpop.f32.mrb[0].mxu0
        %v1753 = vadd.f32 %v1680, %v1752
        %v1754 = vpop.f32.mrb[0].mxu0
        %1755 = vdwg.mxu0
        %v1756 = vadd.f32 %v1573, %v1753
        %v1757 = vld [vmem:[%s17] sm:$0x1]
        %v1758 = vld [vmem:[%s18] sm:$0x1]
        %v1759 = vsel %vm660, %v1756, 0.0
        %1760 = vadd.xlane.f32.xlu0 %v1759
        %v1761 = vpop.xlane.xlu0 %1760
        %v1762 = vmul.f32 %v1761, %v1549
        %v1763 = vsub.f32 %v1756, %v1762
        %v1764 = vmul.f32 %v1763, %v1763
        %v1765 = vsel %vm660, %v1764, 0.0
        %1766 = vadd.xlane.f32.xlu0 %v1765
        %v1767 = vpop.xlane.xlu0 %1766
        %v1768 = vmul.f32 %v1767, %v1549
        %v1769 = vadd.f32 %v1768, 1e-12
        %v1770 = vrsqrt.pop %v1769
        %v1771 = vmul.f32 %v1763, %v1770
        %v1773 = vlaneseq
        %v1774 = vshrl.u32 %v1773, 7
        %v1775 = vsub.s32 0, %v1774
        %v1776 = vrot.slane %v1757, %v1775
        %v1778 = vmul.f32 %v1771, %v1776
        %v1780 = vlaneseq
        %v1781 = vshrl.u32 %v1780, 7
        %v1782 = vsub.s32 0, %v1781
        %v1783 = vrot.slane %v1758, %v1782
        %v1785 = vadd.f32 %v1778, %v1783
        %s1786 = scalar_lea.vmem %s3, 64
        %v1787 = vld [vmem:[%s1786] sm:$0xff]
        %v1788 = vld [vmem:[%s1786 + $0x8] sm:$0xff]
        %v1789 = vld [vmem:[%s1786 + $0x10] sm:$0xff]
        %v1790 = vld [vmem:[%s1786 + $0x18] sm:$0xff]
        %v1791 = vld [vmem:[%s1786 + $0x20] sm:$0xff]
        %v1792 = vld [vmem:[%s1786 + $0x28] sm:$0xff]
        %v1793 = vld [vmem:[%s1786 + $0x30] sm:$0xff]
        %v1794 = vld [vmem:[%s1786 + $0x38] sm:$0xff]
        %s1795 = scalar_lea.vmem %s4, 2
        %v1796 = vld [vmem:[%s1795] sm:$0x1]
        %v1797 = vld [vmem:[%s1795 + $0x1] sm:$0x1]
        %v1800 = vlaneseq
        %v1801 = vshrl.u32 %v1800, 7
        %v1802 = vsub.s32 0, %v1801
        %v1803 = vrot.slane %v1796, %v1802
        %v1804 = vlaneseq
        %v1805 = vshrl.u32 %v1804, 7
        %v1806 = vsub.s32 0, %v1805
        %v1807 = vrot.slane %v1797, %v1806
        %v1811 = vsel %vm660, %v1785, 0
        %1813 = vmatprep.subr.mxu0 0.0
        %1814 = vmatpush1.msra.mxu0 %v1787
        %1815 = vmatprep.subr.mxu0 0.0
        %1816 = vmatpush1.msra.mxu0 %v1788
        %1817 = vmatprep.subr.mxu0 0.0
        %1818 = vmatpush1.msra.mxu0 %v1789
        %1819 = vmatprep.subr.mxu0 0.0
        %1820 = vmatpush1.msra.mxu0 %v1790
        %1821 = vmatprep.subr.mxu0 0.0
        %1822 = vmatpush1.msra.mxu0 0.0
        %1823 = vmatprep.subr.mxu0 0.0
        %1824 = vmatpush1.msra.mxu0 0.0
        %1825 = vmatprep.subr.mxu0 0.0
        %1826 = vmatpush1.msra.mxu0 0.0
        %1827 = vmatprep.subr.mxu0 0.0
        %1828 = vmatpush1.msra.mxu0 0.0
        %1829 = vmatprep.subr.mxu0 0.0
        %1830 = vmatpush1.msra.mxu0 0.0
        %1831 = vmatprep.subr.mxu0 0.0
        %1832 = vmatpush1.msra.mxu0 0.0
        %1833 = vmatprep.subr.mxu0 0.0
        %1834 = vmatpush1.msra.mxu0 0.0
        %1835 = vmatprep.subr.mxu0 0.0
        %1836 = vmatpush1.msra.mxu0 0.0
        %1837 = vmatprep.subr.mxu0 0.0
        %1838 = vmatpush1.msra.mxu0 0.0
        %1839 = vmatprep.subr.mxu0 0.0
        %1840 = vmatpush1.msra.mxu0 0.0
        %1841 = vmatprep.subr.mxu0 0.0
        %1842 = vmatpush1.msra.mxu0 0.0
        %1843 = vmatprep.subr.mxu0 0.0
        %1844 = vmatpush1.msra.mxu0 0.0
        %1845 = vmatprep.subr.mxu0 0.0
        %1846 = vmatpush1.msra.mxu0 0.0
        %1847 = vmatprep.subr.mxu0 0.0
        %1848 = vmatpush1.msra.mxu0 0.0
        %1849 = vmatprep.subr.mxu0 0.0
        %1850 = vmatpush1.msra.mxu0 0.0
        %1851 = vmatprep.subr.mxu0 0.0
        %1852 = vmatpush1.msra.mxu0 0.0
        %1853 = vmatprep.subr.mxu0 0.0
        %1854 = vmatpush1.msra.mxu0 0.0
        %1855 = vmatprep.subr.mxu0 0.0
        %1856 = vmatpush1.msra.mxu0 0.0
        %1857 = vmatprep.subr.mxu0 0.0
        %1858 = vmatpush1.msra.mxu0 0.0
        %1859 = vmatprep.subr.mxu0 0.0
        %1860 = vmatpush1.msra.mxu0 0.0
        %1861 = vmatprep.subr.mxu0 0.0
        %1862 = vmatpush1.msra.mxu0 0.0
        %1863 = vmatprep.subr.mxu0 0.0
        %1864 = vmatpush1.msra.mxu0 0.0
        %1865 = vmatprep.subr.mxu0 0.0
        %1866 = vmatpush1.msra.mxu0 0.0
        %1867 = vmatprep.subr.mxu0 0.0
        %1868 = vmatpush1.msra.mxu0 0.0
        %1869 = vmatprep.subr.mxu0 0.0
        %1870 = vmatpush1.msra.mxu0 0.0
        %1871 = vmatprep.subr.mxu0 0.0
        %1872 = vmatpush1.msra.mxu0 0.0
        %1873 = vmatprep.subr.mxu0 0.0
        %1874 = vmatpush1.msra.mxu0 0.0
        %1875 = vmatprep.subr.mxu0 0.0
        %1876 = vmatpush1.msra.mxu0 0.0
        %1877 = vmatprep.mubr.f32.mxu0 0.0
        %1878 = vmatmul.mubr.f32.gmra.mrb[0].mxu0 %v1811
        %v1879 = vpop.f32.mrb[0].mxu0
        %v1880 = vadd.f32 %v1803, %v1879
        %v1881 = vpop.f32.mrb[0].mxu0
        %1882 = vdwg.mxu0
        %1883 = vmatprep.subr.mxu0 0.0
        %1884 = vmatpush1.msra.mxu0 %v1791
        %1885 = vmatprep.subr.mxu0 0.0
        %1886 = vmatpush1.msra.mxu0 %v1792
        %1887 = vmatprep.subr.mxu0 0.0
        %1888 = vmatpush1.msra.mxu0 %v1793
        %1889 = vmatprep.subr.mxu0 0.0
        %1890 = vmatpush1.msra.mxu0 %v1794
        %1891 = vmatprep.subr.mxu0 0.0
        %1892 = vmatpush1.msra.mxu0 0.0
        %1893 = vmatprep.subr.mxu0 0.0
        %1894 = vmatpush1.msra.mxu0 0.0
        %1895 = vmatprep.subr.mxu0 0.0
        %1896 = vmatpush1.msra.mxu0 0.0
        %1897 = vmatprep.subr.mxu0 0.0
        %1898 = vmatpush1.msra.mxu0 0.0
        %1899 = vmatprep.subr.mxu0 0.0
        %1900 = vmatpush1.msra.mxu0 0.0
        %1901 = vmatprep.subr.mxu0 0.0
        %1902 = vmatpush1.msra.mxu0 0.0
        %1903 = vmatprep.subr.mxu0 0.0
        %1904 = vmatpush1.msra.mxu0 0.0
        %1905 = vmatprep.subr.mxu0 0.0
        %1906 = vmatpush1.msra.mxu0 0.0
        %1907 = vmatprep.subr.mxu0 0.0
        %1908 = vmatpush1.msra.mxu0 0.0
        %1909 = vmatprep.subr.mxu0 0.0
        %1910 = vmatpush1.msra.mxu0 0.0
        %1911 = vmatprep.subr.mxu0 0.0
        %1912 = vmatpush1.msra.mxu0 0.0
        %1913 = vmatprep.subr.mxu0 0.0
        %1914 = vmatpush1.msra.mxu0 0.0
        %1915 = vmatprep.subr.mxu0 0.0
        %1916 = vmatpush1.msra.mxu0 0.0
        %1917 = vmatprep.subr.mxu0 0.0
        %1918 = vmatpush1.msra.mxu0 0.0
        %1919 = vmatprep.subr.mxu0 0.0
        %1920 = vmatpush1.msra.mxu0 0.0
        %1921 = vmatprep.subr.mxu0 0.0
        %1922 = vmatpush1.msra.mxu0 0.0
        %1923 = vmatprep.subr.mxu0 0.0
        %1924 = vmatpush1.msra.mxu0 0.0
        %1925 = vmatprep.subr.mxu0 0.0
        %1926 = vmatpush1.msra.mxu0 0.0
        %1927 = vmatprep.subr.mxu0 0.0
        %1928 = vmatpush1.msra.mxu0 0.0
        %1929 = vmatprep.subr.mxu0 0.0
        %1930 = vmatpush1.msra.mxu0 0.0
        %1931 = vmatprep.subr.mxu0 0.0
        %1932 = vmatpush1.msra.mxu0 0.0
        %1933 = vmatprep.subr.mxu0 0.0
        %1934 = vmatpush1.msra.mxu0 0.0
        %1935 = vmatprep.subr.mxu0 0.0
        %1936 = vmatpush1.msra.mxu0 0.0
        %1937 = vmatprep.subr.mxu0 0.0
        %1938 = vmatpush1.msra.mxu0 0.0
        %1939 = vmatprep.subr.mxu0 0.0
        %1940 = vmatpush1.msra.mxu0 0.0
        %1941 = vmatprep.subr.mxu0 0.0
        %1942 = vmatpush1.msra.mxu0 0.0
        %1943 = vmatprep.subr.mxu0 0.0
        %1944 = vmatpush1.msra.mxu0 0.0
        %1945 = vmatprep.subr.mxu0 0.0
        %1946 = vmatpush1.msra.mxu0 0.0
        %1947 = vmatprep.mubr.f32.mxu0 0.0
        %1948 = vmatmul.mubr.f32.gmra.mrb[0].mxu0 %v1811
        %v1949 = vpop.f32.mrb[0].mxu0
        %v1950 = vadd.f32 %v1807, %v1949
        %v1951 = vpop.f32.mrb[0].mxu0
        %1952 = vdwg.mxu0
        %s1953 = scalar_lea.vmem %s5, 64
        %v1954 = vld [vmem:[%s1953] sm:$0xff]
        %v1955 = vld [vmem:[%s1953 + $0x8] sm:$0xff]
        %v1956 = vld [vmem:[%s1953 + $0x10] sm:$0xff]
        %v1957 = vld [vmem:[%s1953 + $0x18] sm:$0xff]
        %v1958 = vld [vmem:[%s1953 + $0x20] sm:$0xff]
        %v1959 = vld [vmem:[%s1953 + $0x28] sm:$0xff]
        %v1960 = vld [vmem:[%s1953 + $0x30] sm:$0xff]
        %v1961 = vld [vmem:[%s1953 + $0x38] sm:$0xff]
        %s1962 = scalar_lea.vmem %s6, 2
        %v1963 = vld [vmem:[%s1962] sm:$0x1]
        %v1964 = vld [vmem:[%s1962 + $0x1] sm:$0x1]
        %v1967 = vlaneseq
        %v1968 = vshrl.u32 %v1967, 7
        %v1969 = vsub.s32 0, %v1968
        %v1970 = vrot.slane %v1963, %v1969
        %v1971 = vlaneseq
        %v1972 = vshrl.u32 %v1971, 7
        %v1973 = vsub.s32 0, %v1972
        %v1974 = vrot.slane %v1964, %v1973
        %1977 = vmatprep.subr.mxu0 0.0
        %1978 = vmatpush1.msra.mxu0 %v1954
        %1979 = vmatprep.subr.mxu0 0.0
        %1980 = vmatpush1.msra.mxu0 %v1955
        %1981 = vmatprep.subr.mxu0 0.0
        %1982 = vmatpush1.msra.mxu0 %v1956
        %1983 = vmatprep.subr.mxu0 0.0
        %1984 = vmatpush1.msra.mxu0 %v1957
        %1985 = vmatprep.subr.mxu0 0.0
        %1986 = vmatpush1.msra.mxu0 0.0
        %1987 = vmatprep.subr.mxu0 0.0
        %1988 = vmatpush1.msra.mxu0 0.0
        %1989 = vmatprep.subr.mxu0 0.0
        %1990 = vmatpush1.msra.mxu0 0.0
        %1991 = vmatprep.subr.mxu0 0.0
        %1992 = vmatpush1.msra.mxu0 0.0
        %1993 = vmatprep.subr.mxu0 0.0
        %1994 = vmatpush1.msra.mxu0 0.0
        %1995 = vmatprep.subr.mxu0 0.0
        %1996 = vmatpush1.msra.mxu0 0.0
        %1997 = vmatprep.subr.mxu0 0.0
        %1998 = vmatpush1.msra.mxu0 0.0
        %1999 = vmatprep.subr.mxu0 0.0
        %2000 = vmatpush1.msra.mxu0 0.0
        %2001 = vmatprep.subr.mxu0 0.0
        %2002 = vmatpush1.msra.mxu0 0.0
        %2003 = vmatprep.subr.mxu0 0.0
        %2004 = vmatpush1.msra.mxu0 0.0
        %2005 = vmatprep.subr.mxu0 0.0
        %2006 = vmatpush1.msra.mxu0 0.0
        %2007 = vmatprep.subr.mxu0 0.0
        %2008 = vmatpush1.msra.mxu0 0.0
        %2009 = vmatprep.subr.mxu0 0.0
        %2010 = vmatpush1.msra.mxu0 0.0
        %2011 = vmatprep.subr.mxu0 0.0
        %2012 = vmatpush1.msra.mxu0 0.0
        %2013 = vmatprep.subr.mxu0 0.0
        %2014 = vmatpush1.msra.mxu0 0.0
        %2015 = vmatprep.subr.mxu0 0.0
        %2016 = vmatpush1.msra.mxu0 0.0
        %2017 = vmatprep.subr.mxu0 0.0
        %2018 = vmatpush1.msra.mxu0 0.0
        %2019 = vmatprep.subr.mxu0 0.0
        %2020 = vmatpush1.msra.mxu0 0.0
        %2021 = vmatprep.subr.mxu0 0.0
        %2022 = vmatpush1.msra.mxu0 0.0
        %2023 = vmatprep.subr.mxu0 0.0
        %2024 = vmatpush1.msra.mxu0 0.0
        %2025 = vmatprep.subr.mxu0 0.0
        %2026 = vmatpush1.msra.mxu0 0.0
        %2027 = vmatprep.subr.mxu0 0.0
        %2028 = vmatpush1.msra.mxu0 0.0
        %2029 = vmatprep.subr.mxu0 0.0
        %2030 = vmatpush1.msra.mxu0 0.0
        %2031 = vmatprep.subr.mxu0 0.0
        %2032 = vmatpush1.msra.mxu0 0.0
        %2033 = vmatprep.subr.mxu0 0.0
        %2034 = vmatpush1.msra.mxu0 0.0
        %2035 = vmatprep.subr.mxu0 0.0
        %2036 = vmatpush1.msra.mxu0 0.0
        %2037 = vmatprep.subr.mxu0 0.0
        %2038 = vmatpush1.msra.mxu0 0.0
        %2039 = vmatprep.subr.mxu0 0.0
        %2040 = vmatpush1.msra.mxu0 0.0
        %2041 = vmatprep.mubr.f32.mxu0 0.0
        %2042 = vmatmul.mubr.f32.gmra.mrb[0].mxu0 %v1811
        %v2043 = vpop.f32.mrb[0].mxu0
        %v2044 = vadd.f32 %v1970, %v2043
        %v2045 = vpop.f32.mrb[0].mxu0
        %2046 = vdwg.mxu0
        %2047 = vmatprep.subr.mxu0 0.0
        %2048 = vmatpush1.msra.mxu0 %v1958
        %2049 = vmatprep.subr.mxu0 0.0
        %2050 = vmatpush1.msra.mxu0 %v1959
        %2051 = vmatprep.subr.mxu0 0.0
        %2052 = vmatpush1.msra.mxu0 %v1960
        %2053 = vmatprep.subr.mxu0 0.0
        %2054 = vmatpush1.msra.mxu0 %v1961
        %2055 = vmatprep.subr.mxu0 0.0
        %2056 = vmatpush1.msra.mxu0 0.0
        %2057 = vmatprep.subr.mxu0 0.0
        %2058 = vmatpush1.msra.mxu0 0.0
        %2059 = vmatprep.subr.mxu0 0.0
        %2060 = vmatpush1.msra.mxu0 0.0
        %2061 = vmatprep.subr.mxu0 0.0
        %2062 = vmatpush1.msra.mxu0 0.0
        %2063 = vmatprep.subr.mxu0 0.0
        %2064 = vmatpush1.msra.mxu0 0.0
        %2065 = vmatprep.subr.mxu0 0.0
        %2066 = vmatpush1.msra.mxu0 0.0
        %2067 = vmatprep.subr.mxu0 0.0
        %2068 = vmatpush1.msra.mxu0 0.0
        %2069 = vmatprep.subr.mxu0 0.0
        %2070 = vmatpush1.msra.mxu0 0.0
        %2071 = vmatprep.subr.mxu0 0.0
        %2072 = vmatpush1.msra.mxu0 0.0
        %2073 = vmatprep.subr.mxu0 0.0
        %2074 = vmatpush1.msra.mxu0 0.0
        %2075 = vmatprep.subr.mxu0 0.0
        %2076 = vmatpush1.msra.mxu0 0.0
        %2077 = vmatprep.subr.mxu0 0.0
        %2078 = vmatpush1.msra.mxu0 0.0
        %2079 = vmatprep.subr.mxu0 0.0
        %2080 = vmatpush1.msra.mxu0 0.0
        %2081 = vmatprep.subr.mxu0 0.0
        %2082 = vmatpush1.msra.mxu0 0.0
        %2083 = vmatprep.subr.mxu0 0.0
        %2084 = vmatpush1.msra.mxu0 0.0
        %2085 = vmatprep.subr.mxu0 0.0
        %2086 = vmatpush1.msra.mxu0 0.0
        %2087 = vmatprep.subr.mxu0 0.0
        %2088 = vmatpush1.msra.mxu0 0.0
        %2089 = vmatprep.subr.mxu0 0.0
        %2090 = vmatpush1.msra.mxu0 0.0
        %2091 = vmatprep.subr.mxu0 0.0
        %2092 = vmatpush1.msra.mxu0 0.0
        %2093 = vmatprep.subr.mxu0 0.0
        %2094 = vmatpush1.msra.mxu0 0.0
        %2095 = vmatprep.subr.mxu0 0.0
        %2096 = vmatpush1.msra.mxu0 0.0
        %2097 = vmatprep.subr.mxu0 0.0
        %2098 = vmatpush1.msra.mxu0 0.0
        %2099 = vmatprep.subr.mxu0 0.0
        %2100 = vmatpush1.msra.mxu0 0.0
        %2101 = vmatprep.subr.mxu0 0.0
        %2102 = vmatpush1.msra.mxu0 0.0
        %2103 = vmatprep.subr.mxu0 0.0
        %2104 = vmatpush1.msra.mxu0 0.0
        %2105 = vmatprep.subr.mxu0 0.0
        %2106 = vmatpush1.msra.mxu0 0.0
        %2107 = vmatprep.subr.mxu0 0.0
        %2108 = vmatpush1.msra.mxu0 0.0
        %2109 = vmatprep.subr.mxu0 0.0
        %2110 = vmatpush1.msra.mxu0 0.0
        %2111 = vmatprep.mubr.f32.mxu0 0.0
        %2112 = vmatmul.mubr.f32.gmra.mrb[0].mxu0 %v1811
        %v2113 = vpop.f32.mrb[0].mxu0
        %v2114 = vadd.f32 %v1974, %v2113
        %v2115 = vpop.f32.mrb[0].mxu0
        %2116 = vdwg.mxu0
        %s2117 = scalar_lea.vmem %s7, 64
        %v2118 = vld [vmem:[%s2117] sm:$0xff]
        %v2119 = vld [vmem:[%s2117 + $0x8] sm:$0xff]
        %v2120 = vld [vmem:[%s2117 + $0x10] sm:$0xff]
        %v2121 = vld [vmem:[%s2117 + $0x18] sm:$0xff]
        %v2122 = vld [vmem:[%s2117 + $0x20] sm:$0xff]
        %v2123 = vld [vmem:[%s2117 + $0x28] sm:$0xff]
        %v2124 = vld [vmem:[%s2117 + $0x30] sm:$0xff]
        %v2125 = vld [vmem:[%s2117 + $0x38] sm:$0xff]
        %s2126 = scalar_lea.vmem %s8, 2
        %v2127 = vld [vmem:[%s2126] sm:$0x1]
        %v2128 = vld [vmem:[%s2126 + $0x1] sm:$0x1]
        %v2131 = vlaneseq
        %v2132 = vshrl.u32 %v2131, 7
        %v2133 = vsub.s32 0, %v2132
        %v2134 = vrot.slane %v2127, %v2133
        %v2135 = vlaneseq
        %v2136 = vshrl.u32 %v2135, 7
        %v2137 = vsub.s32 0, %v2136
        %v2138 = vrot.slane %v2128, %v2137
        %2141 = vmatprep.subr.mxu0 0.0
        %2142 = vmatpush1.msra.mxu0 %v2118
        %2143 = vmatprep.subr.mxu0 0.0
        %2144 = vmatpush1.msra.mxu0 %v2119
        %2145 = vmatprep.subr.mxu0 0.0
        %2146 = vmatpush1.msra.mxu0 %v2120
        %2147 = vmatprep.subr.mxu0 0.0
        %2148 = vmatpush1.msra.mxu0 %v2121
        %2149 = vmatprep.subr.mxu0 0.0
        %2150 = vmatpush1.msra.mxu0 0.0
        %2151 = vmatprep.subr.mxu0 0.0
        %2152 = vmatpush1.msra.mxu0 0.0
        %2153 = vmatprep.subr.mxu0 0.0
        %2154 = vmatpush1.msra.mxu0 0.0
        %2155 = vmatprep.subr.mxu0 0.0
        %2156 = vmatpush1.msra.mxu0 0.0
        %2157 = vmatprep.subr.mxu0 0.0
        %2158 = vmatpush1.msra.mxu0 0.0
        %2159 = vmatprep.subr.mxu0 0.0
        %2160 = vmatpush1.msra.mxu0 0.0
        %2161 = vmatprep.subr.mxu0 0.0
        %2162 = vmatpush1.msra.mxu0 0.0
        %2163 = vmatprep.subr.mxu0 0.0
        %2164 = vmatpush1.msra.mxu0 0.0
        %2165 = vmatprep.subr.mxu0 0.0
        %2166 = vmatpush1.msra.mxu0 0.0
        %2167 = vmatprep.subr.mxu0 0.0
        %2168 = vmatpush1.msra.mxu0 0.0
        %2169 = vmatprep.subr.mxu0 0.0
        %2170 = vmatpush1.msra.mxu0 0.0
        %2171 = vmatprep.subr.mxu0 0.0
        %2172 = vmatpush1.msra.mxu0 0.0
        %2173 = vmatprep.subr.mxu0 0.0
        %2174 = vmatpush1.msra.mxu0 0.0
        %2175 = vmatprep.subr.mxu0 0.0
        %2176 = vmatpush1.msra.mxu0 0.0
        %2177 = vmatprep.subr.mxu0 0.0
        %2178 = vmatpush1.msra.mxu0 0.0
        %2179 = vmatprep.subr.mxu0 0.0
        %2180 = vmatpush1.msra.mxu0 0.0
        %2181 = vmatprep.subr.mxu0 0.0
        %2182 = vmatpush1.msra.mxu0 0.0
        %2183 = vmatprep.subr.mxu0 0.0
        %2184 = vmatpush1.msra.mxu0 0.0
        %2185 = vmatprep.subr.mxu0 0.0
        %2186 = vmatpush1.msra.mxu0 0.0
        %2187 = vmatprep.subr.mxu0 0.0
        %2188 = vmatpush1.msra.mxu0 0.0
        %2189 = vmatprep.subr.mxu0 0.0
        %2190 = vmatpush1.msra.mxu0 0.0
        %2191 = vmatprep.subr.mxu0 0.0
        %2192 = vmatpush1.msra.mxu0 0.0
        %2193 = vmatprep.subr.mxu0 0.0
        %2194 = vmatpush1.msra.mxu0 0.0
        %2195 = vmatprep.subr.mxu0 0.0
        %2196 = vmatpush1.msra.mxu0 0.0
        %2197 = vmatprep.subr.mxu0 0.0
        %2198 = vmatpush1.msra.mxu0 0.0
        %2199 = vmatprep.subr.mxu0 0.0
        %2200 = vmatpush1.msra.mxu0 0.0
        %2201 = vmatprep.subr.mxu0 0.0
        %2202 = vmatpush1.msra.mxu0 0.0
        %2203 = vmatprep.subr.mxu0 0.0
        %2204 = vmatpush1.msra.mxu0 0.0
        %2205 = vmatprep.mubr.f32.mxu0 0.0
        %2206 = vmatmul.mubr.f32.gmra.mrb[0].mxu0 %v1811
        %v2207 = vpop.f32.mrb[0].mxu0
        %v2208 = vadd.f32 %v2134, %v2207
        %v2209 = vpop.f32.mrb[0].mxu0
        %2210 = vdwg.mxu0
        %2211 = vmatprep.subr.mxu0 0.0
        %2212 = vmatpush1.msra.mxu0 %v2122
        %2213 = vmatprep.subr.mxu0 0.0
        %2214 = vmatpush1.msra.mxu0 %v2123
        %2215 = vmatprep.subr.mxu0 0.0
        %2216 = vmatpush1.msra.mxu0 %v2124
        %2217 = vmatprep.subr.mxu0 0.0
        %2218 = vmatpush1.msra.mxu0 %v2125
        %2219 = vmatprep.subr.mxu0 0.0
        %2220 = vmatpush1.msra.mxu0 0.0
        %2221 = vmatprep.subr.mxu0 0.0
        %2222 = vmatpush1.msra.mxu0 0.0
        %2223 = vmatprep.subr.mxu0 0.0
        %2224 = vmatpush1.msra.mxu0 0.0
        %2225 = vmatprep.subr.mxu0 0.0
        %2226 = vmatpush1.msra.mxu0 0.0
        %2227 = vmatprep.subr.mxu0 0.0
        %2228 = vmatpush1.msra.mxu0 0.0
        %2229 = vmatprep.subr.mxu0 0.0
        %2230 = vmatpush1.msra.mxu0 0.0
        %2231 = vmatprep.subr.mxu0 0.0
        %2232 = vmatpush1.msra.mxu0 0.0
        %2233 = vmatprep.subr.mxu0 0.0
        %2234 = vmatpush1.msra.mxu0 0.0
        %2235 = vmatprep.subr.mxu0 0.0
        %2236 = vmatpush1.msra.mxu0 0.0
        %2237 = vmatprep.subr.mxu0 0.0
        %2238 = vmatpush1.msra.mxu0 0.0
        %2239 = vmatprep.subr.mxu0 0.0
        %2240 = vmatpush1.msra.mxu0 0.0
        %2241 = vmatprep.subr.mxu0 0.0
        %2242 = vmatpush1.msra.mxu0 0.0
        %2243 = vmatprep.subr.mxu0 0.0
        %2244 = vmatpush1.msra.mxu0 0.0
        %2245 = vmatprep.subr.mxu0 0.0
        %2246 = vmatpush1.msra.mxu0 0.0
        %2247 = vmatprep.subr.mxu0 0.0
        %2248 = vmatpush1.msra.mxu0 0.0
        %2249 = vmatprep.subr.mxu0 0.0
        %2250 = vmatpush1.msra.mxu0 0.0
        %2251 = vmatprep.subr.mxu0 0.0
        %2252 = vmatpush1.msra.mxu0 0.0
        %2253 = vmatprep.subr.mxu0 0.0
        %2254 = vmatpush1.msra.mxu0 0.0
        %2255 = vmatprep.subr.mxu0 0.0
        %2256 = vmatpush1.msra.mxu0 0.0
        %2257 = vmatprep.subr.mxu0 0.0
        %2258 = vmatpush1.msra.mxu0 0.0
        %2259 = vmatprep.subr.mxu0 0.0
        %2260 = vmatpush1.msra.mxu0 0.0
        %2261 = vmatprep.subr.mxu0 0.0
        %2262 = vmatpush1.msra.mxu0 0.0
        %2263 = vmatprep.subr.mxu0 0.0
        %2264 = vmatpush1.msra.mxu0 0.0
        %2265 = vmatprep.subr.mxu0 0.0
        %2266 = vmatpush1.msra.mxu0 0.0
        %2267 = vmatprep.subr.mxu0 0.0
        %2268 = vmatpush1.msra.mxu0 0.0
        %2269 = vmatprep.subr.mxu0 0.0
        %2270 = vmatpush1.msra.mxu0 0.0
        %2271 = vmatprep.subr.mxu0 0.0
        %2272 = vmatpush1.msra.mxu0 0.0
        %2273 = vmatprep.subr.mxu0 0.0
        %2274 = vmatpush1.msra.mxu0 0.0
        %2275 = vmatprep.mubr.f32.mxu0 0.0
        %2276 = vmatmul.mubr.f32.gmra.mrb[0].mxu0 %v1811
        %v2277 = vpop.f32.mrb[0].mxu0
        %v2278 = vadd.f32 %v2138, %v2277
        %v2279 = vpop.f32.mrb[0].mxu0
        %2280 = vdwg.mxu0
        %v2282 = vsel %vm1128, %v1880, 0
        %v2285 = vsel %vm1128, %v2044, 0
        %2287 = vmatprep.subr.mxu0 0.0
        %2288 = vmatpush1.xpose.msra.mxu0 %v2285
        %2289 = vmatprep.subr.mxu0 0.0
        %2290 = vmatpush1.xpose.msra.mxu0 0.0
        %2291 = vmatprep.subr.mxu0 0.0
        %2292 = vmatpush1.xpose.msra.mxu0 0.0
        %2293 = vmatprep.subr.mxu0 0.0
        %2294 = vmatpush1.xpose.msra.mxu0 0.0
        %2295 = vmatprep.subr.mxu0 0.0
        %2296 = vmatpush1.xpose.msra.mxu0 0.0
        %2297 = vmatprep.subr.mxu0 0.0
        %2298 = vmatpush1.xpose.msra.mxu0 0.0
        %2299 = vmatprep.subr.mxu0 0.0
        %2300 = vmatpush1.xpose.msra.mxu0 0.0
        %2301 = vmatprep.subr.mxu0 0.0
        %2302 = vmatpush1.xpose.msra.mxu0 0.0
        %2303 = vmatprep.subr.mxu0 0.0
        %2304 = vmatpush1.xpose.msra.mxu0 0.0
        %2305 = vmatprep.subr.mxu0 0.0
        %2306 = vmatpush1.xpose.msra.mxu0 0.0
        %2307 = vmatprep.subr.mxu0 0.0
        %2308 = vmatpush1.xpose.msra.mxu0 0.0
        %2309 = vmatprep.subr.mxu0 0.0
        %2310 = vmatpush1.xpose.msra.mxu0 0.0
        %2311 = vmatprep.subr.mxu0 0.0
        %2312 = vmatpush1.xpose.msra.mxu0 0.0
        %2313 = vmatprep.subr.mxu0 0.0
        %2314 = vmatpush1.xpose.msra.mxu0 0.0
        %2315 = vmatprep.subr.mxu0 0.0
        %2316 = vmatpush1.xpose.msra.mxu0 0.0
        %2317 = vmatprep.subr.mxu0 0.0
        %2318 = vmatpush1.xpose.msra.mxu0 0.0
        %2319 = vmatprep.subr.mxu0 0.0
        %2320 = vmatpush1.xpose.msra.mxu0 0.0
        %2321 = vmatprep.subr.mxu0 0.0
        %2322 = vmatpush1.xpose.msra.mxu0 0.0
        %2323 = vmatprep.subr.mxu0 0.0
        %2324 = vmatpush1.xpose.msra.mxu0 0.0
        %2325 = vmatprep.subr.mxu0 0.0
        %2326 = vmatpush1.xpose.msra.mxu0 0.0
        %2327 = vmatprep.subr.mxu0 0.0
        %2328 = vmatpush1.xpose.msra.mxu0 0.0
        %2329 = vmatprep.subr.mxu0 0.0
        %2330 = vmatpush1.xpose.msra.mxu0 0.0
        %2331 = vmatprep.subr.mxu0 0.0
        %2332 = vmatpush1.xpose.msra.mxu0 0.0
        %2333 = vmatprep.subr.mxu0 0.0
        %2334 = vmatpush1.xpose.msra.mxu0 0.0
        %2335 = vmatprep.subr.mxu0 0.0
        %2336 = vmatpush1.xpose.msra.mxu0 0.0
        %2337 = vmatprep.subr.mxu0 0.0
        %2338 = vmatpush1.xpose.msra.mxu0 0.0
        %2339 = vmatprep.subr.mxu0 0.0
        %2340 = vmatpush1.xpose.msra.mxu0 0.0
        %2341 = vmatprep.subr.mxu0 0.0
        %2342 = vmatpush1.xpose.msra.mxu0 0.0
        %2343 = vmatprep.subr.mxu0 0.0
        %2344 = vmatpush1.xpose.msra.mxu0 0.0
        %2345 = vmatprep.subr.mxu0 0.0
        %2346 = vmatpush1.xpose.msra.mxu0 0.0
        %2347 = vmatprep.subr.mxu0 0.0
        %2348 = vmatpush1.xpose.msra.mxu0 0.0
        %2349 = vmatprep.subr.mxu0 0.0
        %2350 = vmatpush1.xpose.msra.mxu0 0.0
        %2351 = vmatprep.mubr.f32.mxu0 0.0
        %2352 = vmatmul.mubr.f32.gmra.mrb[0].mxu0 %v2282
        %v2353 = vpop.f32.mrb[0].mxu0
        %v2354 = vadd.f32 0.0, %v2353
        %v2355 = vpop.f32.mrb[0].mxu0
        %2356 = vdwg.mxu0
        %v2358 = vsel %vm1128, %v1950, 0
        %v2361 = vsel %vm1128, %v2114, 0
        %2363 = vmatprep.subr.mxu0 0.0
        %2364 = vmatpush1.xpose.msra.mxu0 %v2361
        %2365 = vmatprep.subr.mxu0 0.0
        %2366 = vmatpush1.xpose.msra.mxu0 0.0
        %2367 = vmatprep.subr.mxu0 0.0
        %2368 = vmatpush1.xpose.msra.mxu0 0.0
        %2369 = vmatprep.subr.mxu0 0.0
        %2370 = vmatpush1.xpose.msra.mxu0 0.0
        %2371 = vmatprep.subr.mxu0 0.0
        %2372 = vmatpush1.xpose.msra.mxu0 0.0
        %2373 = vmatprep.subr.mxu0 0.0
        %2374 = vmatpush1.xpose.msra.mxu0 0.0
        %2375 = vmatprep.subr.mxu0 0.0
        %2376 = vmatpush1.xpose.msra.mxu0 0.0
        %2377 = vmatprep.subr.mxu0 0.0
        %2378 = vmatpush1.xpose.msra.mxu0 0.0
        %2379 = vmatprep.subr.mxu0 0.0
        %2380 = vmatpush1.xpose.msra.mxu0 0.0
        %2381 = vmatprep.subr.mxu0 0.0
        %2382 = vmatpush1.xpose.msra.mxu0 0.0
        %2383 = vmatprep.subr.mxu0 0.0
        %2384 = vmatpush1.xpose.msra.mxu0 0.0
        %2385 = vmatprep.subr.mxu0 0.0
        %2386 = vmatpush1.xpose.msra.mxu0 0.0
        %2387 = vmatprep.subr.mxu0 0.0
        %2388 = vmatpush1.xpose.msra.mxu0 0.0
        %2389 = vmatprep.subr.mxu0 0.0
        %2390 = vmatpush1.xpose.msra.mxu0 0.0
        %2391 = vmatprep.subr.mxu0 0.0
        %2392 = vmatpush1.xpose.msra.mxu0 0.0
        %2393 = vmatprep.subr.mxu0 0.0
        %2394 = vmatpush1.xpose.msra.mxu0 0.0
        %2395 = vmatprep.subr.mxu0 0.0
        %2396 = vmatpush1.xpose.msra.mxu0 0.0
        %2397 = vmatprep.subr.mxu0 0.0
        %2398 = vmatpush1.xpose.msra.mxu0 0.0
        %2399 = vmatprep.subr.mxu0 0.0
        %2400 = vmatpush1.xpose.msra.mxu0 0.0
        %2401 = vmatprep.subr.mxu0 0.0
        %2402 = vmatpush1.xpose.msra.mxu0 0.0
        %2403 = vmatprep.subr.mxu0 0.0
        %2404 = vmatpush1.xpose.msra.mxu0 0.0
        %2405 = vmatprep.subr.mxu0 0.0
        %2406 = vmatpush1.xpose.msra.mxu0 0.0
        %2407 = vmatprep.subr.mxu0 0.0
        %2408 = vmatpush1.xpose.msra.mxu0 0.0
        %2409 = vmatprep.subr.mxu0 0.0
        %2410 = vmatpush1.xpose.msra.mxu0 0.0
        %2411 = vmatprep.subr.mxu0 0.0
        %2412 = vmatpush1.xpose.msra.mxu0 0.0
        %2413 = vmatprep.subr.mxu0 0.0
        %2414 = vmatpush1.xpose.msra.mxu0 0.0
        %2415 = vmatprep.subr.mxu0 0.0
        %2416 = vmatpush1.xpose.msra.mxu0 0.0
        %2417 = vmatprep.subr.mxu0 0.0
        %2418 = vmatpush1.xpose.msra.mxu0 0.0
        %2419 = vmatprep.subr.mxu0 0.0
        %2420 = vmatpush1.xpose.msra.mxu0 0.0
        %2421 = vmatprep.subr.mxu0 0.0
        %2422 = vmatpush1.xpose.msra.mxu0 0.0
        %2423 = vmatprep.subr.mxu0 0.0
        %2424 = vmatpush1.xpose.msra.mxu0 0.0
        %2425 = vmatprep.subr.mxu0 0.0
        %2426 = vmatpush1.xpose.msra.mxu0 0.0
        %2427 = vmatprep.mubr.f32.mxu0 0.0
        %2428 = vmatmul.mubr.f32.gmra.mrb[0].mxu0 %v2358
        %v2429 = vpop.f32.mrb[0].mxu0
        %v2430 = vadd.f32 0.0, %v2429
        %v2431 = vpop.f32.mrb[0].mxu0
        %2432 = vdwg.mxu0
        %v2433 = vmul.f32 %v2354, 0.25
        %v2434 = vmul.f32 %v2430, 0.25
        %v2435 = vadd.f32 %v2433, %v636
        %v2436 = vadd.f32 %v2434, %v636
        %v2437 = vsel %vm1285, %v2435, -inf
        %2438 = vmax.xlane.f32.xlu0 %v2437
        %v2439 = vpop.xlane.xlu0 %2438
        %v2440 = vsel %vm1285, %v2436, -inf
        %2441 = vmax.xlane.f32.xlu0 %v2440
        %v2442 = vpop.xlane.xlu0 %2441
        %v2443 = vsub.f32 %v2435, %v2439
        %v2444 = vsub.f32 %v2436, %v2442
        %v2445 = vmul.f32 %v2443, 1.442695
        %v2446 = vpow.pop %v2445
        %v2447 = vmul.f32 %v2444, 1.442695
        %v2448 = vpow.pop %v2447
        %v2449 = vsel %vm1285, %v2446, 0.0
        %2450 = vadd.xlane.f32.xlu0 %v2449
        %v2451 = vpop.xlane.xlu0 %2450
        %v2452 = vsel %vm1285, %v2448, 0.0
        %2453 = vadd.xlane.f32.xlu0 %v2452
        %v2454 = vpop.xlane.xlu0 %2453
        %v2455 = vrcp.pop %v2451
        %v2456 = vrcp.pop %v2454
        %v2457 = vmul.f32 %v2446, %v2455
        %v2458 = vmul.f32 %v2448, %v2456
        %v2460 = vsel %vm1285, %v2457, 0
        %2462 = vmatprep.subr.mxu0 0.0
        %2463 = vmatpush1.msra.mxu0 %v2208
        %2464 = vmatprep.subr.mxu0 0.0
        %2465 = vmatpush1.msra.mxu0 0.0
        %2466 = vmatprep.subr.mxu0 0.0
        %2467 = vmatpush1.msra.mxu0 0.0
        %2468 = vmatprep.subr.mxu0 0.0
        %2469 = vmatpush1.msra.mxu0 0.0
        %2470 = vmatprep.subr.mxu0 0.0
        %2471 = vmatpush1.msra.mxu0 0.0
        %2472 = vmatprep.subr.mxu0 0.0
        %2473 = vmatpush1.msra.mxu0 0.0
        %2474 = vmatprep.subr.mxu0 0.0
        %2475 = vmatpush1.msra.mxu0 0.0
        %2476 = vmatprep.subr.mxu0 0.0
        %2477 = vmatpush1.msra.mxu0 0.0
        %2478 = vmatprep.subr.mxu0 0.0
        %2479 = vmatpush1.msra.mxu0 0.0
        %2480 = vmatprep.subr.mxu0 0.0
        %2481 = vmatpush1.msra.mxu0 0.0
        %2482 = vmatprep.subr.mxu0 0.0
        %2483 = vmatpush1.msra.mxu0 0.0
        %2484 = vmatprep.subr.mxu0 0.0
        %2485 = vmatpush1.msra.mxu0 0.0
        %2486 = vmatprep.subr.mxu0 0.0
        %2487 = vmatpush1.msra.mxu0 0.0
        %2488 = vmatprep.subr.mxu0 0.0
        %2489 = vmatpush1.msra.mxu0 0.0
        %2490 = vmatprep.subr.mxu0 0.0
        %2491 = vmatpush1.msra.mxu0 0.0
        %2492 = vmatprep.subr.mxu0 0.0
        %2493 = vmatpush1.msra.mxu0 0.0
        %2494 = vmatprep.subr.mxu0 0.0
        %2495 = vmatpush1.msra.mxu0 0.0
        %2496 = vmatprep.subr.mxu0 0.0
        %2497 = vmatpush1.msra.mxu0 0.0
        %2498 = vmatprep.subr.mxu0 0.0
        %2499 = vmatpush1.msra.mxu0 0.0
        %2500 = vmatprep.subr.mxu0 0.0
        %2501 = vmatpush1.msra.mxu0 0.0
        %2502 = vmatprep.subr.mxu0 0.0
        %2503 = vmatpush1.msra.mxu0 0.0
        %2504 = vmatprep.subr.mxu0 0.0
        %2505 = vmatpush1.msra.mxu0 0.0
        %2506 = vmatprep.subr.mxu0 0.0
        %2507 = vmatpush1.msra.mxu0 0.0
        %2508 = vmatprep.subr.mxu0 0.0
        %2509 = vmatpush1.msra.mxu0 0.0
        %2510 = vmatprep.subr.mxu0 0.0
        %2511 = vmatpush1.msra.mxu0 0.0
        %2512 = vmatprep.subr.mxu0 0.0
        %2513 = vmatpush1.msra.mxu0 0.0
        %2514 = vmatprep.subr.mxu0 0.0
        %2515 = vmatpush1.msra.mxu0 0.0
        %2516 = vmatprep.subr.mxu0 0.0
        %2517 = vmatpush1.msra.mxu0 0.0
        %2518 = vmatprep.subr.mxu0 0.0
        %2519 = vmatpush1.msra.mxu0 0.0
        %2520 = vmatprep.subr.mxu0 0.0
        %2521 = vmatpush1.msra.mxu0 0.0
        %2522 = vmatprep.subr.mxu0 0.0
        %2523 = vmatpush1.msra.mxu0 0.0
        %2524 = vmatprep.subr.mxu0 0.0
        %2525 = vmatpush1.msra.mxu0 0.0
        %2526 = vmatprep.mubr.f32.mxu0 0.0
        %2527 = vmatmul.mubr.f32.gmra.mrb[0].mxu0 %v2460
        %v2528 = vpop.f32.mrb[0].mxu0
        %v2529 = vadd.f32 0.0, %v2528
        %v2530 = vpop.f32.mrb[0].mxu0
        %2531 = vdwg.mxu0
        %v2533 = vsel %vm1285, %v2458, 0
        %2535 = vmatprep.subr.mxu0 0.0
        %2536 = vmatpush1.msra.mxu0 %v2278
        %2537 = vmatprep.subr.mxu0 0.0
        %2538 = vmatpush1.msra.mxu0 0.0
        %2539 = vmatprep.subr.mxu0 0.0
        %2540 = vmatpush1.msra.mxu0 0.0
        %2541 = vmatprep.subr.mxu0 0.0
        %2542 = vmatpush1.msra.mxu0 0.0
        %2543 = vmatprep.subr.mxu0 0.0
        %2544 = vmatpush1.msra.mxu0 0.0
        %2545 = vmatprep.subr.mxu0 0.0
        %2546 = vmatpush1.msra.mxu0 0.0
        %2547 = vmatprep.subr.mxu0 0.0
        %2548 = vmatpush1.msra.mxu0 0.0
        %2549 = vmatprep.subr.mxu0 0.0
        %2550 = vmatpush1.msra.mxu0 0.0
        %2551 = vmatprep.subr.mxu0 0.0
        %2552 = vmatpush1.msra.mxu0 0.0
        %2553 = vmatprep.subr.mxu0 0.0
        %2554 = vmatpush1.msra.mxu0 0.0
        %2555 = vmatprep.subr.mxu0 0.0
        %2556 = vmatpush1.msra.mxu0 0.0
        %2557 = vmatprep.subr.mxu0 0.0
        %2558 = vmatpush1.msra.mxu0 0.0
        %2559 = vmatprep.subr.mxu0 0.0
        %2560 = vmatpush1.msra.mxu0 0.0
        %2561 = vmatprep.subr.mxu0 0.0
        %2562 = vmatpush1.msra.mxu0 0.0
        %2563 = vmatprep.subr.mxu0 0.0
        %2564 = vmatpush1.msra.mxu0 0.0
        %2565 = vmatprep.subr.mxu0 0.0
        %2566 = vmatpush1.msra.mxu0 0.0
        %2567 = vmatprep.subr.mxu0 0.0
        %2568 = vmatpush1.msra.mxu0 0.0
        %2569 = vmatprep.subr.mxu0 0.0
        %2570 = vmatpush1.msra.mxu0 0.0
        %2571 = vmatprep.subr.mxu0 0.0
        %2572 = vmatpush1.msra.mxu0 0.0
        %2573 = vmatprep.subr.mxu0 0.0
        %2574 = vmatpush1.msra.mxu0 0.0
        %2575 = vmatprep.subr.mxu0 0.0
        %2576 = vmatpush1.msra.mxu0 0.0
        %2577 = vmatprep.subr.mxu0 0.0
        %2578 = vmatpush1.msra.mxu0 0.0
        %2579 = vmatprep.subr.mxu0 0.0
        %2580 = vmatpush1.msra.mxu0 0.0
        %2581 = vmatprep.subr.mxu0 0.0
        %2582 = vmatpush1.msra.mxu0 0.0
        %2583 = vmatprep.subr.mxu0 0.0
        %2584 = vmatpush1.msra.mxu0 0.0
        %2585 = vmatprep.subr.mxu0 0.0
        %2586 = vmatpush1.msra.mxu0 0.0
        %2587 = vmatprep.subr.mxu0 0.0
        %2588 = vmatpush1.msra.mxu0 0.0
        %2589 = vmatprep.subr.mxu0 0.0
        %2590 = vmatpush1.msra.mxu0 0.0
        %2591 = vmatprep.subr.mxu0 0.0
        %2592 = vmatpush1.msra.mxu0 0.0
        %2593 = vmatprep.subr.mxu0 0.0
        %2594 = vmatpush1.msra.mxu0 0.0
        %2595 = vmatprep.subr.mxu0 0.0
        %2596 = vmatpush1.msra.mxu0 0.0
        %2597 = vmatprep.subr.mxu0 0.0
        %2598 = vmatpush1.msra.mxu0 0.0
        %2599 = vmatprep.mubr.f32.mxu0 0.0
        %2600 = vmatmul.mubr.f32.gmra.mrb[0].mxu0 %v2533
        %v2601 = vpop.f32.mrb[0].mxu0
        %v2602 = vadd.f32 0.0, %v2601
        %v2603 = vpop.f32.mrb[0].mxu0
        %2604 = vdwg.mxu0
        %2606 = vrot.lane.b32.xlu0 %v2602, 16
        %v2607 = vpop.permute.xlu0 %2606
        %v2609 = vsel %vm1128, %v2529, %v2607
        %s2610 = scalar_lea.vmem %s9, 32
        %v2611 = vld [vmem:[%s2610] sm:$0xff]
        %v2612 = vld [vmem:[%s2610 + $0x8] sm:$0xff]
        %v2613 = vld [vmem:[%s2610 + $0x10] sm:$0xff]
        %v2614 = vld [vmem:[%s2610 + $0x18] sm:$0xff]
        %s2615 = scalar_lea.vmem %s10, 1
        %v2616 = vld [vmem:[%s2615] sm:$0x1]
        %v2618 = vlaneseq
        %v2619 = vshrl.u32 %v2618, 7
        %v2620 = vsub.s32 0, %v2619
        %v2621 = vrot.slane %v2616, %v2620
        %v2624 = vsel %vm660, %v2609, 0
        %2626 = vmatprep.subr.mxu0 0.0
        %2627 = vmatpush1.msra.mxu0 %v2611
        %2628 = vmatprep.subr.mxu0 0.0
        %2629 = vmatpush1.msra.mxu0 %v2612
        %2630 = vmatprep.subr.mxu0 0.0
        %2631 = vmatpush1.msra.mxu0 %v2613
        %2632 = vmatprep.subr.mxu0 0.0
        %2633 = vmatpush1.msra.mxu0 %v2614
        %2634 = vmatprep.subr.mxu0 0.0
        %2635 = vmatpush1.msra.mxu0 0.0
        %2636 = vmatprep.subr.mxu0 0.0
        %2637 = vmatpush1.msra.mxu0 0.0
        %2638 = vmatprep.subr.mxu0 0.0
        %2639 = vmatpush1.msra.mxu0 0.0
        %2640 = vmatprep.subr.mxu0 0.0
        %2641 = vmatpush1.msra.mxu0 0.0
        %2642 = vmatprep.subr.mxu0 0.0
        %2643 = vmatpush1.msra.mxu0 0.0
        %2644 = vmatprep.subr.mxu0 0.0
        %2645 = vmatpush1.msra.mxu0 0.0
        %2646 = vmatprep.subr.mxu0 0.0
        %2647 = vmatpush1.msra.mxu0 0.0
        %2648 = vmatprep.subr.mxu0 0.0
        %2649 = vmatpush1.msra.mxu0 0.0
        %2650 = vmatprep.subr.mxu0 0.0
        %2651 = vmatpush1.msra.mxu0 0.0
        %2652 = vmatprep.subr.mxu0 0.0
        %2653 = vmatpush1.msra.mxu0 0.0
        %2654 = vmatprep.subr.mxu0 0.0
        %2655 = vmatpush1.msra.mxu0 0.0
        %2656 = vmatprep.subr.mxu0 0.0
        %2657 = vmatpush1.msra.mxu0 0.0
        %2658 = vmatprep.subr.mxu0 0.0
        %2659 = vmatpush1.msra.mxu0 0.0
        %2660 = vmatprep.subr.mxu0 0.0
        %2661 = vmatpush1.msra.mxu0 0.0
        %2662 = vmatprep.subr.mxu0 0.0
        %2663 = vmatpush1.msra.mxu0 0.0
        %2664 = vmatprep.subr.mxu0 0.0
        %2665 = vmatpush1.msra.mxu0 0.0
        %2666 = vmatprep.subr.mxu0 0.0
        %2667 = vmatpush1.msra.mxu0 0.0
        %2668 = vmatprep.subr.mxu0 0.0
        %2669 = vmatpush1.msra.mxu0 0.0
        %2670 = vmatprep.subr.mxu0 0.0
        %2671 = vmatpush1.msra.mxu0 0.0
        %2672 = vmatprep.subr.mxu0 0.0
        %2673 = vmatpush1.msra.mxu0 0.0
        %2674 = vmatprep.subr.mxu0 0.0
        %2675 = vmatpush1.msra.mxu0 0.0
        %2676 = vmatprep.subr.mxu0 0.0
        %2677 = vmatpush1.msra.mxu0 0.0
        %2678 = vmatprep.subr.mxu0 0.0
        %2679 = vmatpush1.msra.mxu0 0.0
        %2680 = vmatprep.subr.mxu0 0.0
        %2681 = vmatpush1.msra.mxu0 0.0
        %2682 = vmatprep.subr.mxu0 0.0
        %2683 = vmatpush1.msra.mxu0 0.0
        %2684 = vmatprep.subr.mxu0 0.0
        %2685 = vmatpush1.msra.mxu0 0.0
        %2686 = vmatprep.subr.mxu0 0.0
        %2687 = vmatpush1.msra.mxu0 0.0
        %2688 = vmatprep.subr.mxu0 0.0
        %2689 = vmatpush1.msra.mxu0 0.0
        %2690 = vmatprep.mubr.f32.mxu0 0.0
        %2691 = vmatmul.mubr.f32.gmra.mrb[0].mxu0 %v2624
        %v2692 = vpop.f32.mrb[0].mxu0
        %v2693 = vadd.f32 %v2621, %v2692
        %v2694 = vpop.f32.mrb[0].mxu0
        %2695 = vdwg.mxu0
        %v2696 = vadd.f32 %v1785, %v2693
        %s2697 = scalar_lea.vmem %s11, 1
        %v2698 = vld [vmem:[%s2697] sm:$0x1]
        %s2699 = scalar_lea.vmem %s12, 1
        %v2700 = vld [vmem:[%s2699] sm:$0x1]
        %v2701 = vsel %vm660, %v2696, 0.0
        %2702 = vadd.xlane.f32.xlu0 %v2701
        %v2703 = vpop.xlane.xlu0 %2702
        %v2704 = vmul.f32 %v2703, %v1549
        %v2705 = vsub.f32 %v2696, %v2704
        %v2706 = vmul.f32 %v2705, %v2705
        %v2707 = vsel %vm660, %v2706, 0.0
        %2708 = vadd.xlane.f32.xlu0 %v2707
        %v2709 = vpop.xlane.xlu0 %2708
        %v2710 = vmul.f32 %v2709, %v1549
        %v2711 = vadd.f32 %v2710, 1e-12
        %v2712 = vrsqrt.pop %v2711
        %v2713 = vmul.f32 %v2705, %v2712
        %v2715 = vlaneseq
        %v2716 = vshrl.u32 %v2715, 7
        %v2717 = vsub.s32 0, %v2716
        %v2718 = vrot.slane %v2698, %v2717
        %v2720 = vmul.f32 %v2713, %v2718
        %v2722 = vlaneseq
        %v2723 = vshrl.u32 %v2722, 7
        %v2724 = vsub.s32 0, %v2723
        %v2725 = vrot.slane %v2700, %v2724
        %v2727 = vadd.f32 %v2720, %v2725
        %s2728 = scalar_lea.vmem %s13, 32
        %v2729 = vld [vmem:[%s2728] sm:$0xff]
        %v2730 = vld [vmem:[%s2728 + $0x8] sm:$0xff]
        %v2731 = vld [vmem:[%s2728 + $0x10] sm:$0xff]
        %v2732 = vld [vmem:[%s2728 + $0x18] sm:$0xff]
        %s2733 = scalar_lea.vmem %s14, 1
        %v2734 = vld [vmem:[%s2733] sm:$0x1]
        %v2736 = vlaneseq
        %v2737 = vshrl.u32 %v2736, 7
        %v2738 = vsub.s32 0, %v2737
        %v2739 = vrot.slane %v2734, %v2738
        %v2742 = vsel %vm660, %v2727, 0
        %2744 = vmatprep.subr.mxu0 0.0
        %2745 = vmatpush1.msra.mxu0 %v2729
        %2746 = vmatprep.subr.mxu0 0.0
        %2747 = vmatpush1.msra.mxu0 %v2730
        %2748 = vmatprep.subr.mxu0 0.0
        %2749 = vmatpush1.msra.mxu0 %v2731
        %2750 = vmatprep.subr.mxu0 0.0
        %2751 = vmatpush1.msra.mxu0 %v2732
        %2752 = vmatprep.subr.mxu0 0.0
        %2753 = vmatpush1.msra.mxu0 0.0
        %2754 = vmatprep.subr.mxu0 0.0
        %2755 = vmatpush1.msra.mxu0 0.0
        %2756 = vmatprep.subr.mxu0 0.0
        %2757 = vmatpush1.msra.mxu0 0.0
        %2758 = vmatprep.subr.mxu0 0.0
        %2759 = vmatpush1.msra.mxu0 0.0
        %2760 = vmatprep.subr.mxu0 0.0
        %2761 = vmatpush1.msra.mxu0 0.0
        %2762 = vmatprep.subr.mxu0 0.0
        %2763 = vmatpush1.msra.mxu0 0.0
        %2764 = vmatprep.subr.mxu0 0.0
        %2765 = vmatpush1.msra.mxu0 0.0
        %2766 = vmatprep.subr.mxu0 0.0
        %2767 = vmatpush1.msra.mxu0 0.0
        %2768 = vmatprep.subr.mxu0 0.0
        %2769 = vmatpush1.msra.mxu0 0.0
        %2770 = vmatprep.subr.mxu0 0.0
        %2771 = vmatpush1.msra.mxu0 0.0
        %2772 = vmatprep.subr.mxu0 0.0
        %2773 = vmatpush1.msra.mxu0 0.0
        %2774 = vmatprep.subr.mxu0 0.0
        %2775 = vmatpush1.msra.mxu0 0.0
        %2776 = vmatprep.subr.mxu0 0.0
        %2777 = vmatpush1.msra.mxu0 0.0
        %2778 = vmatprep.subr.mxu0 0.0
        %2779 = vmatpush1.msra.mxu0 0.0
        %2780 = vmatprep.subr.mxu0 0.0
        %2781 = vmatpush1.msra.mxu0 0.0
        %2782 = vmatprep.subr.mxu0 0.0
        %2783 = vmatpush1.msra.mxu0 0.0
        %2784 = vmatprep.subr.mxu0 0.0
        %2785 = vmatpush1.msra.mxu0 0.0
        %2786 = vmatprep.subr.mxu0 0.0
        %2787 = vmatpush1.msra.mxu0 0.0
        %2788 = vmatprep.subr.mxu0 0.0
        %2789 = vmatpush1.msra.mxu0 0.0
        %2790 = vmatprep.subr.mxu0 0.0
        %2791 = vmatpush1.msra.mxu0 0.0
        %2792 = vmatprep.subr.mxu0 0.0
        %2793 = vmatpush1.msra.mxu0 0.0
        %2794 = vmatprep.subr.mxu0 0.0
        %2795 = vmatpush1.msra.mxu0 0.0
        %2796 = vmatprep.subr.mxu0 0.0
        %2797 = vmatpush1.msra.mxu0 0.0
        %2798 = vmatprep.subr.mxu0 0.0
        %2799 = vmatpush1.msra.mxu0 0.0
        %2800 = vmatprep.subr.mxu0 0.0
        %2801 = vmatpush1.msra.mxu0 0.0
        %2802 = vmatprep.subr.mxu0 0.0
        %2803 = vmatpush1.msra.mxu0 0.0
        %2804 = vmatprep.subr.mxu0 0.0
        %2805 = vmatpush1.msra.mxu0 0.0
        %2806 = vmatprep.subr.mxu0 0.0
        %2807 = vmatpush1.msra.mxu0 0.0
        %2808 = vmatprep.mubr.f32.mxu0 0.0
        %2809 = vmatmul.mubr.f32.gmra.mrb[0].mxu0 %v2742
        %v2810 = vpop.f32.mrb[0].mxu0
        %v2811 = vadd.f32 %v2739, %v2810
        %v2812 = vpop.f32.mrb[0].mxu0
        %2813 = vdwg.mxu0
        %v2814 = vmul.f32 %v2811, 0.5
        %v2815 = vmul.f32 %v2811, 0.044715
        %v2816 = vmul.f32 %v2815, %v2811
        %v2817 = vmul.f32 %v2816, %v2811
        %v2818 = vadd.f32 %v2811, %v2817
        %v2819 = vmul.f32 %v2818, 0.7978846
        %v2820 = vtanh.pop %v2819
        %v2821 = vadd.f32 %v2820, 1.0
        %v2822 = vmul.f32 %v2814, %v2821
        %s2823 = scalar_lea.vmem %s15, 64
        %v2824 = vld [vmem:[%s2823] sm:$0xff]
        %v2825 = vld [vmem:[%s2823 + $0x8] sm:$0xff]
        %v2826 = vld [vmem:[%s2823 + $0x10] sm:$0xff]
        %v2827 = vld [vmem:[%s2823 + $0x18] sm:$0xff]
        %v2828 = vld [vmem:[%s2823 + $0x20] sm:$0xff]
        %v2829 = vld [vmem:[%s2823 + $0x28] sm:$0xff]
        %v2830 = vld [vmem:[%s2823 + $0x30] sm:$0xff]
        %v2831 = vld [vmem:[%s2823 + $0x38] sm:$0xff]
        %s2832 = scalar_lea.vmem %s16, 1
        %v2833 = vld [vmem:[%s2832] sm:$0x1]
        %v2835 = vlaneseq
        %v2836 = vshrl.u32 %v2835, 7
        %v2837 = vsub.s32 0, %v2836
        %v2838 = vrot.slane %v2833, %v2837
        %v2841 = vsel %vm1682, %v2822, 0
        %2843 = vmatprep.subr.mxu0 0.0
        %2844 = vmatpush1.msra.mxu0 %v2824
        %2845 = vmatprep.subr.mxu0 0.0
        %2846 = vmatpush1.msra.mxu0 %v2825
        %2847 = vmatprep.subr.mxu0 0.0
        %2848 = vmatpush1.msra.mxu0 %v2826
        %2849 = vmatprep.subr.mxu0 0.0
        %2850 = vmatpush1.msra.mxu0 %v2827
        %2851 = vmatprep.subr.mxu0 0.0
        %2852 = vmatpush1.msra.mxu0 %v2828
        %2853 = vmatprep.subr.mxu0 0.0
        %2854 = vmatpush1.msra.mxu0 %v2829
        %2855 = vmatprep.subr.mxu0 0.0
        %2856 = vmatpush1.msra.mxu0 %v2830
        %2857 = vmatprep.subr.mxu0 0.0
        %2858 = vmatpush1.msra.mxu0 %v2831
        %2859 = vmatprep.subr.mxu0 0.0
        %2860 = vmatpush1.msra.mxu0 0.0
        %2861 = vmatprep.subr.mxu0 0.0
        %2862 = vmatpush1.msra.mxu0 0.0
        %2863 = vmatprep.subr.mxu0 0.0
        %2864 = vmatpush1.msra.mxu0 0.0
        %2865 = vmatprep.subr.mxu0 0.0
        %2866 = vmatpush1.msra.mxu0 0.0
        %2867 = vmatprep.subr.mxu0 0.0
        %2868 = vmatpush1.msra.mxu0 0.0
        %2869 = vmatprep.subr.mxu0 0.0
        %2870 = vmatpush1.msra.mxu0 0.0
        %2871 = vmatprep.subr.mxu0 0.0
        %2872 = vmatpush1.msra.mxu0 0.0
        %2873 = vmatprep.subr.mxu0 0.0
        %2874 = vmatpush1.msra.mxu0 0.0
        %2875 = vmatprep.subr.mxu0 0.0
        %2876 = vmatpush1.msra.mxu0 0.0
        %2877 = vmatprep.subr.mxu0 0.0
        %2878 = vmatpush1.msra.mxu0 0.0
        %2879 = vmatprep.subr.mxu0 0.0
        %2880 = vmatpush1.msra.mxu0 0.0
        %2881 = vmatprep.subr.mxu0 0.0
        %2882 = vmatpush1.msra.mxu0 0.0
        %2883 = vmatprep.subr.mxu0 0.0
        %2884 = vmatpush1.msra.mxu0 0.0
        %2885 = vmatprep.subr.mxu0 0.0
        %2886 = vmatpush1.msra.mxu0 0.0
        %2887 = vmatprep.subr.mxu0 0.0
        %2888 = vmatpush1.msra.mxu0 0.0
        %2889 = vmatprep.subr.mxu0 0.0
        %2890 = vmatpush1.msra.mxu0 0.0
        %2891 = vmatprep.subr.mxu0 0.0
        %2892 = vmatpush1.msra.mxu0 0.0
        %2893 = vmatprep.subr.mxu0 0.0
        %2894 = vmatpush1.msra.mxu0 0.0
        %2895 = vmatprep.subr.mxu0 0.0
        %2896 = vmatpush1.msra.mxu0 0.0
        %2897 = vmatprep.subr.mxu0 0.0
        %2898 = vmatpush1.msra.mxu0 0.0
        %2899 = vmatprep.subr.mxu0 0.0
        %2900 = vmatpush1.msra.mxu0 0.0
        %2901 = vmatprep.subr.mxu0 0.0
        %2902 = vmatpush1.msra.mxu0 0.0
        %2903 = vmatprep.subr.mxu0 0.0
        %2904 = vmatpush1.msra.mxu0 0.0
        %2905 = vmatprep.subr.mxu0 0.0
        %2906 = vmatpush1.msra.mxu0 0.0
        %2907 = vmatprep.mubr.f32.mxu0 0.0
        %2908 = vmatmul.mubr.f32.gmra.mrb[0].mxu0 %v2841
        %v2909 = vpop.f32.mrb[0].mxu0
        %v2910 = vadd.f32 %v2838, %v2909
        %v2911 = vpop.f32.mrb[0].mxu0
        %2912 = vdwg.mxu0
        %v2913 = vadd.f32 %v2727, %v2910
        %s2914 = scalar_lea.vmem %s17, 1
        %v2915 = vld [vmem:[%s2914] sm:$0x1]
        %s2916 = scalar_lea.vmem %s18, 1
        %v2917 = vld [vmem:[%s2916] sm:$0x1]
        %v2918 = vsel %vm660, %v2913, 0.0
        %2919 = vadd.xlane.f32.xlu0 %v2918
        %v2920 = vpop.xlane.xlu0 %2919
        %v2921 = vmul.f32 %v2920, %v1549
        %v2922 = vsub.f32 %v2913, %v2921
        %v2923 = vmul.f32 %v2922, %v2922
        %v2924 = vsel %vm660, %v2923, 0.0
        %2925 = vadd.xlane.f32.xlu0 %v2924
        %v2926 = vpop.xlane.xlu0 %2925
        %v2927 = vmul.f32 %v2926, %v1549
        %v2928 = vadd.f32 %v2927, 1e-12
        %v2929 = vrsqrt.pop %v2928
        %v2930 = vmul.f32 %v2922, %v2929
        %v2932 = vlaneseq
        %v2933 = vshrl.u32 %v2932, 7
        %v2934 = vsub.s32 0, %v2933
        %v2935 = vrot.slane %v2915, %v2934
        %v2937 = vmul.f32 %v2930, %v2935
        %v2939 = vlaneseq
        %v2940 = vshrl.u32 %v2939, 7
        %v2941 = vsub.s32 0, %v2940
        %v2942 = vrot.slane %v2917, %v2941
        %v2944 = vadd.f32 %v2937, %v2942
        %v2945 = vlaneseq
        %v2946 = vshrl.u32 %v2945, 7
        %vm2947 = vcmp.ge.s32.totalorder %v2946, 4
        %v2948 = vld [vmem:[%s627] sm:$0xff]
        %v2949 = vsel %vm2947, %v2948, 0.0
        %2951 = vset.pattern.permute.xlu0 0
        %2952 = vperm.xlu0 %2951, %v2949
        %v2953 = vpop.permute.xlu0 %2952
        %v2955 = vmul.f32 %v2944, %v2953
        %v2956 = vsel %vm660, %v2955, 0.0
        %v2957 = vrot.slane %v2956, 4
        %v2958 = vadd.f32 %v2956, %v2957
        %v2959 = vrot.slane %v2958, 2
        %v2960 = vadd.f32 %v2958, %v2959
        %v2961 = vrot.slane %v2960, 1
        %v2962 = vadd.f32 %v2960, %v2961
        %vm2963 = vcmask 7168
        %v2964 = vsel %vm2963, %v2949, 0.0
        %v2965 = vrot.slane %v2964, 4
        %v2966 = vadd.f32 %v2964, %v2965
        %v2967 = vrot.slane %v2966, 2
        %v2968 = vadd.f32 %v2966, %v2967
        %v2969 = vrot.slane %v2968, 1
        %v2970 = vadd.f32 %v2968, %v2969
        %v2971 = vrcp.pop %v2970
        %2973 = vset.pattern.permute.xlu0 0
        %2974 = vperm.xlu0 %2973, %v2971
        %v2975 = vpop.permute.xlu0 %2974
        %v2977 = vmul.f32 %v2962, %v2975
        %vm2978 = vcmask 253952
        %2979 = vst.msk [vmem:[%s616] sm:$0x1] %vm2978, %v2977
        %s2980 = sand.u32 %s455, 1
        %s2981 = scalar_lea.sflag [#allocation3], %s2980
        %s2982 = sand.u32 %s455, 1
        %s2983 = scalar_lea.vmem [#allocation2], %s2982
        // Predicated region
        $region97: #{tct_colbert_forward.1} parent=95 // pred_check
          %p2984 = pneg %p465
        $region98: #{tct_colbert_forward.1} parent=95 // pred_check_branch
          %2986 = sbr.rel (%p2984) target = $region100
        $region99: #{tct_colbert_forward.1} parent=95 // pred_region
          %s2988 = ssub.s32 16, 16
          %2989 = vsyncadd %s2981, %s2988
          %s2990 = smul.addr %s33, 16
          %s2991 = scalar_lea.hbm %s19, %s2990
          %s2993 = sshll.u32 %s2983, 4
          %s2994 = int_to_ptr.vmem [resolvable:$true] %s2993
          %2996 = dma.vmem_to_hbm [thread:$0]  %s2994, 16, %s2991, %s2981
        $region100: #{tct_colbert_forward.1} parent=95 // pred_fallthru
          _
      $region96: #{tct_colbert_forward.1} parent=5 // pred_fallthru
        _
      %p2997 = scmp.le.s32.totalorder 2, %s28
      // Predicated region
      $region101: #{tct_colbert_forward.1} parent=5 // pred_check
        %p2998 = pneg %p2997
      $region102: #{tct_colbert_forward.1} parent=5 // pred_check_branch
        %3000 = sbr.rel (%p2998) target = $region104
      $region103: #{tct_colbert_forward.1} parent=5 // pred_region
        %s3001 = ssub.s32 %s28, 2
        // Predicated region
        $region105: #{tct_colbert_forward.1} parent=103 // pred_check
          %p3002 = pneg %p471
        $region106: #{tct_colbert_forward.1} parent=103 // pred_check_branch
          %3004 = sbr.rel (%p3002) target = $region108
        $region107: #{tct_colbert_forward.1} parent=103 // pred_region
          %s3005 = sand.u32 %s456, 1
          %s3006 = scalar_lea.sflag [#allocation3], %s3005
          %s3007 = sand.u32 %s456, 1
          %s3008 = scalar_lea.vmem [#allocation2], %s3007
          %3009 = dma.done %s3006, 16
        $region108: #{tct_colbert_forward.1} parent=103 // pred_fallthru
          _
      $region104: #{tct_colbert_forward.1} parent=5 // pred_fallthru
        _
    $region6: #{tct_colbert_forward.1} parent=1 // loop_footer
      %s32 = sadd.s32 1, %s28
    $region7: #{tct_colbert_forward.1} parent=1 // loop_footer_branch
      %27 = sbr.rel target = $region3
    $region8: #{tct_colbert_forward.1} parent=1 // loop_exit
      _
    %3010 = vsyncpa [#allocation3], 1
    %s3011 = scalar_lea.sflag [#allocation3], 1
    %3012 = vsyncpa %s3011, 1

</llo_original>
